<compile_context>
chip_gen: v5e
topology: v5e:2x2
jax: 0.10.0
libtpu: 0.0.40
codegen_flags: <defaults>
</compile_context>

<pallas_src>
import math

import jax
import jax.numpy as jnp
from jax.experimental import pallas as pl
from jax.experimental.pallas import tpu as pltpu

VMEM_SPEC = pl.BlockSpec(memory_space=pltpu.MemorySpace.VMEM)


def _vspecs(n):
    return [pl.BlockSpec(memory_space=pltpu.MemorySpace.VMEM) for _ in range(n)]


def _round_up(x, m=128):
    return ((x + m - 1) // m) * m


def _pad2(a, rows, cols):
    return jnp.pad(a, ((0, rows - a.shape[0]), (0, cols - a.shape[1])))


# ----------------------------------------------------------------------------
# Fused DCGRU cell kernel: diffusion gconv (accumulate-over-m) + GRU gating.
# One grid program per batch element; all operands lane-dense (width 128).
# ----------------------------------------------------------------------------
def make_dcgru_kernel(num_supports, diffusion_k):
    S, K = num_supports, diffusion_k

    def kernel(x_ref, h_ref, sup_ref, sup2_ref,
               wrx_ref, wrh_ref, wux_ref, wuh_ref, wcx_ref, wch_ref,
               br_ref, bu_ref, bc_ref, newh_ref):
        """x_ref: (N, Din_pad)   h_ref/newh_ref: (N, U_pad)
        sup_ref/sup2_ref: (S, N, N)   w*x: (M, Din_pad, U_pad)
        w*h: (M, U_pad, U_pad)        b*: (1, U_pad)"""

        def dot(a, b):
            return jnp.dot(a, b, preferred_element_type=jnp.float32)

        x0 = x_ref[...]
        h0 = h_ref[...]

        # ---- pass 1: Chebyshev over x and h; accumulate r, u and the x-part
        # of the candidate c (the x diffusion is shared by both gconvs).
        acc_r = dot(x0, wrx_ref[0]) + dot(h0, wrh_ref[0]) + br_ref[...]
        acc_u = dot(x0, wux_ref[0]) + dot(h0, wuh_ref[0]) + bu_ref[...]
        acc_c = dot(x0, wcx_ref[0]) + bc_ref[...]

        m = 1
        for s in range(S):
            sup = sup_ref[s]
            sup2 = sup2_ref[s]                      # pre-scaled 2*sup
            zx1 = dot(sup, x0)
            zh1 = dot(sup, h0)
            acc_r += dot(zx1, wrx_ref[m]) + dot(zh1, wrh_ref[m])
            acc_u += dot(zx1, wux_ref[m]) + dot(zh1, wuh_ref[m])
            acc_c += dot(zx1, wcx_ref[m])
            m += 1
            zx_k1, zx_k2 = zx1, x0
            zh_k1, zh_k2 = zh1, h0
            for _ in range(2, K + 1):
                zx2 = dot(sup2, zx_k1) - zx_k2
                zh2 = dot(sup2, zh_k1) - zh_k2
                acc_r += dot(zx2, wrx_ref[m]) + dot(zh2, wrh_ref[m])
                acc_u += dot(zx2, wux_ref[m]) + dot(zh2, wuh_ref[m])
                acc_c += dot(zx2, wcx_ref[m])
                m += 1
                zx_k1, zx_k2 = zx2, zx_k1
                zh_k1, zh_k2 = zh2, zh_k1

        r = jax.nn.sigmoid(acc_r)
        u = jax.nn.sigmoid(acc_u)
        rh = r * h0

        # ---- pass 2: Chebyshev over r*h only; finish the candidate c.
        acc_c += dot(rh, wch_ref[0])
        m = 1
        for s in range(S):
            sup = sup_ref[s]
            sup2 = sup2_ref[s]
            z1 = dot(sup, rh)
            acc_c += dot(z1, wch_ref[m])
            m += 1
            zk1, zk2 = z1, rh
            for _ in range(2, K + 1):
                z2 = dot(sup2, zk1) - zk2
                acc_c += dot(z2, wch_ref[m])
                m += 1
                zk1, zk2 = z2, zk1

        c = jnp.tanh(acc_c)
        newh_ref[...] = u * h0 + (1.0 - u) * c

    return kernel


def dcgru_cell(x, h, supports, supports2, params, *, max_diffusion_step):
    """x: (B, N, Din_pad), h: (B, N, U_pad) -> new hidden (B, N, U_pad)."""
    B, N, din_pad = x.shape
    u_pad = h.shape[-1]
    S = supports.shape[0]
    M = S * max_diffusion_step + 1

    kernel = make_dcgru_kernel(S, max_diffusion_step)

    def rep(shape):
        nd = len(shape)
        return pl.BlockSpec(shape, lambda b, _n=nd: (0,) * _n)

    return pl.pallas_call(
        kernel,
        grid=(B,),
        out_shape=jax.ShapeDtypeStruct((B, N, u_pad), jnp.float32),
        in_specs=[
            pl.BlockSpec((None, N, din_pad), lambda b: (b, 0, 0)),   # x
            pl.BlockSpec((None, N, u_pad), lambda b: (b, 0, 0)),     # h
            rep((S, N, N)),                                          # supports
            rep((S, N, N)),                                          # 2*supports
            rep((M, din_pad, u_pad)), rep((M, u_pad, u_pad)),        # w_r
            rep((M, din_pad, u_pad)), rep((M, u_pad, u_pad)),        # w_u
            rep((M, din_pad, u_pad)), rep((M, u_pad, u_pad)),        # w_c
            rep((1, u_pad)), rep((1, u_pad)), rep((1, u_pad)),       # biases
        ],
        out_specs=pl.BlockSpec((None, N, u_pad), lambda b: (b, 0, 0)),
        input_output_aliases={1: 0},          # recurrent state updated in place
        compiler_params=pltpu.CompilerParams(
            dimension_semantics=("parallel",)),
    )(x, h, supports, supports2,
      params["w_r_x"], params["w_r_h"],
      params["w_u_x"], params["w_u_h"],
      params["w_c_x"], params["w_c_h"],
      params["b_r"], params["b_u"], params["b_c"])


# ----------------------------------------------------------------------------
# EvoLSTM stand-in: gridless Q/K/V projection kernel + query-tiled attention.
# ----------------------------------------------------------------------------
def evo_qkv_kernel(prev_ref, curr_ref, wq_ref, wk_ref, wv_ref,
                   q_ref, k_ref, v_ref):
    q_ref[...] = jnp.dot(prev_ref[...], wq_ref[...],
                         preferred_element_type=jnp.float32)
    k_ref[...] = jnp.dot(curr_ref[...], wk_ref[...],
                         preferred_element_type=jnp.float32)
    v_ref[...] = jnp.dot(curr_ref[...], wv_ref[...],
                         preferred_element_type=jnp.float32)


def make_evo_attn_kernel(scale):
    def kernel(q_ref, k_ref, v_ref, hprev_ref, wo_ref, bo_ref, wh_ref,
               emb_ref, attn_ref):
        q = q_ref[...]                                        # (TQ, nd_pad)
        k = k_ref[...]                                        # (N,  nd_pad)
        scores = jax.lax.dot_general(
            q, k, dimension_numbers=(((1,), (1,)), ((), ())),
            preferred_element_type=jnp.float32) * scale       # (TQ, N)
        scores = scores - jnp.max(scores, axis=-1, keepdims=True)
        e = jnp.exp(scores)
        attn = e * pl.reciprocal(jnp.sum(e, axis=-1, keepdims=True),
                                 approx=False)
        ctx = jnp.dot(attn, v_ref[...], preferred_element_type=jnp.float32)
        emb_ref[...] = jnp.tanh(
            jnp.dot(ctx, wo_ref[...], preferred_element_type=jnp.float32)
            + jnp.dot(hprev_ref[...], wh_ref[...],
                      preferred_element_type=jnp.float32)
            + bo_ref[...])
        attn_ref[...] = attn
    return kernel


def _pick_query_tile(n, cap=128):
    if n <= cap:
        return n
    for t in range(cap, 7, -1):
        if t % 8 == 0 and n % t == 0:
            return t
    return n


def evo_layer(prev, curr, h_prev, p, *, node_dim):
    N = prev.shape[0]
    nd_pad = p["wq"].shape[-1]
    dfc_pad = p["wo"].shape[-1]

    # Q/K/V computed ONCE (hoisted out of the query-tile grid).
    q, k, v = pl.pallas_call(
        evo_qkv_kernel,
        out_shape=(jax.ShapeDtypeStruct((N, nd_pad), jnp.float32),) * 3,
        in_specs=_vspecs(5),
        out_specs=(VMEM_SPEC,) * 3,
    )(prev, curr, p["wq"], p["wk"], p["wv"])

    TQ = _pick_query_tile(N)
    kernel = make_evo_attn_kernel(1.0 / math.sqrt(node_dim))
    emb, attn = pl.pallas_call(
        kernel,
        grid=(N // TQ,),
        out_shape=(jax.ShapeDtypeStruct((N, dfc_pad), jnp.float32),
                   jax.ShapeDtypeStruct((N, N), jnp.float32)),
        in_specs=[
            pl.BlockSpec((TQ, nd_pad), lambda i: (i, 0)),     # q tile
            pl.BlockSpec((N, nd_pad), lambda i: (0, 0)),      # k
            pl.BlockSpec((N, nd_pad), lambda i: (0, 0)),      # v
            pl.BlockSpec((TQ, dfc_pad), lambda i: (i, 0)),    # h_prev tile
            pl.BlockSpec((nd_pad, dfc_pad), lambda i: (0, 0)),  # Wo
            pl.BlockSpec((1, dfc_pad), lambda i: (0, 0)),       # bo
            pl.BlockSpec((dfc_pad, dfc_pad), lambda i: (0, 0)),  # Wh
        ],
        out_specs=(pl.BlockSpec((TQ, dfc_pad), lambda i: (i, 0)),
                   pl.BlockSpec((TQ, N), lambda i: (i, 0))),
        compiler_params=pltpu.CompilerParams(
            dimension_semantics=("parallel",)),
    )(q, k, v, h_prev, p["wo"], p["bo"], p["wh"])
    return emb, attn


# ----------------------------------------------------------------------------
# Head kernel: fc -> relu -> BatchNorm1d(train) -> relu(fc_out) -> fc_cat
#              -> fused outer product adj = logits[:,0:1] @ logits[:,1:2]^T
# ----------------------------------------------------------------------------
def head_kernel(emb_ref, wfc_ref, bfc_ref, gamma_ref, beta_ref,
                wout_ref, bout_ref, wcat_ref, wcat1_ref, bcat_ref, adj_ref):
    x = jnp.dot(emb_ref[...], wfc_ref[...],
                preferred_element_type=jnp.float32) + bfc_ref[...]
    x = jnp.maximum(x, 0.0)
    # BatchNorm1d in training mode: batch statistics over the node (row) axis.
    mean = jnp.mean(x, axis=0, keepdims=True)
    var = jnp.mean(jnp.square(x - mean), axis=0, keepdims=True)
    x = (x - mean) * jax.lax.rsqrt(var + 1e-5) * gamma_ref[...] + beta_ref[...]
    x = jnp.maximum(jnp.dot(x, wout_ref[...],
                            preferred_element_type=jnp.float32) + bout_ref[...],
                    0.0)
    # fc_cat column 0 as a column vector, column 1 as a row vector, fused
    # outer product -> (N, N) adjacency (single lane-dense store).
    l0 = jnp.dot(x, wcat_ref[:, 0:1],
                 preferred_element_type=jnp.float32) + bcat_ref[:, 0:1]
    l1 = jax.lax.dot_general(
        wcat1_ref[...], x, dimension_numbers=(((1,), (1,)), ((), ())),
        preferred_element_type=jnp.float32) + bcat_ref[:, 1:2]
    adj_ref[...] = l0 * l1


# ----------------------------------------------------------------------------
# Parameter init (weights zero-padded to 128-lane-aligned shapes)
# ----------------------------------------------------------------------------
def init_dcgru_params(key, input_dim, num_units, num_matrices):
    din_pad = _round_up(input_dim)
    u_pad = _round_up(num_units)
    ks = jax.random.split(key, 6)

    def wstack(k, in_dim, in_pad):
        a = jax.random.normal(k, (num_matrices, in_dim, num_units),
                              jnp.float32) * 0.1
        return jnp.pad(a, ((0, 0), (0, in_pad - in_dim),
                           (0, u_pad - num_units)))

    def bias(v):
        b = jnp.full((1, num_units), v, jnp.float32)
        return jnp.pad(b, ((0, 0), (0, u_pad - num_units)))

    return {
        "w_r_x": wstack(ks[0], input_dim, din_pad),
        "w_r_h": wstack(ks[1], num_units, u_pad),
        "w_u_x": wstack(ks[2], input_dim, din_pad),
        "w_u_h": wstack(ks[3], num_units, u_pad),
        "w_c_x": wstack(ks[4], input_dim, din_pad),
        "w_c_h": wstack(ks[5], num_units, u_pad),
        "b_r": bias(1.0), "b_u": bias(1.0), "b_c": bias(0.0),  # bias_start=1.0
    }


def init_evo_params(key, n_feat, node_dim, dim_fc):
    fs_pad = _round_up(n_feat)
    nd_pad = _round_up(node_dim)
    dfc_pad = _round_up(dim_fc)
    ks = jax.random.split(key, 5)
    return {
        "wq": _pad2(jax.random.normal(ks[0], (n_feat, node_dim),
                                      jnp.float32) * 0.3, fs_pad, nd_pad),
        "wk": _pad2(jax.random.normal(ks[1], (n_feat, node_dim),
                                      jnp.float32) * 0.3, fs_pad, nd_pad),
        "wv": _pad2(jax.random.normal(ks[2], (n_feat, node_dim),
                                      jnp.float32) * 0.3, fs_pad, nd_pad),
        "wo": _pad2(jax.random.normal(ks[3], (node_dim, dim_fc),
                                      jnp.float32) * 0.3, nd_pad, dfc_pad),
        "bo": jnp.zeros((1, dfc_pad), jnp.float32),
        "wh": _pad2(jax.random.normal(ks[4], (dim_fc, dim_fc),
                                      jnp.float32) * 0.3, dfc_pad, dfc_pad),
    }


def init_head_params(key, dim_fc, embedding_dim):
    dfc_pad = _round_up(dim_fc)
    emb_pad = _round_up(embedding_dim)
    cat_pad = 128
    k1, k2, k3 = jax.random.split(key, 3)
    w_cat = jax.random.normal(k3, (embedding_dim, 2), jnp.float32) * 0.2
    return {
        "w_fc": _pad2(jax.random.normal(k1, (dim_fc, embedding_dim),
                                        jnp.float32) * 0.2, dfc_pad, emb_pad),
        "b_fc": jnp.zeros((1, emb_pad), jnp.float32),
        "gamma": jnp.pad(jnp.ones((1, embedding_dim), jnp.float32),
                         ((0, 0), (0, emb_pad - embedding_dim))),
        "beta": jnp.zeros((1, emb_pad), jnp.float32),
        "w_out": _pad2(jax.random.normal(k2, (embedding_dim, embedding_dim),
                                         jnp.float32) * 0.2, emb_pad, emb_pad),
        "b_out": jnp.zeros((1, emb_pad), jnp.float32),
        "w_cat": _pad2(w_cat, emb_pad, cat_pad),            # column form
        "w_cat1": _pad2(w_cat[:, 1:2].T, 1, emb_pad),        # row form of col 1
        "b_cat": jnp.zeros((1, cat_pad), jnp.float32),
    }


# ----------------------------------------------------------------------------
# Full forward
# ----------------------------------------------------------------------------
def random_walk_matrix(adj):
    d = jnp.sum(adj, axis=1, keepdims=True)
    d_inv = jnp.where(d > 0, 1.0 / d, 0.0)
    return d_inv * adj


def encoder_forward(inputs, adj_mx, sdist, hidden_state,
                    dcgru_params, evo_params, head_params, *,
                    forward_index, num_nodes, rnn_units, input_dim,
                    max_diffusion_step, node_dim, dim_fc):
    B = inputs.shape[0]
    N, U = num_nodes, rnn_units
    L = len(dcgru_params)
    u_pad = _round_up(U)
    din_pad = _round_up(input_dim)

    # dual_random_walk supports computed once and reused by every DCGRU layer;
    # pre-scaled copy for the Chebyshev recursion.
    supports = jnp.stack([random_walk_matrix(adj_mx).T,
                          random_walk_matrix(adj_mx.T).T], axis=0)
    supports2 = 2.0 * supports

    # Boundary layout plumbing, done ONCE: node-major padded (B, N, 128).
    x = inputs.reshape(B, N, input_dim)
    x = jnp.pad(x, ((0, 0), (0, 0), (0, din_pad - input_dim)))
    h_all = hidden_state.reshape(L, B, N, U)
    h_all = jnp.pad(h_all, ((0, 0), (0, 0), (0, 0), (0, u_pad - U)))

    hidden_states = []
    out = x
    for l, p in enumerate(dcgru_params):
        nh = dcgru_cell(out, h_all[l], supports, supports2, p,
                        max_diffusion_step=max_diffusion_step)
        hidden_states.append(nh)
        out = nh

    output = out[..., :U].reshape(B, N * U)
    hstack = jnp.stack(hidden_states)[..., :U].reshape(L, B, N * U)

    # ---- Evo layers (attention stand-in) -----------------------------------
    Fs = sdist.shape[-1]
    fs_pad = _round_up(Fs)
    sdist_p = jnp.pad(sdist, ((0, 0), (0, 0), (0, fs_pad - Fs)))
    prev = sdist_p[:, forward_index - 1, :]
    curr = sdist_p[:, forward_index, :]
    dfc_pad = evo_params[0]["wo"].shape[-1]

    emb = None
    attn = None
    for l, p in enumerate(evo_params):
        if l == 0 and forward_index >= 0:
            h0 = jnp.zeros((N, dfc_pad), jnp.float32)
            emb, attn = evo_layer(prev, curr, h0, p, node_dim=node_dim)
        elif l > 0 and forward_index > 0:
            emb, attn = evo_layer(prev, curr, emb, p, node_dim=node_dim)

    # ---- Head + fused outer-product adjacency ------------------------------
    adj = pl.pallas_call(
        head_kernel,
        out_shape=jax.ShapeDtypeStruct((N, N), jnp.float32),
        in_specs=_vspecs(10),
        out_specs=VMEM_SPEC,
    )(emb, head_params["w_fc"], head_params["b_fc"],
      head_params["gamma"], head_params["beta"],
      head_params["w_out"], head_params["b_out"],
      head_params["w_cat"], head_params["w_cat1"], head_params["b_cat"])

    return output, hstack, adj, emb[:, :dim_fc], attn


if __name__ == "__main__":
    key = jax.random.PRNGKey(0)

    # Small, self-consistent configuration (module defaults are num_nodes=3960).
    num_nodes = 16
    rnn_units = 32
    batch_size = 2
    input_dim = 2
    max_diffusion_step = 2
    num_rnn_layers = 2 - 1          # __init__ does self.num_rnn_layers -= 1
    num_evo_layers = 2              # para['Evo_layers']
    node_dim = 16                   # para['node_dim']
    dim_fc = 16                     # para['dim_fc']
    embedding_dim = 32              # para['embedding_dim']
    n_sdist_feat = 8                # para['n_shapelets']
    seq_len = 4
    forward_index = 1
    num_matrices = 2 * max_diffusion_step + 1   # dual_random_walk: S*K + 1

    keys = jax.random.split(key, 16)
    inputs = jax.random.normal(keys[0], (batch_size, num_nodes * input_dim),
                               jnp.float32)
    adj_mx = jnp.abs(jax.random.normal(keys[1], (num_nodes, num_nodes),
                                       jnp.float32))
    sdist = jax.random.normal(keys[2], (num_nodes, seq_len, n_sdist_feat),
                              jnp.float32)
    hidden_state = jnp.zeros((num_rnn_layers, batch_size,
                              num_nodes * rnn_units), jnp.float32)

    dcgru_params = []
    in_dim = input_dim
    for l in range(num_rnn_layers):
        dcgru_params.append(init_dcgru_params(keys[3 + l], in_dim, rnn_units,
                                              num_matrices))
        in_dim = rnn_units

    evo_params = [init_evo_params(keys[6 + l], n_sdist_feat, node_dim, dim_fc)
                  for l in range(num_evo_layers)]
    head_params = init_head_params(keys[10], dim_fc, embedding_dim)

    fwd = jax.jit(encoder_forward,
                  static_argnames=("forward_index", "num_nodes", "rnn_units",
                                   "input_dim", "max_diffusion_step",
                                   "node_dim", "dim_fc"))
    out, hstack, adj, emb, attn = fwd(
        inputs, adj_mx, sdist, hidden_state,
        dcgru_params, evo_params, head_params,
        forward_index=forward_index, num_nodes=num_nodes,
        rnn_units=rnn_units, input_dim=input_dim,
        max_diffusion_step=max_diffusion_step,
        node_dim=node_dim, dim_fc=dim_fc)
    jax.block_until_ready((out, hstack, adj, emb, attn))

    assert out.shape == (batch_size, num_nodes * rnn_units)
    assert hstack.shape == (num_rnn_layers, batch_size,
                            num_nodes * rnn_units)
    assert adj.shape == (num_nodes, num_nodes)
    assert emb.shape == (num_nodes, dim_fc)
    assert attn.shape == (num_nodes, num_nodes)
    print("KERNEL_OK")
</pallas_src>

<mosaic_0001>
module attributes {stable_mosaic.version = 11 : i64} {
  func.func @evo_qkv_kernel(%arg0: memref<16x128xf32, #tpu.memory_space<vmem>>, %arg1: memref<16x128xf32, #tpu.memory_space<vmem>>, %arg2: memref<128x128xf32, #tpu.memory_space<vmem>>, %arg3: memref<128x128xf32, #tpu.memory_space<vmem>>, %arg4: memref<128x128xf32, #tpu.memory_space<vmem>>, %arg5: memref<16x128xf32, #tpu.memory_space<vmem>>, %arg6: memref<16x128xf32, #tpu.memory_space<vmem>>, %arg7: memref<16x128xf32, #tpu.memory_space<vmem>>) attributes {dimension_semantics = [], scalar_prefetch = 0 : i64, scratch_operands = 0 : i64, tpu.core_type = #tpu.core_type<tc>} {
    %c0 = arith.constant 0 : index
    %c0_0 = arith.constant 0 : index
    %0 = vector.load %arg0[%c0, %c0_0] : memref<16x128xf32, #tpu.memory_space<vmem>>, vector<16x128xf32>
    %c0_1 = arith.constant 0 : index
    %c0_2 = arith.constant 0 : index
    %1 = vector.load %arg2[%c0_1, %c0_2] : memref<128x128xf32, #tpu.memory_space<vmem>>, vector<128x128xf32>
    %cst = arith.constant dense<0.000000e+00> : vector<16x128xf32>
    %2 = tpu.matmul %0, %1, %cst {dimension_numbers = #tpu.dot_dimension_numbers<[1], [0], [0], [1], [0, 0, 1, 1], [], []>} : vector<16x128xf32>, vector<128x128xf32>, vector<16x128xf32> -> vector<16x128xf32>
    %c0_3 = arith.constant 0 : index
    %c0_4 = arith.constant 0 : index
    %3 = vector.load %arg5[%c0_3, %c0_4] : memref<16x128xf32, #tpu.memory_space<vmem>>, vector<16x128xf32>
    tpu.vector_store %arg5[%c0_3, %c0_4], %2 {strides = array<i32>} : memref<16x128xf32, #tpu.memory_space<vmem>>, vector<16x128xf32>,
    %c0_5 = arith.constant 0 : index
    %c0_6 = arith.constant 0 : index
    %4 = vector.load %arg1[%c0_5, %c0_6] : memref<16x128xf32, #tpu.memory_space<vmem>>, vector<16x128xf32>
    %c0_7 = arith.constant 0 : index
    %c0_8 = arith.constant 0 : index
    %5 = vector.load %arg3[%c0_7, %c0_8] : memref<128x128xf32, #tpu.memory_space<vmem>>, vector<128x128xf32>
    %cst_9 = arith.constant dense<0.000000e+00> : vector<16x128xf32>
    %6 = tpu.matmul %4, %5, %cst_9 {dimension_numbers = #tpu.dot_dimension_numbers<[1], [0], [0], [1], [0, 0, 1, 1], [], []>} : vector<16x128xf32>, vector<128x128xf32>, vector<16x128xf32> -> vector<16x128xf32>
    %c0_10 = arith.constant 0 : index
    %c0_11 = arith.constant 0 : index
    %7 = vector.load %arg6[%c0_10, %c0_11] : memref<16x128xf32, #tpu.memory_space<vmem>>, vector<16x128xf32>
    tpu.vector_store %arg6[%c0_10, %c0_11], %6 {strides = array<i32>} : memref<16x128xf32, #tpu.memory_space<vmem>>, vector<16x128xf32>,
    %c0_12 = arith.constant 0 : index
    %c0_13 = arith.constant 0 : index
    %8 = vector.load %arg1[%c0_12, %c0_13] : memref<16x128xf32, #tpu.memory_space<vmem>>, vector<16x128xf32>
    %c0_14 = arith.constant 0 : index
    %c0_15 = arith.constant 0 : index
    %9 = vector.load %arg4[%c0_14, %c0_15] : memref<128x128xf32, #tpu.memory_space<vmem>>, vector<128x128xf32>
    %cst_16 = arith.constant dense<0.000000e+00> : vector<16x128xf32>
    %10 = tpu.matmul %8, %9, %cst_16 {dimension_numbers = #tpu.dot_dimension_numbers<[1], [0], [0], [1], [0, 0, 1, 1], [], []>} : vector<16x128xf32>, vector<128x128xf32>, vector<16x128xf32> -> vector<16x128xf32>
    %c0_17 = arith.constant 0 : index
    %c0_18 = arith.constant 0 : index
    %11 = vector.load %arg7[%c0_17, %c0_18] : memref<16x128xf32, #tpu.memory_space<vmem>>, vector<16x128xf32>
    tpu.vector_store %arg7[%c0_17, %c0_18], %10 {strides = array<i32>} : memref<16x128xf32, #tpu.memory_space<vmem>>, vector<16x128xf32>,
    return
  }
}

module attributes {stable_mosaic.version = 11 : i64} {
  func.func @kernel(%arg0: i32, %arg1: memref<1x16x128xf32, #tpu.memory_space<vmem>>, %arg2: memref<1x16x128xf32, #tpu.memory_space<vmem>>, %arg3: memref<2x16x16xf32, #tpu.memory_space<vmem>>, %arg4: memref<2x16x16xf32, #tpu.memory_space<vmem>>, %arg5: memref<5x128x128xf32, #tpu.memory_space<vmem>>, %arg6: memref<5x128x128xf32, #tpu.memory_space<vmem>>, %arg7: memref<5x128x128xf32, #tpu.memory_space<vmem>>, %arg8: memref<5x128x128xf32, #tpu.memory_space<vmem>>, %arg9: memref<5x128x128xf32, #tpu.memory_space<vmem>>, %arg10: memref<5x128x128xf32, #tpu.memory_space<vmem>>, %arg11: memref<1x128xf32, #tpu.memory_space<vmem>>, %arg12: memref<1x128xf32, #tpu.memory_space<vmem>>, %arg13: memref<1x128xf32, #tpu.memory_space<vmem>>, %arg14: memref<1x16x128xf32, #tpu.memory_space<vmem>>) attributes {dimension_semantics = [#tpu.dimension_semantics<parallel>], iteration_bounds = array<i64: 2>, scalar_prefetch = 0 : i64, scratch_operands = 0 : i64, tpu.core_type = #tpu.core_type<tc>, window_params = [{transform_indices = @transform_0, window_bounds = array<i64: 1, 16, 128>}, {transform_indices = @transform_1, window_bounds = array<i64: 1, 16, 128>}, {pipeline_mode = #tpu.pipeline_mode<synchronous>, transform_indices = @transform_2, window_bounds = array<i64: 2, 16, 16>}, {pipeline_mode = #tpu.pipeline_mode<synchronous>, transform_indices = @transform_3, window_bounds = array<i64: 2, 16, 16>}, {pipeline_mode = #tpu.pipeline_mode<synchronous>, transform_indices = @transform_4, window_bounds = array<i64: 5, 128, 128>}, {pipeline_mode = #tpu.pipeline_mode<synchronous>, transform_indices = @transform_5, window_bounds = array<i64: 5, 128, 128>}, {pipeline_mode = #tpu.pipeline_mode<synchronous>, transform_indices = @transform_6, window_bounds = array<i64: 5, 128, 128>}, {pipeline_mode = #tpu.pipeline_mode<synchronous>, transform_indices = @transform_7, window_bounds = array<i64: 5, 128, 128>}, {pipeline_mode = #tpu.pipeline_mode<synchronous>, transform_indices = @transform_8, window_bounds = array<i64: 5, 128, 128>}, {pipeline_mode = #tpu.pipeline_mode<synchronous>, transform_indices = @transform_9, window_bounds = array<i64: 5, 128, 128>}, {pipeline_mode = #tpu.pipeline_mode<synchronous>, transform_indices = @transform_10, window_bounds = array<i64: 1, 128>}, {pipeline_mode = #tpu.pipeline_mode<synchronous>, transform_indices = @transform_11, window_bounds = array<i64: 1, 128>}, {pipeline_mode = #tpu.pipeline_mode<synchronous>, transform_indices = @transform_12, window_bounds = array<i64: 1, 128>}, {transform_indices = @transform_13, window_bounds = array<i64: 1, 16, 128>}]} {
    %c0 = arith.constant 0 : index
    %c0_0 = arith.constant 0 : index
    %c0_1 = arith.constant 0 : index
    %0 = vector.load %arg1[%c0, %c0_0, %c0_1] : memref<1x16x128xf32, #tpu.memory_space<vmem>>, vector<1x16x128xf32>
    %1 = vector.shape_cast %0 : vector<1x16x128xf32> to vector<16x128xf32>
    %c0_2 = arith.constant 0 : index
    %c0_3 = arith.constant 0 : index
    %c0_4 = arith.constant 0 : index
    %2 = vector.load %arg2[%c0_2, %c0_3, %c0_4] : memref<1x16x128xf32, #tpu.memory_space<vmem>>, vector<1x16x128xf32>
    %3 = vector.shape_cast %2 : vector<1x16x128xf32> to vector<16x128xf32>
    %c0_5 = arith.constant 0 : index
    %c0_6 = arith.constant 0 : index
    %c0_7 = arith.constant 0 : index
    %4 = vector.load %arg5[%c0_5, %c0_6, %c0_7] : memref<5x128x128xf32, #tpu.memory_space<vmem>>, vector<1x128x128xf32>
    %5 = vector.shape_cast %4 : vector<1x128x128xf32> to vector<128x128xf32>
    %cst = arith.constant dense<0.000000e+00> : vector<16x128xf32>
    %6 = tpu.matmul %1, %5, %cst {dimension_numbers = #tpu.dot_dimension_numbers<[1], [0], [0], [1], [0, 0, 1, 1], [], []>} : vector<16x128xf32>, vector<128x128xf32>, vector<16x128xf32> -> vector<16x128xf32>
    %c0_8 = arith.constant 0 : index
    %c0_9 = arith.constant 0 : index
    %c0_10 = arith.constant 0 : index
    %7 = vector.load %arg6[%c0_8, %c0_9, %c0_10] : memref<5x128x128xf32, #tpu.memory_space<vmem>>, vector<1x128x128xf32>
    %8 = vector.shape_cast %7 : vector<1x128x128xf32> to vector<128x128xf32>
    %cst_11 = arith.constant dense<0.000000e+00> : vector<16x128xf32>
    %9 = tpu.matmul %3, %8, %cst_11 {dimension_numbers = #tpu.dot_dimension_numbers<[1], [0], [0], [1], [0, 0, 1, 1], [], []>} : vector<16x128xf32>, vector<128x128xf32>, vector<16x128xf32> -> vector<16x128xf32>
    %10 = arith.addf %6, %9 : vector<16x128xf32>
    %c0_12 = arith.constant 0 : index
    %c0_13 = arith.constant 0 : index
    %11 = vector.load %arg11[%c0_12, %c0_13] : memref<1x128xf32, #tpu.memory_space<vmem>>, vector<1x128xf32>
    %12 = vector.broadcast %11 : vector<1x128xf32> to vector<16x128xf32>
    %13 = arith.addf %10, %12 : vector<16x128xf32>
    %c0_14 = arith.constant 0 : index
    %c0_15 = arith.constant 0 : index
    %c0_16 = arith.constant 0 : index
    %14 = vector.load %arg7[%c0_14, %c0_15, %c0_16] : memref<5x128x128xf32, #tpu.memory_space<vmem>>, vector<1x128x128xf32>
    %15 = vector.shape_cast %14 : vector<1x128x128xf32> to vector<128x128xf32>
    %cst_17 = arith.constant dense<0.000000e+00> : vector<16x128xf32>
    %16 = tpu.matmul %1, %15, %cst_17 {dimension_numbers = #tpu.dot_dimension_numbers<[1], [0], [0], [1], [0, 0, 1, 1], [], []>} : vector<16x128xf32>, vector<128x128xf32>, vector<16x128xf32> -> vector<16x128xf32>
    %c0_18 = arith.constant 0 : index
    %c0_19 = arith.constant 0 : index
    %c0_20 = arith.constant 0 : index
    %17 = vector.load %arg8[%c0_18, %c0_19, %c0_20] : memref<5x128x128xf32, #tpu.memory_space<vmem>>, vector<1x128x128xf32>
    %18 = vector.shape_cast %17 : vector<1x128x128xf32> to vector<128x128xf32>
    %cst_21 = arith.constant dense<0.000000e+00> : vector<16x128xf32>
    %19 = tpu.matmul %3, %18, %cst_21 {dimension_numbers = #tpu.dot_dimension_numbers<[1], [0], [0], [1], [0, 0, 1, 1], [], []>} : vector<16x128xf32>, vector<128x128xf32>, vector<16x128xf32> -> vector<16x128xf32>
    %20 = arith.addf %16, %19 : vector<16x128xf32>
    %c0_22 = arith.constant 0 : index
    %c0_23 = arith.constant 0 : index
    %21 = vector.load %arg12[%c0_22, %c0_23] : memref<1x128xf32, #tpu.memory_space<vmem>>, vector<1x128xf32>
    %22 = vector.broadcast %21 : vector<1x128xf32> to vector<16x128xf32>
    %23 = arith.addf %20, %22 : vector<16x128xf32>
    %c0_24 = arith.constant 0 : index
    %c0_25 = arith.constant 0 : index
    %c0_26 = arith.constant 0 : index
    %24 = vector.load %arg9[%c0_24, %c0_25, %c0_26] : memref<5x128x128xf32, #tpu.memory_space<vmem>>, vector<1x128x128xf32>
    %25 = vector.shape_cast %24 : vector<1x128x128xf32> to vector<128x128xf32>
    %cst_27 = arith.constant dense<0.000000e+00> : vector<16x128xf32>
    %26 = tpu.matmul %1, %25, %cst_27 {dimension_numbers = #tpu.dot_dimension_numbers<[1], [0], [0], [1], [0, 0, 1, 1], [], []>} : vector<16x128xf32>, vector<128x128xf32>, vector<16x128xf32> -> vector<16x128xf32>
    %c0_28 = arith.constant 0 : index
    %c0_29 = arith.constant 0 : index
    %27 = vector.load %arg13[%c0_28, %c0_29] : memref<1x128xf32, #tpu.memory_space<vmem>>, vector<1x128xf32>
    %28 = vector.broadcast %27 : vector<1x128xf32> to vector<16x128xf32>
    %29 = arith.addf %26, %28 : vector<16x128xf32>
    %c0_30 = arith.constant 0 : index
    %c0_31 = arith.constant 0 : index
    %c0_32 = arith.constant 0 : index
    %30 = vector.load %arg3[%c0_30, %c0_31, %c0_32] : memref<2x16x16xf32, #tpu.memory_space<vmem>>, vector<1x16x16xf32>
    %31 = vector.shape_cast %30 : vector<1x16x16xf32> to vector<16x16xf32>
    %c0_33 = arith.constant 0 : index
    %c0_34 = arith.constant 0 : index
    %c0_35 = arith.constant 0 : index
    %32 = vector.load %arg4[%c0_33, %c0_34, %c0_35] : memref<2x16x16xf32, #tpu.memory_space<vmem>>, vector<1x16x16xf32>
    %33 = vector.shape_cast %32 : vector<1x16x16xf32> to vector<16x16xf32>
    %cst_36 = arith.constant dense<0.000000e+00> : vector<16x128xf32>
    %34 = tpu.matmul %31, %1, %cst_36 {dimension_numbers = #tpu.dot_dimension_numbers<[1], [0], [0], [1], [0, 0, 1, 1], [], []>} : vector<16x16xf32>, vector<16x128xf32>, vector<16x128xf32> -> vector<16x128xf32>
    %cst_37 = arith.constant dense<0.000000e+00> : vector<16x128xf32>
    %35 = tpu.matmul %31, %3, %cst_37 {dimension_numbers = #tpu.dot_dimension_numbers<[1], [0], [0], [1], [0, 0, 1, 1], [], []>} : vector<16x16xf32>, vector<16x128xf32>, vector<16x128xf32> -> vector<16x128xf32>
    %c1 = arith.constant 1 : index
    %c0_38 = arith.constant 0 : index
    %c0_39 = arith.constant 0 : index
    %36 = vector.load %arg5[%c1, %c0_38, %c0_39] : memref<5x128x128xf32, #tpu.memory_space<vmem>>, vector<1x128x128xf32>
    %37 = vector.shape_cast %36 : vector<1x128x128xf32> to vector<128x128xf32>
    %cst_40 = arith.constant dense<0.000000e+00> : vector<16x128xf32>
    %38 = tpu.matmul %34, %37, %cst_40 {dimension_numbers = #tpu.dot_dimension_numbers<[1], [0], [0], [1], [0, 0, 1, 1], [], []>} : vector<16x128xf32>, vector<128x128xf32>, vector<16x128xf32> -> vector<16x128xf32>
    %c1_41 = arith.constant 1 : index
    %c0_42 = arith.constant 0 : index
    %c0_43 = arith.constant 0 : index
    %39 = vector.load %arg6[%c1_41, %c0_42, %c0_43] : memref<5x128x128xf32, #tpu.memory_space<vmem>>, vector<1x128x128xf32>
    %40 = vector.shape_cast %39 : vector<1x128x128xf32> to vector<128x128xf32>
    %cst_44 = arith.constant dense<0.000000e+00> : vector<16x128xf32>
    %41 = tpu.matmul %35, %40, %cst_44 {dimension_numbers = #tpu.dot_dimension_numbers<[1], [0], [0], [1], [0, 0, 1, 1], [], []>} : vector<16x128xf32>, vector<128x128xf32>, vector<16x128xf32> -> vector<16x128xf32>
    %42 = arith.addf %38, %41 : vector<16x128xf32>
    %43 = arith.addf %13, %42 : vector<16x128xf32>
    %c1_45 = arith.constant 1 : index
    %c0_46 = arith.constant 0 : index
    %c0_47 = arith.constant 0 : index
    %44 = vector.load %arg7[%c1_45, %c0_46, %c0_47] : memref<5x128x128xf32, #tpu.memory_space<vmem>>, vector<1x128x128xf32>
    %45 = vector.shape_cast %44 : vector<1x128x128xf32> to vector<128x128xf32>
    %cst_48 = arith.constant dense<0.000000e+00> : vector<16x128xf32>
    %46 = tpu.matmul %34, %45, %cst_48 {dimension_numbers = #tpu.dot_dimension_numbers<[1], [0], [0], [1], [0, 0, 1, 1], [], []>} : vector<16x128xf32>, vector<128x128xf32>, vector<16x128xf32> -> vector<16x128xf32>
    %c1_49 = arith.constant 1 : index
    %c0_50 = arith.constant 0 : index
    %c0_51 = arith.constant 0 : index
    %47 = vector.load %arg8[%c1_49, %c0_50, %c0_51] : memref<5x128x128xf32, #tpu.memory_space<vmem>>, vector<1x128x128xf32>
    %48 = vector.shape_cast %47 : vector<1x128x128xf32> to vector<128x128xf32>
    %cst_52 = arith.constant dense<0.000000e+00> : vector<16x128xf32>
    %49 = tpu.matmul %35, %48, %cst_52 {dimension_numbers = #tpu.dot_dimension_numbers<[1], [0], [0], [1], [0, 0, 1, 1], [], []>} : vector<16x128xf32>, vector<128x128xf32>, vector<16x128xf32> -> vector<16x128xf32>
    %50 = arith.addf %46, %49 : vector<16x128xf32>
    %51 = arith.addf %23, %50 : vector<16x128xf32>
    %c1_53 = arith.constant 1 : index
    %c0_54 = arith.constant 0 : index
    %c0_55 = arith.constant 0 : index
    %52 = vector.load %arg9[%c1_53, %c0_54, %c0_55] : memref<5x128x128xf32, #tpu.memory_space<vmem>>, vector<1x128x128xf32>
    %53 = vector.shape_cast %52 : vector<1x128x128xf32> to vector<128x128xf32>
    %cst_56 = arith.constant dense<0.000000e+00> : vector<16x128xf32>
    %54 = tpu.matmul %34, %53, %cst_56 {dimension_numbers = #tpu.dot_dimension_numbers<[1], [0], [0], [1], [0, 0, 1, 1], [], []>} : vector<16x128xf32>, vector<128x128xf32>, vector<16x128xf32> -> vector<16x128xf32>
    %55 = arith.addf %29, %54 : vector<16x128xf32>
    %cst_57 = arith.constant dense<0.000000e+00> : vector<16x128xf32>
    %56 = tpu.matmul %33, %34, %cst_57 {dimension_numbers = #tpu.dot_dimension_numbers<[1], [0], [0], [1], [0, 0, 1, 1], [], []>} : vector<16x16xf32>, vector<16x128xf32>, vector<16x128xf32> -> vector<16x128xf32>
    %57 = arith.subf %56, %1 : vector<16x128xf32>
    %cst_58 = arith.constant dense<0.000000e+00> : vector<16x128xf32>
    %58 = tpu.matmul %33, %35, %cst_58 {dimension_numbers = #tpu.dot_dimension_numbers<[1], [0], [0], [1], [0, 0, 1, 1], [], []>} : vector<16x16xf32>, vector<16x128xf32>, vector<16x128xf32> -> vector<16x128xf32>
    %59 = arith.subf %58, %3 : vector<16x128xf32>
    %c2 = arith.constant 2 : index
    %c0_59 = arith.constant 0 : index
    %c0_60 = arith.constant 0 : index
    %60 = vector.load %arg5[%c2, %c0_59, %c0_60] : memref<5x128x128xf32, #tpu.memory_space<vmem>>, vector<1x128x128xf32>
    %61 = vector.shape_cast %60 : vector<1x128x128xf32> to vector<128x128xf32>
    %cst_61 = arith.constant dense<0.000000e+00> : vector<16x128xf32>
    %62 = tpu.matmul %57, %61, %cst_61 {dimension_numbers = #tpu.dot_dimension_numbers<[1], [0], [0], [1], [0, 0, 1, 1], [], []>} : vector<16x128xf32>, vector<128x128xf32>, vector<16x128xf32> -> vector<16x128xf32>
    %c2_62 = arith.constant 2 : index
    %c0_63 = arith.constant 0 : index
    %c0_64 = arith.constant 0 : index
    %63 = vector.load %arg6[%c2_62, %c0_63, %c0_64] : memref<5x128x128xf32, #tpu.memory_space<vmem>>, vector<1x128x128xf32>
    %64 = vector.shape_cast %63 : vector<1x128x128xf32> to vector<128x128xf32>
    %cst_65 = arith.constant dense<0.000000e+00> : vector<16x128xf32>
    %65 = tpu.matmul %59, %64, %cst_65 {dimension_numbers = #tpu.dot_dimension_numbers<[1], [0], [0], [1], [0, 0, 1, 1], [], []>} : vector<16x128xf32>, vector<128x128xf32>, vector<16x128xf32> -> vector<16x128xf32>
    %66 = arith.addf %62, %65 : vector<16x128xf32>
    %67 = arith.addf %43, %66 : vector<16x128xf32>
    %c2_66 = arith.constant 2 : index
    %c0_67 = arith.constant 0 : index
    %c0_68 = arith.constant 0 : index
    %68 = vector.load %arg7[%c2_66, %c0_67, %c0_68] : memref<5x128x128xf32, #tpu.memory_space<vmem>>, vector<1x128x128xf32>
    %69 = vector.shape_cast %68 : vector<1x128x128xf32> to vector<128x128xf32>
    %cst_69 = arith.constant dense<0.000000e+00> : vector<16x128xf32>
    %70 = tpu.matmul %57, %69, %cst_69 {dimension_numbers = #tpu.dot_dimension_numbers<[1], [0], [0], [1], [0, 0, 1, 1], [], []>} : vector<16x128xf32>, vector<128x128xf32>, vector<16x128xf32> -> vector<16x128xf32>
    %c2_70 = arith.constant 2 : index
    %c0_71 = arith.constant 0 : index
    %c0_72 = arith.constant 0 : index
    %71 = vector.load %arg8[%c2_70, %c0_71, %c0_72] : memref<5x128x128xf32, #tpu.memory_space<vmem>>, vector<1x128x128xf32>
    %72 = vector.shape_cast %71 : vector<1x128x128xf32> to vector<128x128xf32>
    %cst_73 = arith.constant dense<0.000000e+00> : vector<16x128xf32>
    %73 = tpu.matmul %59, %72, %cst_73 {dimension_numbers = #tpu.dot_dimension_numbers<[1], [0], [0], [1], [0, 0, 1, 1], [], []>} : vector<16x128xf32>, vector<128x128xf32>, vector<16x128xf32> -> vector<16x128xf32>
    %74 = arith.addf %70, %73 : vector<16x128xf32>
    %75 = arith.addf %51, %74 : vector<16x128xf32>
    %c2_74 = arith.constant 2 : index
    %c0_75 = arith.constant 0 : index
    %c0_76 = arith.constant 0 : index
    %76 = vector.load %arg9[%c2_74, %c0_75, %c0_76] : memref<5x128x128xf32, #tpu.memory_space<vmem>>, vector<1x128x128xf32>
    %77 = vector.shape_cast %76 : vector<1x128x128xf32> to vector<128x128xf32>
    %cst_77 = arith.constant dense<0.000000e+00> : vector<16x128xf32>
    %78 = tpu.matmul %57, %77, %cst_77 {dimension_numbers = #tpu.dot_dimension_numbers<[1], [0], [0], [1], [0, 0, 1, 1], [], []>} : vector<16x128xf32>, vector<128x128xf32>, vector<16x128xf32> -> vector<16x128xf32>
    %79 = arith.addf %55, %78 : vector<16x128xf32>
    %c1_78 = arith.constant 1 : index
    %c0_79 = arith.constant 0 : index
    %c0_80 = arith.constant 0 : index
    %80 = vector.load %arg3[%c1_78, %c0_79, %c0_80] : memref<2x16x16xf32, #tpu.memory_space<vmem>>, vector<1x16x16xf32>
    %81 = vector.shape_cast %80 : vector<1x16x16xf32> to vector<16x16xf32>
    %c1_81 = arith.constant 1 : index
    %c0_82 = arith.constant 0 : index
    %c0_83 = arith.constant 0 : index
    %82 = vector.load %arg4[%c1_81, %c0_82, %c0_83] : memref<2x16x16xf32, #tpu.memory_space<vmem>>, vector<1x16x16xf32>
    %83 = vector.shape_cast %82 : vector<1x16x16xf32> to vector<16x16xf32>
    %cst_84 = arith.constant dense<0.000000e+00> : vector<16x128xf32>
    %84 = tpu.matmul %81, %1, %cst_84 {dimension_numbers = #tpu.dot_dimension_numbers<[1], [0], [0], [1], [0, 0, 1, 1], [], []>} : vector<16x16xf32>, vector<16x128xf32>, vector<16x128xf32> -> vector<16x128xf32>
    %cst_85 = arith.constant dense<0.000000e+00> : vector<16x128xf32>
    %85 = tpu.matmul %81, %3, %cst_85 {dimension_numbers = #tpu.dot_dimension_numbers<[1], [0], [0], [1], [0, 0, 1, 1], [], []>} : vector<16x16xf32>, vector<16x128xf32>, vector<16x128xf32> -> vector<16x128xf32>
    %c3 = arith.constant 3 : index
    %c0_86 = arith.constant 0 : index
    %c0_87 = arith.constant 0 : index
    %86 = vector.load %arg5[%c3, %c0_86, %c0_87] : memref<5x128x128xf32, #tpu.memory_space<vmem>>, vector<1x128x128xf32>
    %87 = vector.shape_cast %86 : vector<1x128x128xf32> to vector<128x128xf32>
    %cst_88 = arith.constant dense<0.000000e+00> : vector<16x128xf32>
    %88 = tpu.matmul %84, %87, %cst_88 {dimension_numbers = #tpu.dot_dimension_numbers<[1], [0], [0], [1], [0, 0, 1, 1], [], []>} : vector<16x128xf32>, vector<128x128xf32>, vector<16x128xf32> -> vector<16x128xf32>
    %c3_89 = arith.constant 3 : index
    %c0_90 = arith.constant 0 : index
    %c0_91 = arith.constant 0 : index
    %89 = vector.load %arg6[%c3_89, %c0_90, %c0_91] : memref<5x128x128xf32, #tpu.memory_space<vmem>>, vector<1x128x128xf32>
    %90 = vector.shape_cast %89 : vector<1x128x128xf32> to vector<128x128xf32>
    %cst_92 = arith.constant dense<0.000000e+00> : vector<16x128xf32>
    %91 = tpu.matmul %85, %90, %cst_92 {dimension_numbers = #tpu.dot_dimension_numbers<[1], [0], [0], [1], [0, 0, 1, 1], [], []>} : vector<16x128xf32>, vector<128x128xf32>, vector<16x128xf32> -> vector<16x128xf32>
    %92 = arith.addf %88, %91 : vector<16x128xf32>
    %93 = arith.addf %67, %92 : vector<16x128xf32>
    %c3_93 = arith.constant 3 : index
    %c0_94 = arith.constant 0 : index
    %c0_95 = arith.constant 0 : index
    %94 = vector.load %arg7[%c3_93, %c0_94, %c0_95] : memref<5x128x128xf32, #tpu.memory_space<vmem>>, vector<1x128x128xf32>
    %95 = vector.shape_cast %94 : vector<1x128x128xf32> to vector<128x128xf32>
    %cst_96 = arith.constant dense<0.000000e+00> : vector<16x128xf32>
    %96 = tpu.matmul %84, %95, %cst_96 {dimension_numbers = #tpu.dot_dimension_numbers<[1], [0], [0], [1], [0, 0, 1, 1], [], []>} : vector<16x128xf32>, vector<128x128xf32>, vector<16x128xf32> -> vector<16x128xf32>
    %c3_97 = arith.constant 3 : index
    %c0_98 = arith.constant 0 : index
    %c0_99 = arith.constant 0 : index
    %97 = vector.load %arg8[%c3_97, %c0_98, %c0_99] : memref<5x128x128xf32, #tpu.memory_space<vmem>>, vector<1x128x128xf32>
    %98 = vector.shape_cast %97 : vector<1x128x128xf32> to vector<128x128xf32>
    %cst_100 = arith.constant dense<0.000000e+00> : vector<16x128xf32>
    %99 = tpu.matmul %85, %98, %cst_100 {dimension_numbers = #tpu.dot_dimension_numbers<[1], [0], [0], [1], [0, 0, 1, 1], [], []>} : vector<16x128xf32>, vector<128x128xf32>, vector<16x128xf32> -> vector<16x128xf32>
    %100 = arith.addf %96, %99 : vector<16x128xf32>
    %101 = arith.addf %75, %100 : vector<16x128xf32>
    %c3_101 = arith.constant 3 : index
    %c0_102 = arith.constant 0 : index
    %c0_103 = arith.constant 0 : index
    %102 = vector.load %arg9[%c3_101, %c0_102, %c0_103] : memref<5x128x128xf32, #tpu.memory_space<vmem>>, vector<1x128x128xf32>
    %103 = vector.shape_cast %102 : vector<1x128x128xf32> to vector<128x128xf32>
    %cst_104 = arith.constant dense<0.000000e+00> : vector<16x128xf32>
    %104 = tpu.matmul %84, %103, %cst_104 {dimension_numbers = #tpu.dot_dimension_numbers<[1], [0], [0], [1], [0, 0, 1, 1], [], []>} : vector<16x128xf32>, vector<128x128xf32>, vector<16x128xf32> -> vector<16x128xf32>
    %105 = arith.addf %79, %104 : vector<16x128xf32>
    %cst_105 = arith.constant dense<0.000000e+00> : vector<16x128xf32>
    %106 = tpu.matmul %83, %84, %cst_105 {dimension_numbers = #tpu.dot_dimension_numbers<[1], [0], [0], [1], [0, 0, 1, 1], [], []>} : vector<16x16xf32>, vector<16x128xf32>, vector<16x128xf32> -> vector<16x128xf32>
    %107 = arith.subf %106, %1 : vector<16x128xf32>
    %cst_106 = arith.constant dense<0.000000e+00> : vector<16x128xf32>
    %108 = tpu.matmul %83, %85, %cst_106 {dimension_numbers = #tpu.dot_dimension_numbers<[1], [0], [0], [1], [0, 0, 1, 1], [], []>} : vector<16x16xf32>, vector<16x128xf32>, vector<16x128xf32> -> vector<16x128xf32>
    %109 = arith.subf %108, %3 : vector<16x128xf32>
    %c4 = arith.constant 4 : index
    %c0_107 = arith.constant 0 : index
    %c0_108 = arith.constant 0 : index
    %110 = vector.load %arg5[%c4, %c0_107, %c0_108] : memref<5x128x128xf32, #tpu.memory_space<vmem>>, vector<1x128x128xf32>
    %111 = vector.shape_cast %110 : vector<1x128x128xf32> to vector<128x128xf32>
    %cst_109 = arith.constant dense<0.000000e+00> : vector<16x128xf32>
    %112 = tpu.matmul %107, %111, %cst_109 {dimension_numbers = #tpu.dot_dimension_numbers<[1], [0], [0], [1], [0, 0, 1, 1], [], []>} : vector<16x128xf32>, vector<128x128xf32>, vector<16x128xf32> -> vector<16x128xf32>
    %c4_110 = arith.constant 4 : index
    %c0_111 = arith.constant 0 : index
    %c0_112 = arith.constant 0 : index
    %113 = vector.load %arg6[%c4_110, %c0_111, %c0_112] : memref<5x128x128xf32, #tpu.memory_space<vmem>>, vector<1x128x128xf32>
    %114 = vector.shape_cast %113 : vector<1x128x128xf32> to vector<128x128xf32>
    %cst_113 = arith.constant dense<0.000000e+00> : vector<16x128xf32>
    %115 = tpu.matmul %109, %114, %cst_113 {dimension_numbers = #tpu.dot_dimension_numbers<[1], [0], [0], [1], [0, 0, 1, 1], [], []>} : vector<16x128xf32>, vector<128x128xf32>, vector<16x128xf32> -> vector<16x128xf32>
    %116 = arith.addf %112, %115 : vector<16x128xf32>
    %117 = arith.addf %93, %116 : vector<16x128xf32>
    %c4_114 = arith.constant 4 : index
    %c0_115 = arith.constant 0 : index
    %c0_116 = arith.constant 0 : index
    %118 = vector.load %arg7[%c4_114, %c0_115, %c0_116] : memref<5x128x128xf32, #tpu.memory_space<vmem>>, vector<1x128x128xf32>
    %119 = vector.shape_cast %118 : vector<1x128x128xf32> to vector<128x128xf32>
    %cst_117 = arith.constant dense<0.000000e+00> : vector<16x128xf32>
    %120 = tpu.matmul %107, %119, %cst_117 {dimension_numbers = #tpu.dot_dimension_numbers<[1], [0], [0], [1], [0, 0, 1, 1], [], []>} : vector<16x128xf32>, vector<128x128xf32>, vector<16x128xf32> -> vector<16x128xf32>
    %c4_118 = arith.constant 4 : index
    %c0_119 = arith.constant 0 : index
    %c0_120 = arith.constant 0 : index
    %121 = vector.load %arg8[%c4_118, %c0_119, %c0_120] : memref<5x128x128xf32, #tpu.memory_space<vmem>>, vector<1x128x128xf32>
    %122 = vector.shape_cast %121 : vector<1x128x128xf32> to vector<128x128xf32>
    %cst_121 = arith.constant dense<0.000000e+00> : vector<16x128xf32>
    %123 = tpu.matmul %109, %122, %cst_121 {dimension_numbers = #tpu.dot_dimension_numbers<[1], [0], [0], [1], [0, 0, 1, 1], [], []>} : vector<16x128xf32>, vector<128x128xf32>, vector<16x128xf32> -> vector<16x128xf32>
    %124 = arith.addf %120, %123 : vector<16x128xf32>
    %125 = arith.addf %101, %124 : vector<16x128xf32>
    %c4_122 = arith.constant 4 : index
    %c0_123 = arith.constant 0 : index
    %c0_124 = arith.constant 0 : index
    %126 = vector.load %arg9[%c4_122, %c0_123, %c0_124] : memref<5x128x128xf32, #tpu.memory_space<vmem>>, vector<1x128x128xf32>
    %127 = vector.shape_cast %126 : vector<1x128x128xf32> to vector<128x128xf32>
    %cst_125 = arith.constant dense<0.000000e+00> : vector<16x128xf32>
    %128 = tpu.matmul %107, %127, %cst_125 {dimension_numbers = #tpu.dot_dimension_numbers<[1], [0], [0], [1], [0, 0, 1, 1], [], []>} : vector<16x128xf32>, vector<128x128xf32>, vector<16x128xf32> -> vector<16x128xf32>
    %129 = arith.addf %105, %128 : vector<16x128xf32>
    %130 = arith.negf %117 : vector<16x128xf32>
    %131 = math.exp %130 : vector<16x128xf32>
    %cst_126 = arith.constant 1.000000e+00 : f32
    %132 = vector.broadcast %cst_126 : f32 to vector<16x128xf32>
    %133 = arith.addf %132, %131 : vector<16x128xf32>
    %134 = arith.divf %132, %133 : vector<16x128xf32>
    %135 = arith.negf %125 : vector<16x128xf32>
    %136 = math.exp %135 : vector<16x128xf32>
    %cst_127 = arith.constant 1.000000e+00 : f32
    %137 = vector.broadcast %cst_127 : f32 to vector<16x128xf32>
    %138 = arith.addf %137, %136 : vector<16x128xf32>
    %139 = arith.divf %137, %138 : vector<16x128xf32>
    %140 = arith.mulf %134, %3 : vector<16x128xf32>
    %c0_128 = arith.constant 0 : index
    %c0_129 = arith.constant 0 : index
    %c0_130 = arith.constant 0 : index
    %141 = vector.load %arg10[%c0_128, %c0_129, %c0_130] : memref<5x128x128xf32, #tpu.memory_space<vmem>>, vector<1x128x128xf32>
    %142 = vector.shape_cast %141 : vector<1x128x128xf32> to vector<128x128xf32>
    %cst_131 = arith.constant dense<0.000000e+00> : vector<16x128xf32>
    %143 = tpu.matmul %140, %142, %cst_131 {dimension_numbers = #tpu.dot_dimension_numbers<[1], [0], [0], [1], [0, 0, 1, 1], [], []>} : vector<16x128xf32>, vector<128x128xf32>, vector<16x128xf32> -> vector<16x128xf32>
    %144 = arith.addf %129, %143 : vector<16x128xf32>
    %c0_132 = arith.constant 0 : index
    %c0_133 = arith.constant 0 : index
    %c0_134 = arith.constant 0 : index
    %145 = vector.load %arg3[%c0_132, %c0_133, %c0_134] : memref<2x16x16xf32, #tpu.memory_space<vmem>>, vector<1x16x16xf32>
    %146 = vector.shape_cast %145 : vector<1x16x16xf32> to vector<16x16xf32>
    %c0_135 = arith.constant 0 : index
    %c0_136 = arith.constant 0 : index
    %c0_137 = arith.constant 0 : index
    %147 = vector.load %arg4[%c0_135, %c0_136, %c0_137] : memref<2x16x16xf32, #tpu.memory_space<vmem>>, vector<1x16x16xf32>
    %148 = vector.shape_cast %147 : vector<1x16x16xf32> to vector<16x16xf32>
    %cst_138 = arith.constant dense<0.000000e+00> : vector<16x128xf32>
    %149 = tpu.matmul %146, %140, %cst_138 {dimension_numbers = #tpu.dot_dimension_numbers<[1], [0], [0], [1], [0, 0, 1, 1], [], []>} : vector<16x16xf32>, vector<16x128xf32>, vector<16x128xf32> -> vector<16x128xf32>
    %c1_139 = arith.constant 1 : index
    %c0_140 = arith.constant 0 : index
    %c0_141 = arith.constant 0 : index
    %150 = vector.load %arg10[%c1_139, %c0_140, %c0_141] : memref<5x128x128xf32, #tpu.memory_space<vmem>>, vector<1x128x128xf32>
    %151 = vector.shape_cast %150 : vector<1x128x128xf32> to vector<128x128xf32>
    %cst_142 = arith.constant dense<0.000000e+00> : vector<16x128xf32>
    %152 = tpu.matmul %149, %151, %cst_142 {dimension_numbers = #tpu.dot_dimension_numbers<[1], [0], [0], [1], [0, 0, 1, 1], [], []>} : vector<16x128xf32>, vector<128x128xf32>, vector<16x128xf32> -> vector<16x128xf32>
    %153 = arith.addf %144, %152 : vector<16x128xf32>
    %cst_143 = arith.constant dense<0.000000e+00> : vector<16x128xf32>
    %154 = tpu.matmul %148, %149, %cst_143 {dimension_numbers = #tpu.dot_dimension_numbers<[1], [0], [0], [1], [0, 0, 1, 1], [], []>} : vector<16x16xf32>, vector<16x128xf32>, vector<16x128xf32> -> vector<16x128xf32>
    %155 = arith.subf %154, %140 : vector<16x128xf32>
    %c2_144 = arith.constant 2 : index
    %c0_145 = arith.constant 0 : index
    %c0_146 = arith.constant 0 : index
    %156 = vector.load %arg10[%c2_144, %c0_145, %c0_146] : memref<5x128x128xf32, #tpu.memory_space<vmem>>, vector<1x128x128xf32>
    %157 = vector.shape_cast %156 : vector<1x128x128xf32> to vector<128x128xf32>
    %cst_147 = arith.constant dense<0.000000e+00> : vector<16x128xf32>
    %158 = tpu.matmul %155, %157, %cst_147 {dimension_numbers = #tpu.dot_dimension_numbers<[1], [0], [0], [1], [0, 0, 1, 1], [], []>} : vector<16x128xf32>, vector<128x128xf32>, vector<16x128xf32> -> vector<16x128xf32>
    %159 = arith.addf %153, %158 : vector<16x128xf32>
    %c1_148 = arith.constant 1 : index
    %c0_149 = arith.constant 0 : index
    %c0_150 = arith.constant 0 : index
    %160 = vector.load %arg3[%c1_148, %c0_149, %c0_150] : memref<2x16x16xf32, #tpu.memory_space<vmem>>, vector<1x16x16xf32>
    %161 = vector.shape_cast %160 : vector<1x16x16xf32> to vector<16x16xf32>
    %c1_151 = arith.constant 1 : index
    %c0_152 = arith.constant 0 : index
    %c0_153 = arith.constant 0 : index
    %162 = vector.load %arg4[%c1_151, %c0_152, %c0_153] : memref<2x16x16xf32, #tpu.memory_space<vmem>>, vector<1x16x16xf32>
    %163 = vector.shape_cast %162 : vector<1x16x16xf32> to vector<16x16xf32>
    %cst_154 = arith.constant dense<0.000000e+00> : vector<16x128xf32>
    %164 = tpu.matmul %161, %140, %cst_154 {dimension_numbers = #tpu.dot_dimension_numbers<[1], [0], [0], [1], [0, 0, 1, 1], [], []>} : vector<16x16xf32>, vector<16x128xf32>, vector<16x128xf32> -> vector<16x128xf32>
    %c3_155 = arith.constant 3 : index
    %c0_156 = arith.constant 0 : index
    %c0_157 = arith.constant 0 : index
    %165 = vector.load %arg10[%c3_155, %c0_156, %c0_157] : memref<5x128x128xf32, #tpu.memory_space<vmem>>, vector<1x128x128xf32>
    %166 = vector.shape_cast %165 : vector<1x128x128xf32> to vector<128x128xf32>
    %cst_158 = arith.constant dense<0.000000e+00> : vector<16x128xf32>
    %167 = tpu.matmul %164, %166, %cst_158 {dimension_numbers = #tpu.dot_dimension_numbers<[1], [0], [0], [1], [0, 0, 1, 1], [], []>} : vector<16x128xf32>, vector<128x128xf32>, vector<16x128xf32> -> vector<16x128xf32>
    %168 = arith.addf %159, %167 : vector<16x128xf32>
    %cst_159 = arith.constant dense<0.000000e+00> : vector<16x128xf32>
    %169 = tpu.matmul %163, %164, %cst_159 {dimension_numbers = #tpu.dot_dimension_numbers<[1], [0], [0], [1], [0, 0, 1, 1], [], []>} : vector<16x16xf32>, vector<16x128xf32>, vector<16x128xf32> -> vector<16x128xf32>
    %170 = arith.subf %169, %140 : vector<16x128xf32>
    %c4_160 = arith.constant 4 : index
    %c0_161 = arith.constant 0 : index
    %c0_162 = arith.constant 0 : index
    %171 = vector.load %arg10[%c4_160, %c0_161, %c0_162] : memref<5x128x128xf32, #tpu.memory_space<vmem>>, vector<1x128x128xf32>
    %172 = vector.shape_cast %171 : vector<1x128x128xf32> to vector<128x128xf32>
    %cst_163 = arith.constant dense<0.000000e+00> : vector<16x128xf32>
    %173 = tpu.matmul %170, %172, %cst_163 {dimension_numbers = #tpu.dot_dimension_numbers<[1], [0], [0], [1], [0, 0, 1, 1], [], []>} : vector<16x128xf32>, vector<128x128xf32>, vector<16x128xf32> -> vector<16x128xf32>
    %174 = arith.addf %168, %173 : vector<16x128xf32>
    %175 = math.tanh %174 : vector<16x128xf32>
    %176 = arith.mulf %139, %3 : vector<16x128xf32>
    %cst_164 = arith.constant 1.000000e+00 : f32
    %177 = vector.broadcast %cst_164 : f32 to vector<16x128xf32>
    %178 = arith.subf %177, %139 : vector<16x128xf32>
    %179 = arith.mulf %178, %175 : vector<16x128xf32>
    %180 = arith.addf %176, %179 : vector<16x128xf32>
    %c0_165 = arith.constant 0 : index
    %c0_166 = arith.constant 0 : index
    %c0_167 = arith.constant 0 : index
    %181 = vector.load %arg14[%c0_165, %c0_166, %c0_167] : memref<1x16x128xf32, #tpu.memory_space<vmem>>, vector<1x16x128xf32>
    %182 = vector.shape_cast %181 : vector<1x16x128xf32> to vector<16x128xf32>
    %183 = vector.shape_cast %180 : vector<16x128xf32> to vector<1x16x128xf32>
    tpu.vector_store %arg14[%c0_165, %c0_166, %c0_167], %183 {strides = array<i32>} : memref<1x16x128xf32, #tpu.memory_space<vmem>>, vector<1x16x128xf32>,
    return
  }
  func.func @transform_0(%arg0: i32) -> (i32, i32, i32) {
    %c0_i32 = arith.constant 0 : i32
    %c0_i32_0 = arith.constant 0 : i32
    %c0_i32_1 = arith.constant 0 : i32
    return %arg0, %c0_i32, %c0_i32_0 : i32, i32, i32
  }
  func.func @transform_1(%arg0: i32) -> (i32, i32, i32) {
    %c0_i32 = arith.constant 0 : i32
    %c0_i32_0 = arith.constant 0 : i32
    %c0_i32_1 = arith.constant 0 : i32
    return %arg0, %c0_i32, %c0_i32_0 : i32, i32, i32
  }
  func.func @transform_2(%arg0: i32) -> (i32, i32, i32) {
    %c0_i32 = arith.constant 0 : i32
    %c0_i32_0 = arith.constant 0 : i32
    %c0_i32_1 = arith.constant 0 : i32
    %c0_i32_2 = arith.constant 0 : i32
    return %c0_i32, %c0_i32_0, %c0_i32_1 : i32, i32, i32
  }
  func.func @transform_3(%arg0: i32) -> (i32, i32, i32) {
    %c0_i32 = arith.constant 0 : i32
    %c0_i32_0 = arith.constant 0 : i32
    %c0_i32_1 = arith.constant 0 : i32
    %c0_i32_2 = arith.constant 0 : i32
    return %c0_i32, %c0_i32_0, %c0_i32_1 : i32, i32, i32
  }
  func.func @transform_4(%arg0: i32) -> (i32, i32, i32) {
    %c0_i32 = arith.constant 0 : i32
    %c0_i32_0 = arith.constant 0 : i32
    %c0_i32_1 = arith.constant 0 : i32
    %c0_i32_2 = arith.constant 0 : i32
    return %c0_i32, %c0_i32_0, %c0_i32_1 : i32, i32, i32
  }
  func.func @transform_5(%arg0: i32) -> (i32, i32, i32) {
    %c0_i32 = arith.constant 0 : i32
    %c0_i32_0 = arith.constant 0 : i32
    %c0_i32_1 = arith.constant 0 : i32
    %c0_i32_2 = arith.constant 0 : i32
    return %c0_i32, %c0_i32_0, %c0_i32_1 : i32, i32, i32
  }
  func.func @transform_6(%arg0: i32) -> (i32, i32, i32) {
    %c0_i32 = arith.constant 0 : i32
    %c0_i32_0 = arith.constant 0 : i32
    %c0_i32_1 = arith.constant 0 : i32
    %c0_i32_2 = arith.constant 0 : i32
    return %c0_i32, %c0_i32_0, %c0_i32_1 : i32, i32, i32
  }
  func.func @transform_7(%arg0: i32) -> (i32, i32, i32) {
    %c0_i32 = arith.constant 0 : i32
    %c0_i32_0 = arith.constant 0 : i32
    %c0_i32_1 = arith.constant 0 : i32
    %c0_i32_2 = arith.constant 0 : i32
    return %c0_i32, %c0_i32_0, %c0_i32_1 : i32, i32, i32
  }
  func.func @transform_8(%arg0: i32) -> (i32, i32, i32) {
    %c0_i32 = arith.constant 0 : i32
    %c0_i32_0 = arith.constant 0 : i32
    %c0_i32_1 = arith.constant 0 : i32
    %c0_i32_2 = arith.constant 0 : i32
    return %c0_i32, %c0_i32_0, %c0_i32_1 : i32, i32, i32
  }
  func.func @transform_9(%arg0: i32) -> (i32, i32, i32) {
    %c0_i32 = arith.constant 0 : i32
    %c0_i32_0 = arith.constant 0 : i32
    %c0_i32_1 = arith.constant 0 : i32
    %c0_i32_2 = arith.constant 0 : i32
    return %c0_i32, %c0_i32_0, %c0_i32_1 : i32, i32, i32
  }
  func.func @transform_10(%arg0: i32) -> (i32, i32) {
    %c0_i32 = arith.constant 0 : i32
    %c0_i32_0 = arith.constant 0 : i32
    %c0_i32_1 = arith.constant 0 : i32
    return %c0_i32, %c0_i32_0 : i32, i32
  }
  func.func @transform_11(%arg0: i32) -> (i32, i32) {
    %c0_i32 = arith.constant 0 : i32
    %c0_i32_0 = arith.constant 0 : i32
    %c0_i32_1 = arith.constant 0 : i32
    return %c0_i32, %c0_i32_0 : i32, i32
  }
  func.func @transform_12(%arg0: i32) -> (i32, i32) {
    %c0_i32 = arith.constant 0 : i32
    %c0_i32_0 = arith.constant 0 : i32
    %c0_i32_1 = arith.constant 0 : i32
    return %c0_i32, %c0_i32_0 : i32, i32
  }
  func.func @transform_13(%arg0: i32) -> (i32, i32, i32) {
    %c0_i32 = arith.constant 0 : i32
    %c0_i32_0 = arith.constant 0 : i32
    %c0_i32_1 = arith.constant 0 : i32
    return %arg0, %c0_i32, %c0_i32_0 : i32, i32, i32
  }
}

module attributes {stable_mosaic.version = 11 : i64} {
  func.func @evo_qkv_kernel(%arg0: memref<16x128xf32, #tpu.memory_space<vmem>>, %arg1: memref<16x128xf32, #tpu.memory_space<vmem>>, %arg2: memref<128x128xf32, #tpu.memory_space<vmem>>, %arg3: memref<128x128xf32, #tpu.memory_space<vmem>>, %arg4: memref<128x128xf32, #tpu.memory_space<vmem>>, %arg5: memref<16x128xf32, #tpu.memory_space<vmem>>, %arg6: memref<16x128xf32, #tpu.memory_space<vmem>>, %arg7: memref<16x128xf32, #tpu.memory_space<vmem>>) attributes {dimension_semantics = [], scalar_prefetch = 0 : i64, scratch_operands = 0 : i64, tpu.core_type = #tpu.core_type<tc>} {
    %c0 = arith.constant 0 : index
    %c0_0 = arith.constant 0 : index
    %0 = vector.load %arg0[%c0, %c0_0] : memref<16x128xf32, #tpu.memory_space<vmem>>, vector<16x128xf32>
    %c0_1 = arith.constant 0 : index
    %c0_2 = arith.constant 0 : index
    %1 = vector.load %arg2[%c0_1, %c0_2] : memref<128x128xf32, #tpu.memory_space<vmem>>, vector<128x128xf32>
    %cst = arith.constant dense<0.000000e+00> : vector<16x128xf32>
    %2 = tpu.matmul %0, %1, %cst {dimension_numbers = #tpu.dot_dimension_numbers<[1], [0], [0], [1], [0, 0, 1, 1], [], []>} : vector<16x128xf32>, vector<128x128xf32>, vector<16x128xf32> -> vector<16x128xf32>
    %c0_3 = arith.constant 0 : index
    %c0_4 = arith.constant 0 : index
    %3 = vector.load %arg5[%c0_3, %c0_4] : memref<16x128xf32, #tpu.memory_space<vmem>>, vector<16x128xf32>
    tpu.vector_store %arg5[%c0_3, %c0_4], %2 {strides = array<i32>} : memref<16x128xf32, #tpu.memory_space<vmem>>, vector<16x128xf32>,
    %c0_5 = arith.constant 0 : index
    %c0_6 = arith.constant 0 : index
    %4 = vector.load %arg1[%c0_5, %c0_6] : memref<16x128xf32, #tpu.memory_space<vmem>>, vector<16x128xf32>
    %c0_7 = arith.constant 0 : index
    %c0_8 = arith.constant 0 : index
    %5 = vector.load %arg3[%c0_7, %c0_8] : memref<128x128xf32, #tpu.memory_space<vmem>>, vector<128x128xf32>
    %cst_9 = arith.constant dense<0.000000e+00> : vector<16x128xf32>
    %6 = tpu.matmul %4, %5, %cst_9 {dimension_numbers = #tpu.dot_dimension_numbers<[1], [0], [0], [1], [0, 0, 1, 1], [], []>} : vector<16x128xf32>, vector<128x128xf32>, vector<16x128xf32> -> vector<16x128xf32>
    %c0_10 = arith.constant 0 : index
    %c0_11 = arith.constant 0 : index
    %7 = vector.load %arg6[%c0_10, %c0_11] : memref<16x128xf32, #tpu.memory_space<vmem>>, vector<16x128xf32>
    tpu.vector_store %arg6[%c0_10, %c0_11], %6 {strides = array<i32>} : memref<16x128xf32, #tpu.memory_space<vmem>>, vector<16x128xf32>,
    %c0_12 = arith.constant 0 : index
    %c0_13 = arith.constant 0 : index
    %8 = vector.load %arg1[%c0_12, %c0_13] : memref<16x128xf32, #tpu.memory_space<vmem>>, vector<16x128xf32>
    %c0_14 = arith.constant 0 : index
    %c0_15 = arith.constant 0 : index
    %9 = vector.load %arg4[%c0_14, %c0_15] : memref<128x128xf32, #tpu.memory_space<vmem>>, vector<128x128xf32>
    %cst_16 = arith.constant dense<0.000000e+00> : vector<16x128xf32>
    %10 = tpu.matmul %8, %9, %cst_16 {dimension_numbers = #tpu.dot_dimension_numbers<[1], [0], [0], [1], [0, 0, 1, 1], [], []>} : vector<16x128xf32>, vector<128x128xf32>, vector<16x128xf32> -> vector<16x128xf32>
    %c0_17 = arith.constant 0 : index
    %c0_18 = arith.constant 0 : index
    %11 = vector.load %arg7[%c0_17, %c0_18] : memref<16x128xf32, #tpu.memory_space<vmem>>, vector<16x128xf32>
    tpu.vector_store %arg7[%c0_17, %c0_18], %10 {strides = array<i32>} : memref<16x128xf32, #tpu.memory_space<vmem>>, vector<16x128xf32>,
    return
  }
}

module attributes {stable_mosaic.version = 11 : i64} {
  func.func @kernel(%arg0: i32, %arg1: memref<16x128xf32, #tpu.memory_space<vmem>>, %arg2: memref<16x128xf32, #tpu.memory_space<vmem>>, %arg3: memref<16x128xf32, #tpu.memory_space<vmem>>, %arg4: memref<16x128xf32, #tpu.memory_space<vmem>>, %arg5: memref<128x128xf32, #tpu.memory_space<vmem>>, %arg6: memref<1x128xf32, #tpu.memory_space<vmem>>, %arg7: memref<128x128xf32, #tpu.memory_space<vmem>>, %arg8: memref<16x128xf32, #tpu.memory_space<vmem>>, %arg9: memref<16x16xf32, #tpu.memory_space<vmem>>) attributes {dimension_semantics = [#tpu.dimension_semantics<parallel>], iteration_bounds = array<i64: 1>, scalar_prefetch = 0 : i64, scratch_operands = 0 : i64, tpu.core_type = #tpu.core_type<tc>, window_params = [{transform_indices = @transform_0, window_bounds = array<i64: 16, 128>}, {pipeline_mode = #tpu.pipeline_mode<synchronous>, transform_indices = @transform_1, window_bounds = array<i64: 16, 128>}, {pipeline_mode = #tpu.pipeline_mode<synchronous>, transform_indices = @transform_2, window_bounds = array<i64: 16, 128>}, {transform_indices = @transform_3, window_bounds = array<i64: 16, 128>}, {pipeline_mode = #tpu.pipeline_mode<synchronous>, transform_indices = @transform_4, window_bounds = array<i64: 128, 128>}, {pipeline_mode = #tpu.pipeline_mode<synchronous>, transform_indices = @transform_5, window_bounds = array<i64: 1, 128>}, {pipeline_mode = #tpu.pipeline_mode<synchronous>, transform_indices = @transform_6, window_bounds = array<i64: 128, 128>}, {transform_indices = @transform_7, window_bounds = array<i64: 16, 128>}, {transform_indices = @transform_8, window_bounds = array<i64: 16, 16>}]} {
    %c0 = arith.constant 0 : index
    %c0_0 = arith.constant 0 : index
    %0 = vector.load %arg1[%c0, %c0_0] : memref<16x128xf32, #tpu.memory_space<vmem>>, vector<16x128xf32>
    %c0_1 = arith.constant 0 : index
    %c0_2 = arith.constant 0 : index
    %1 = vector.load %arg2[%c0_1, %c0_2] : memref<16x128xf32, #tpu.memory_space<vmem>>, vector<16x128xf32>
    %cst = arith.constant dense<0.000000e+00> : vector<16x16xf32>
    %2 = tpu.matmul %0, %1, %cst {dimension_numbers = #tpu.dot_dimension_numbers<[1], [1], [0], [0], [0, 0, 1, 0], [], []>} : vector<16x128xf32>, vector<16x128xf32>, vector<16x16xf32> -> vector<16x16xf32>
    %cst_3 = arith.constant 2.500000e-01 : f32
    %3 = vector.broadcast %cst_3 : f32 to vector<16x16xf32>
    %4 = arith.mulf %2, %3 : vector<16x16xf32>
    %cst_4 = arith.constant dense<0xFF800000> : vector<16xf32>
    %5 = vector.multi_reduction <maximumf>, %4, %cst_4 [1] : vector<16x16xf32> to vector<16xf32>
    %6 = vector.shape_cast %5 : vector<16xf32> to vector<16x1xf32>
    %7 = vector.broadcast %6 : vector<16x1xf32> to vector<16x16xf32>
    %8 = arith.subf %4, %7 : vector<16x16xf32>
    %9 = math.exp %8 : vector<16x16xf32>
    %cst_5 = arith.constant dense<0.000000e+00> : vector<16xf32>
    %10 = vector.multi_reduction <add>, %9, %cst_5 [1] : vector<16x16xf32> to vector<16xf32>
    %11 = vector.shape_cast %10 : vector<16xf32> to vector<16x1xf32>
    %12 = tpu.reciprocal %11 : vector<16x1xf32> -> vector<16x1xf32>
    %13 = vector.broadcast %12 : vector<16x1xf32> to vector<16x16xf32>
    %14 = arith.mulf %9, %13 : vector<16x16xf32>
    %c0_6 = arith.constant 0 : index
    %c0_7 = arith.constant 0 : index
    %15 = vector.load %arg3[%c0_6, %c0_7] : memref<16x128xf32, #tpu.memory_space<vmem>>, vector<16x128xf32>
    %cst_8 = arith.constant dense<0.000000e+00> : vector<16x128xf32>
    %16 = tpu.matmul %14, %15, %cst_8 {dimension_numbers = #tpu.dot_dimension_numbers<[1], [0], [0], [1], [0, 0, 1, 1], [], []>} : vector<16x16xf32>, vector<16x128xf32>, vector<16x128xf32> -> vector<16x128xf32>
    %c0_9 = arith.constant 0 : index
    %c0_10 = arith.constant 0 : index
    %17 = vector.load %arg5[%c0_9, %c0_10] : memref<128x128xf32, #tpu.memory_space<vmem>>, vector<128x128xf32>
    %cst_11 = arith.constant dense<0.000000e+00> : vector<16x128xf32>
    %18 = tpu.matmul %16, %17, %cst_11 {dimension_numbers = #tpu.dot_dimension_numbers<[1], [0], [0], [1], [0, 0, 1, 1], [], []>} : vector<16x128xf32>, vector<128x128xf32>, vector<16x128xf32> -> vector<16x128xf32>
    %c0_12 = arith.constant 0 : index
    %c0_13 = arith.constant 0 : index
    %19 = vector.load %arg4[%c0_12, %c0_13] : memref<16x128xf32, #tpu.memory_space<vmem>>, vector<16x128xf32>
    %c0_14 = arith.constant 0 : index
    %c0_15 = arith.constant 0 : index
    %20 = vector.load %arg7[%c0_14, %c0_15] : memref<128x128xf32, #tpu.memory_space<vmem>>, vector<128x128xf32>
    %cst_16 = arith.constant dense<0.000000e+00> : vector<16x128xf32>
    %21 = tpu.matmul %19, %20, %cst_16 {dimension_numbers = #tpu.dot_dimension_numbers<[1], [0], [0], [1], [0, 0, 1, 1], [], []>} : vector<16x128xf32>, vector<128x128xf32>, vector<16x128xf32> -> vector<16x128xf32>
    %22 = arith.addf %18, %21 : vector<16x128xf32>
    %c0_17 = arith.constant 0 : index
    %c0_18 = arith.constant 0 : index
    %23 = vector.load %arg6[%c0_17, %c0_18] : memref<1x128xf32, #tpu.memory_space<vmem>>, vector<1x128xf32>
    %24 = vector.broadcast %23 : vector<1x128xf32> to vector<16x128xf32>
    %25 = arith.addf %22, %24 : vector<16x128xf32>
    %26 = math.tanh %25 : vector<16x128xf32>
    %c0_19 = arith.constant 0 : index
    %c0_20 = arith.constant 0 : index
    %27 = vector.load %arg8[%c0_19, %c0_20] : memref<16x128xf32, #tpu.memory_space<vmem>>, vector<16x128xf32>
    tpu.vector_store %arg8[%c0_19, %c0_20], %26 {strides = array<i32>} : memref<16x128xf32, #tpu.memory_space<vmem>>, vector<16x128xf32>,
    %c0_21 = arith.constant 0 : index
    %c0_22 = arith.constant 0 : index
    %28 = vector.load %arg9[%c0_21, %c0_22] : memref<16x16xf32, #tpu.memory_space<vmem>>, vector<16x16xf32>
    tpu.vector_store %arg9[%c0_21, %c0_22], %14 {strides = array<i32>} : memref<16x16xf32, #tpu.memory_space<vmem>>, vector<16x16xf32>,
    return
  }
  func.func @transform_0(%arg0: i32) -> (i32, i32) {
    %c0_i32 = arith.constant 0 : i32
    %c0_i32_0 = arith.constant 0 : i32
    return %arg0, %c0_i32 : i32, i32
  }
  func.func @transform_1(%arg0: i32) -> (i32, i32) {
    %c0_i32 = arith.constant 0 : i32
    %c0_i32_0 = arith.constant 0 : i32
    %c0_i32_1 = arith.constant 0 : i32
    return %c0_i32, %c0_i32_0 : i32, i32
  }
  func.func @transform_2(%arg0: i32) -> (i32, i32) {
    %c0_i32 = arith.constant 0 : i32
    %c0_i32_0 = arith.constant 0 : i32
    %c0_i32_1 = arith.constant 0 : i32
    return %c0_i32, %c0_i32_0 : i32, i32
  }
  func.func @transform_3(%arg0: i32) -> (i32, i32) {
    %c0_i32 = arith.constant 0 : i32
    %c0_i32_0 = arith.constant 0 : i32
    return %arg0, %c0_i32 : i32, i32
  }
  func.func @transform_4(%arg0: i32) -> (i32, i32) {
    %c0_i32 = arith.constant 0 : i32
    %c0_i32_0 = arith.constant 0 : i32
    %c0_i32_1 = arith.constant 0 : i32
    return %c0_i32, %c0_i32_0 : i32, i32
  }
  func.func @transform_5(%arg0: i32) -> (i32, i32) {
    %c0_i32 = arith.constant 0 : i32
    %c0_i32_0 = arith.constant 0 : i32
    %c0_i32_1 = arith.constant 0 : i32
    return %c0_i32, %c0_i32_0 : i32, i32
  }
  func.func @transform_6(%arg0: i32) -> (i32, i32) {
    %c0_i32 = arith.constant 0 : i32
    %c0_i32_0 = arith.constant 0 : i32
    %c0_i32_1 = arith.constant 0 : i32
    return %c0_i32, %c0_i32_0 : i32, i32
  }
  func.func @transform_7(%arg0: i32) -> (i32, i32) {
    %c0_i32 = arith.constant 0 : i32
    %c0_i32_0 = arith.constant 0 : i32
    return %arg0, %c0_i32 : i32, i32
  }
  func.func @transform_8(%arg0: i32) -> (i32, i32) {
    %c0_i32 = arith.constant 0 : i32
    %c0_i32_0 = arith.constant 0 : i32
    return %arg0, %c0_i32 : i32, i32
  }
}

module attributes {stable_mosaic.version = 11 : i64} {
  func.func @head_kernel(%arg0: memref<16x128xf32, #tpu.memory_space<vmem>>, %arg1: memref<128x128xf32, #tpu.memory_space<vmem>>, %arg2: memref<1x128xf32, #tpu.memory_space<vmem>>, %arg3: memref<1x128xf32, #tpu.memory_space<vmem>>, %arg4: memref<1x128xf32, #tpu.memory_space<vmem>>, %arg5: memref<128x128xf32, #tpu.memory_space<vmem>>, %arg6: memref<1x128xf32, #tpu.memory_space<vmem>>, %arg7: memref<128x128xf32, #tpu.memory_space<vmem>>, %arg8: memref<1x128xf32, #tpu.memory_space<vmem>>, %arg9: memref<1x128xf32, #tpu.memory_space<vmem>>, %arg10: memref<16x16xf32, #tpu.memory_space<vmem>>) attributes {dimension_semantics = [], scalar_prefetch = 0 : i64, scratch_operands = 0 : i64, tpu.core_type = #tpu.core_type<tc>} {
    %c0 = arith.constant 0 : index
    %c0_0 = arith.constant 0 : index
    %0 = vector.load %arg0[%c0, %c0_0] : memref<16x128xf32, #tpu.memory_space<vmem>>, vector<16x128xf32>
    %c0_1 = arith.constant 0 : index
    %c0_2 = arith.constant 0 : index
    %1 = vector.load %arg1[%c0_1, %c0_2] : memref<128x128xf32, #tpu.memory_space<vmem>>, vector<128x128xf32>
    %cst = arith.constant dense<0.000000e+00> : vector<16x128xf32>
    %2 = tpu.matmul %0, %1, %cst {dimension_numbers = #tpu.dot_dimension_numbers<[1], [0], [0], [1], [0, 0, 1, 1], [], []>} : vector<16x128xf32>, vector<128x128xf32>, vector<16x128xf32> -> vector<16x128xf32>
    %c0_3 = arith.constant 0 : index
    %c0_4 = arith.constant 0 : index
    %3 = vector.load %arg2[%c0_3, %c0_4] : memref<1x128xf32, #tpu.memory_space<vmem>>, vector<1x128xf32>
    %4 = vector.broadcast %3 : vector<1x128xf32> to vector<16x128xf32>
    %5 = arith.addf %2, %4 : vector<16x128xf32>
    %cst_5 = arith.constant 0.000000e+00 : f32
    %6 = vector.broadcast %cst_5 : f32 to vector<16x128xf32>
    %7 = arith.maximumf %5, %6 : vector<16x128xf32>
    %cst_6 = arith.constant dense<0.000000e+00> : vector<128xf32>
    %8 = vector.multi_reduction <add>, %7, %cst_6 [0] : vector<16x128xf32> to vector<128xf32>
    %9 = vector.shape_cast %8 : vector<128xf32> to vector<1x128xf32>
    %cst_7 = arith.constant 1.600000e+01 : f32
    %10 = vector.broadcast %cst_7 : f32 to vector<1x128xf32>
    %11 = arith.divf %9, %10 : vector<1x128xf32>
    %12 = vector.broadcast %11 : vector<1x128xf32> to vector<16x128xf32>
    %13 = arith.subf %7, %12 : vector<16x128xf32>
    %14 = arith.mulf %13, %13 : vector<16x128xf32>
    %cst_8 = arith.constant dense<0.000000e+00> : vector<128xf32>
    %15 = vector.multi_reduction <add>, %14, %cst_8 [0] : vector<16x128xf32> to vector<128xf32>
    %16 = vector.shape_cast %15 : vector<128xf32> to vector<1x128xf32>
    %cst_9 = arith.constant 1.600000e+01 : f32
    %17 = vector.broadcast %cst_9 : f32 to vector<1x128xf32>
    %18 = arith.divf %16, %17 : vector<1x128xf32>
    %19 = vector.broadcast %11 : vector<1x128xf32> to vector<16x128xf32>
    %20 = arith.subf %7, %19 : vector<16x128xf32>
    %cst_10 = arith.constant 9.99999974E-6 : f32
    %21 = vector.broadcast %cst_10 : f32 to vector<1x128xf32>
    %22 = arith.addf %18, %21 : vector<1x128xf32>
    %23 = math.rsqrt %22 : vector<1x128xf32>
    %24 = vector.broadcast %23 : vector<1x128xf32> to vector<16x128xf32>
    %25 = arith.mulf %20, %24 : vector<16x128xf32>
    %c0_11 = arith.constant 0 : index
    %c0_12 = arith.constant 0 : index
    %26 = vector.load %arg3[%c0_11, %c0_12] : memref<1x128xf32, #tpu.memory_space<vmem>>, vector<1x128xf32>
    %27 = vector.broadcast %26 : vector<1x128xf32> to vector<16x128xf32>
    %28 = arith.mulf %25, %27 : vector<16x128xf32>
    %c0_13 = arith.constant 0 : index
    %c0_14 = arith.constant 0 : index
    %29 = vector.load %arg4[%c0_13, %c0_14] : memref<1x128xf32, #tpu.memory_space<vmem>>, vector<1x128xf32>
    %30 = vector.broadcast %29 : vector<1x128xf32> to vector<16x128xf32>
    %31 = arith.addf %28, %30 : vector<16x128xf32>
    %c0_15 = arith.constant 0 : index
    %c0_16 = arith.constant 0 : index
    %32 = vector.load %arg5[%c0_15, %c0_16] : memref<128x128xf32, #tpu.memory_space<vmem>>, vector<128x128xf32>
    %cst_17 = arith.constant dense<0.000000e+00> : vector<16x128xf32>
    %33 = tpu.matmul %31, %32, %cst_17 {dimension_numbers = #tpu.dot_dimension_numbers<[1], [0], [0], [1], [0, 0, 1, 1], [], []>} : vector<16x128xf32>, vector<128x128xf32>, vector<16x128xf32> -> vector<16x128xf32>
    %c0_18 = arith.constant 0 : index
    %c0_19 = arith.constant 0 : index
    %34 = vector.load %arg6[%c0_18, %c0_19] : memref<1x128xf32, #tpu.memory_space<vmem>>, vector<1x128xf32>
    %35 = vector.broadcast %34 : vector<1x128xf32> to vector<16x128xf32>
    %36 = arith.addf %33, %35 : vector<16x128xf32>
    %cst_20 = arith.constant 0.000000e+00 : f32
    %37 = vector.broadcast %cst_20 : f32 to vector<16x128xf32>
    %38 = arith.maximumf %36, %37 : vector<16x128xf32>
    %c0_21 = arith.constant 0 : index
    %c0_22 = arith.constant 0 : index
    %39 = vector.load %arg7[%c0_21, %c0_22] : memref<128x128xf32, #tpu.memory_space<vmem>>, vector<128x1xf32>
    %cst_23 = arith.constant dense<0.000000e+00> : vector<16x1xf32>
    %40 = tpu.matmul %38, %39, %cst_23 {dimension_numbers = #tpu.dot_dimension_numbers<[1], [0], [0], [1], [0, 0, 1, 1], [], []>} : vector<16x128xf32>, vector<128x1xf32>, vector<16x1xf32> -> vector<16x1xf32>
    %c0_24 = arith.constant 0 : index
    %c0_25 = arith.constant 0 : index
    %41 = vector.load %arg9[%c0_24, %c0_25] : memref<1x128xf32, #tpu.memory_space<vmem>>, vector<1x1xf32>
    %42 = vector.broadcast %41 : vector<1x1xf32> to vector<16x1xf32>
    %43 = arith.addf %40, %42 : vector<16x1xf32>
    %c0_26 = arith.constant 0 : index
    %c0_27 = arith.constant 0 : index
    %44 = vector.load %arg8[%c0_26, %c0_27] : memref<1x128xf32, #tpu.memory_space<vmem>>, vector<1x128xf32>
    %cst_28 = arith.constant dense<0.000000e+00> : vector<1x16xf32>
    %45 = tpu.matmul %44, %38, %cst_28 {dimension_numbers = #tpu.dot_dimension_numbers<[1], [1], [0], [0], [0, 0, 1, 0], [], []>} : vector<1x128xf32>, vector<16x128xf32>, vector<1x16xf32> -> vector<1x16xf32>
    %c0_29 = arith.constant 0 : index
    %c1 = arith.constant 1 : index
    %46 = vector.load %arg9[%c0_29, %c1] : memref<1x128xf32, #tpu.memory_space<vmem>>, vector<1x1xf32>
    %47 = vector.broadcast %46 : vector<1x1xf32> to vector<1x16xf32>
    %48 = arith.addf %45, %47 : vector<1x16xf32>
    %49 = vector.broadcast %43 : vector<16x1xf32> to vector<16x16xf32>
    %50 = vector.broadcast %48 : vector<1x16xf32> to vector<16x16xf32>
    %51 = arith.mulf %49, %50 : vector<16x16xf32>
    %c0_30 = arith.constant 0 : index
    %c0_31 = arith.constant 0 : index
    %52 = vector.load %arg10[%c0_30, %c0_31] : memref<16x16xf32, #tpu.memory_space<vmem>>, vector<16x16xf32>
    tpu.vector_store %arg10[%c0_30, %c0_31], %51 {strides = array<i32>} : memref<16x16xf32, #tpu.memory_space<vmem>>, vector<16x16xf32>,
    return
  }
}

</mosaic_0001>

<llo_original>
// kernel: encoder_forward.9
$region0: #{encoder_forward.9}
  #allocation0 [shape = 'u32[]', space=smem, size = 0x4, offset = 0x4, fixed_abs, tag = 'smem constant byte address 0x4 - core index']
  #allocation1 [shape = 'u32[72,128]{1,0:T(1,128)}', space=vmem, size = 0x9000, scoped, tag = 'internal scratch']
  %s0 = inlined_call_operand.vmem [shape: f32[16,128], index: 0, kind: input, shape index: {}]
  %s1 = inlined_call_operand.vmem [shape: f32[16,128], index: 1, kind: input, shape index: {}]
  %s2 = inlined_call_operand.vmem [shape: f32[128,128], index: 2, kind: input, shape index: {}]
  %s3 = inlined_call_operand.vmem [shape: f32[128,128], index: 3, kind: input, shape index: {}]
  %s4 = inlined_call_operand.vmem [shape: f32[128,128], index: 4, kind: input, shape index: {}]
  %s5 = inlined_call_operand.vmem [shape: f32[16,128], index: 5, kind: output, shape index: {0}]
  %s6 = inlined_call_operand.vmem [shape: f32[16,128], index: 6, kind: output, shape index: {1}]
  %s7 = inlined_call_operand.vmem [shape: f32[16,128], index: 7, kind: output, shape index: {2}]
  %8 = xla_tuple %s5, %s6, %s7
  %s9 = sld [smem:[#allocation0]]
  $region46: #{encoder_forward.9} parent=0
    _
  %s11 = ssub.s32 1, %s9
  %s12 = scalar_select 0, %s11, %s9
  // Predicated region
  $region2: #{encoder_forward.9} parent=0 // pred_check
    _
  $region3: #{encoder_forward.9} parent=0 // pred_check_branch
    %14 = sbr.rel (0) target = $region5
  $region4: #{encoder_forward.9} parent=0 // pred_region
    _
  $region5: #{encoder_forward.9} parent=0 // pred_fallthru
    _
  // Predicated region
  $region6: #{encoder_forward.9} parent=0 // pred_check
    _
  $region7: #{encoder_forward.9} parent=0 // pred_check_branch
    %16 = sbr.rel (0) target = $region9
  $region8: #{encoder_forward.9} parent=0 // pred_region
    _
  $region9: #{encoder_forward.9} parent=0 // pred_fallthru
    _
  // Predicated region
  $region10: #{encoder_forward.9} parent=0 // pred_check
    _
  $region11: #{encoder_forward.9} parent=0 // pred_check_branch
    %18 = sbr.rel (0) target = $region13
  $region12: #{encoder_forward.9} parent=0 // pred_region
    _
  $region13: #{encoder_forward.9} parent=0 // pred_fallthru
    _
  // Predicated region
  $region14: #{encoder_forward.9} parent=0 // pred_check
    _
  $region15: #{encoder_forward.9} parent=0 // pred_check_branch
    %20 = sbr.rel (0) target = $region17
  $region16: #{encoder_forward.9} parent=0 // pred_region
    _
  $region17: #{encoder_forward.9} parent=0 // pred_fallthru
    _
  // Predicated region
  $region18: #{encoder_forward.9} parent=0 // pred_check
    _
  $region19: #{encoder_forward.9} parent=0 // pred_check_branch
    %22 = sbr.rel (0) target = $region21
  $region20: #{encoder_forward.9} parent=0 // pred_region
    _
  $region21: #{encoder_forward.9} parent=0 // pred_fallthru
    _
  %v23 = vld [vmem:[%s0] sm:$0xff]
  %v24 = vld [vmem:[%s0 + $0x8] sm:$0xff]
  %v25 = vld [vmem:[%s2] sm:$0xff]
  %v26 = vld [vmem:[%s2 + $0x8] sm:$0xff]
  %v27 = vld [vmem:[%s2 + $0x10] sm:$0xff]
  %v28 = vld [vmem:[%s2 + $0x18] sm:$0xff]
  %v29 = vld [vmem:[%s2 + $0x20] sm:$0xff]
  %v30 = vld [vmem:[%s2 + $0x28] sm:$0xff]
  %v31 = vld [vmem:[%s2 + $0x30] sm:$0xff]
  %v32 = vld [vmem:[%s2 + $0x38] sm:$0xff]
  %v33 = vld [vmem:[%s2 + $0x40] sm:$0xff]
  %v34 = vld [vmem:[%s2 + $0x48] sm:$0xff]
  %v35 = vld [vmem:[%s2 + $0x50] sm:$0xff]
  %v36 = vld [vmem:[%s2 + $0x58] sm:$0xff]
  %v37 = vld [vmem:[%s2 + $0x60] sm:$0xff]
  %v38 = vld [vmem:[%s2 + $0x68] sm:$0xff]
  %v39 = vld [vmem:[%s2 + $0x70] sm:$0xff]
  %v40 = vld [vmem:[%s2 + $0x78] sm:$0xff]
  %41 = vmatpush.msra.mxu0 %v40
  %42 = vmatpush.msra.mxu0 %v39
  %43 = vmatpush.msra.mxu0 %v38
  %44 = vmatpush.msra.mxu0 %v37
  %45 = vmatpush.msra.mxu0 %v36
  %46 = vmatpush.msra.mxu0 %v35
  %47 = vmatpush.msra.mxu0 %v34
  %48 = vmatpush.msra.mxu0 %v33
  %49 = vmatpush.msra.mxu0 %v32
  %50 = vmatpush.msra.mxu0 %v31
  %51 = vmatpush.msra.mxu0 %v30
  %52 = vmatpush.msra.mxu0 %v29
  %53 = vmatpush.msra.mxu0 %v28
  %54 = vmatpush.msra.mxu0 %v27
  %55 = vmatpush.msra.mxu0 %v26
  %56 = vmatpush.msra.mxu0 %v25
  %57 = vmatmul.f32.gmra.mxu0 %v23
  %v58 = vpop.f32.mrf.mxu0
  %v59 = vadd.f32 0.0, %v58
  %60 = vmatmul.f32.gmra.mxu0 %v24
  %v61 = vpop.f32.mrf.mxu0
  %v62 = vadd.f32 0.0, %v61
  %63 = vdwg.mxu0
  %64 = vst [vmem:[%s5] sm:$0xff] %v59
  %65 = vst [vmem:[%s5 + $0x8] sm:$0xff] %v62
  %v66 = vld [vmem:[%s1] sm:$0xff]
  %v67 = vld [vmem:[%s1 + $0x8] sm:$0xff]
  %v68 = vld [vmem:[%s3] sm:$0xff]
  %v69 = vld [vmem:[%s3 + $0x8] sm:$0xff]
  %v70 = vld [vmem:[%s3 + $0x10] sm:$0xff]
  %v71 = vld [vmem:[%s3 + $0x18] sm:$0xff]
  %v72 = vld [vmem:[%s3 + $0x20] sm:$0xff]
  %v73 = vld [vmem:[%s3 + $0x28] sm:$0xff]
  %v74 = vld [vmem:[%s3 + $0x30] sm:$0xff]
  %v75 = vld [vmem:[%s3 + $0x38] sm:$0xff]
  %v76 = vld [vmem:[%s3 + $0x40] sm:$0xff]
  %v77 = vld [vmem:[%s3 + $0x48] sm:$0xff]
  %v78 = vld [vmem:[%s3 + $0x50] sm:$0xff]
  %v79 = vld [vmem:[%s3 + $0x58] sm:$0xff]
  %v80 = vld [vmem:[%s3 + $0x60] sm:$0xff]
  %v81 = vld [vmem:[%s3 + $0x68] sm:$0xff]
  %v82 = vld [vmem:[%s3 + $0x70] sm:$0xff]
  %v83 = vld [vmem:[%s3 + $0x78] sm:$0xff]
  %84 = vmatpush.msra.mxu0 %v83
  %85 = vmatpush.msra.mxu0 %v82
  %86 = vmatpush.msra.mxu0 %v81
  %87 = vmatpush.msra.mxu0 %v80
  %88 = vmatpush.msra.mxu0 %v79
  %89 = vmatpush.msra.mxu0 %v78
  %90 = vmatpush.msra.mxu0 %v77
  %91 = vmatpush.msra.mxu0 %v76
  %92 = vmatpush.msra.mxu0 %v75
  %93 = vmatpush.msra.mxu0 %v74
  %94 = vmatpush.msra.mxu0 %v73
  %95 = vmatpush.msra.mxu0 %v72
  %96 = vmatpush.msra.mxu0 %v71
  %97 = vmatpush.msra.mxu0 %v70
  %98 = vmatpush.msra.mxu0 %v69
  %99 = vmatpush.msra.mxu0 %v68
  %100 = vmatmul.f32.gmra.mxu0 %v66
  %v101 = vpop.f32.mrf.mxu0
  %v102 = vadd.f32 0.0, %v101
  %103 = vmatmul.f32.gmra.mxu0 %v67
  %v104 = vpop.f32.mrf.mxu0
  %v105 = vadd.f32 0.0, %v104
  %106 = vdwg.mxu0
  %107 = vst [vmem:[%s6] sm:$0xff] %v102
  %108 = vst [vmem:[%s6 + $0x8] sm:$0xff] %v105
  %v109 = vld [vmem:[%s1] sm:$0xff]
  %v110 = vld [vmem:[%s1 + $0x8] sm:$0xff]
  %v111 = vld [vmem:[%s4] sm:$0xff]
  %v112 = vld [vmem:[%s4 + $0x8] sm:$0xff]
  %v113 = vld [vmem:[%s4 + $0x10] sm:$0xff]
  %v114 = vld [vmem:[%s4 + $0x18] sm:$0xff]
  %v115 = vld [vmem:[%s4 + $0x20] sm:$0xff]
  %v116 = vld [vmem:[%s4 + $0x28] sm:$0xff]
  %v117 = vld [vmem:[%s4 + $0x30] sm:$0xff]
  %v118 = vld [vmem:[%s4 + $0x38] sm:$0xff]
  %v119 = vld [vmem:[%s4 + $0x40] sm:$0xff]
  %v120 = vld [vmem:[%s4 + $0x48] sm:$0xff]
  %v121 = vld [vmem:[%s4 + $0x50] sm:$0xff]
  %v122 = vld [vmem:[%s4 + $0x58] sm:$0xff]
  %v123 = vld [vmem:[%s4 + $0x60] sm:$0xff]
  %v124 = vld [vmem:[%s4 + $0x68] sm:$0xff]
  %v125 = vld [vmem:[%s4 + $0x70] sm:$0xff]
  %v126 = vld [vmem:[%s4 + $0x78] sm:$0xff]
  %127 = vmatpush.msra.mxu0 %v126
  %128 = vmatpush.msra.mxu0 %v125
  %129 = vmatpush.msra.mxu0 %v124
  %130 = vmatpush.msra.mxu0 %v123
  %131 = vmatpush.msra.mxu0 %v122
  %132 = vmatpush.msra.mxu0 %v121
  %133 = vmatpush.msra.mxu0 %v120
  %134 = vmatpush.msra.mxu0 %v119
  %135 = vmatpush.msra.mxu0 %v118
  %136 = vmatpush.msra.mxu0 %v117
  %137 = vmatpush.msra.mxu0 %v116
  %138 = vmatpush.msra.mxu0 %v115
  %139 = vmatpush.msra.mxu0 %v114
  %140 = vmatpush.msra.mxu0 %v113
  %141 = vmatpush.msra.mxu0 %v112
  %142 = vmatpush.msra.mxu0 %v111
  %143 = vmatmul.f32.gmra.mxu0 %v109
  %v144 = vpop.f32.mrf.mxu0
  %v145 = vadd.f32 0.0, %v144
  %146 = vmatmul.f32.gmra.mxu0 %v110
  %v147 = vpop.f32.mrf.mxu0
  %v148 = vadd.f32 0.0, %v147
  %149 = vdwg.mxu0
  %150 = vst [vmem:[%s7] sm:$0xff] %v145
  %151 = vst [vmem:[%s7 + $0x8] sm:$0xff] %v148
  // Predicated region
  $region22: #{encoder_forward.9} parent=0 // pred_check
    _
  $region23: #{encoder_forward.9} parent=0 // pred_check_branch
    %153 = sbr.rel (0) target = $region25
  $region24: #{encoder_forward.9} parent=0 // pred_region
    _
  $region25: #{encoder_forward.9} parent=0 // pred_fallthru
    _
  // Predicated region
  $region26: #{encoder_forward.9} parent=0 // pred_check
    _
  $region27: #{encoder_forward.9} parent=0 // pred_check_branch
    %155 = sbr.rel (0) target = $region29
  $region28: #{encoder_forward.9} parent=0 // pred_region
    _
  $region29: #{encoder_forward.9} parent=0 // pred_fallthru
    _
  // Predicated region
  $region30: #{encoder_forward.9} parent=0 // pred_check
    _
  $region31: #{encoder_forward.9} parent=0 // pred_check_branch
    %157 = sbr.rel (0) target = $region33
  $region32: #{encoder_forward.9} parent=0 // pred_region
    _
  $region33: #{encoder_forward.9} parent=0 // pred_fallthru
    _
  // Predicated region
  $region34: #{encoder_forward.9} parent=0 // pred_check
    _
  $region35: #{encoder_forward.9} parent=0 // pred_check_branch
    %159 = sbr.rel (0) target = $region37
  $region36: #{encoder_forward.9} parent=0 // pred_region
    _
  $region37: #{encoder_forward.9} parent=0 // pred_fallthru
    _
  // Predicated region
  $region38: #{encoder_forward.9} parent=0 // pred_check
    _
  $region39: #{encoder_forward.9} parent=0 // pred_check_branch
    %161 = sbr.rel (0) target = $region41
  $region40: #{encoder_forward.9} parent=0 // pred_region
    _
  $region41: #{encoder_forward.9} parent=0 // pred_fallthru
    _
  // Predicated region
  $region42: #{encoder_forward.9} parent=0 // pred_check
    _
  $region43: #{encoder_forward.9} parent=0 // pred_check_branch
    %163 = sbr.rel (0) target = $region45
  $region44: #{encoder_forward.9} parent=0 // pred_region
    _
  $region45: #{encoder_forward.9} parent=0 // pred_fallthru
    _

// kernel: encoder_forward.7
$region0: #{encoder_forward.7}
  #allocation0 [shape = 'u32[]', space=smem, size = 0x4, offset = 0x4, fixed_abs, tag = 'smem constant byte address 0x4 - core index']
  #allocation1 [shape = 'u32[72,128]{1,0:T(1,128)}', space=vmem, size = 0x9000, scoped, tag = 'internal scratch']
  %s0 = inlined_call_operand.vmem [shape: f32[16,128], index: 0, kind: input, shape index: {}]
  %s1 = inlined_call_operand.vmem [shape: f32[16,128], index: 1, kind: input, shape index: {}]
  %s2 = inlined_call_operand.vmem [shape: f32[128,128], index: 2, kind: input, shape index: {}]
  %s3 = inlined_call_operand.hbm [shape: f32[128,128], index: 3, kind: input, shape index: {}]
  %s4 = inlined_call_operand.hbm [shape: f32[128,128], index: 4, kind: input, shape index: {}]
  %s5 = inlined_call_operand.vmem [shape: f32[16,128], index: 5, kind: output, shape index: {0}]
  %s6 = inlined_call_operand.vmem [shape: f32[16,128], index: 6, kind: output, shape index: {1}]
  %s7 = inlined_call_operand.vmem [shape: f32[16,128], index: 7, kind: output, shape index: {2}]
  %8 = xla_tuple %s5, %s6, %s7
  %s9 = sld [smem:[#allocation0]]
  $region54: #{encoder_forward.7} parent=0
    _
  %s11 = ssub.s32 1, %s9
  %s12 = scalar_select 0, %s11, %s9
  $region1: #{encoder_forward.7} parent=0
    #allocation2 [shape = 'u8[65536]{0}', space=vmem, size = 0x10000, scoped, tag = 'input window, operand 3, single buffered']
    #allocation3 [shape = 's32[1]{0}', space=sflag, size = 0x4, scoped, tag = 'scoped memory for encoder_forward.7']
    #allocation4 [shape = 'u8[65536]{0}', space=vmem, size = 0x10000, scoped, tag = 'input window, operand 4, single buffered']
    #allocation5 [shape = 's32[1]{0}', space=sflag, size = 0x4, scoped, tag = 'scoped memory for encoder_forward.7']
    %13 = vsyncpa [#allocation3], 0
    %14 = vsyncpa [#allocation5], 0
    // Predicated region
    $region2: #{encoder_forward.7} parent=1 // pred_check
      _
    $region3: #{encoder_forward.7} parent=1 // pred_check_branch
      %16 = sbr.rel (0) target = $region5
    $region4: #{encoder_forward.7} parent=1 // pred_region
      _
    $region5: #{encoder_forward.7} parent=1 // pred_fallthru
      _
    // Predicated region
    $region6: #{encoder_forward.7} parent=1 // pred_check
      _
    $region7: #{encoder_forward.7} parent=1 // pred_check_branch
      %18 = sbr.rel (0) target = $region9
    $region8: #{encoder_forward.7} parent=1 // pred_region
      _
    $region9: #{encoder_forward.7} parent=1 // pred_fallthru
      _
    // Predicated region
    $region10: #{encoder_forward.7} parent=1 // pred_check
      _
    $region11: #{encoder_forward.7} parent=1 // pred_check_branch
      %20 = sbr.rel (0) target = $region13
    $region12: #{encoder_forward.7} parent=1 // pred_region
      _
    $region13: #{encoder_forward.7} parent=1 // pred_fallthru
      _
    // Predicated region
    $region14: #{encoder_forward.7} parent=1 // pred_check
      _
    $region15: #{encoder_forward.7} parent=1 // pred_check_branch
      %22 = sbr.rel (0) target = $region17
    $region16: #{encoder_forward.7} parent=1 // pred_region
      %24 = vsyncadd [#allocation3], 0
      %s25 = sshll.u32 %s3, 4
      %s26 = int_to_ptr.hbm [resolvable:$true] %s25
      %s27 = sshll.u32 [#allocation2], 4
      %s28 = int_to_ptr.vmem [resolvable:$true] %s27
      %33 = dma.hbm_to_vmem [thread:$0]  %s26, 2048, %s28, [#allocation3], 128, 128, 8
    $region17: #{encoder_forward.7} parent=1 // pred_fallthru
      _
    // Predicated region
    $region18: #{encoder_forward.7} parent=1 // pred_check
      _
    $region19: #{encoder_forward.7} parent=1 // pred_check_branch
      %35 = sbr.rel (0) target = $region21
    $region20: #{encoder_forward.7} parent=1 // pred_region
      %37 = vsyncadd [#allocation5], 0
      %s38 = sshll.u32 %s4, 4
      %s39 = int_to_ptr.hbm [resolvable:$true] %s38
      %s40 = sshll.u32 [#allocation4], 4
      %s41 = int_to_ptr.vmem [resolvable:$true] %s40
      %46 = dma.hbm_to_vmem [thread:$0]  %s39, 2048, %s41, [#allocation5], 128, 128, 8
    $region21: #{encoder_forward.7} parent=1 // pred_fallthru
      _
    // Predicated region
    $region22: #{encoder_forward.7} parent=1 // pred_check
      _
    $region23: #{encoder_forward.7} parent=1 // pred_check_branch
      %48 = sbr.rel (0) target = $region25
    $region24: #{encoder_forward.7} parent=1 // pred_region
      %50 = dma.done [#allocation3], 2048
    $region25: #{encoder_forward.7} parent=1 // pred_fallthru
      _
    // Predicated region
    $region26: #{encoder_forward.7} parent=1 // pred_check
      _
    $region27: #{encoder_forward.7} parent=1 // pred_check_branch
      %52 = sbr.rel (0) target = $region29
    $region28: #{encoder_forward.7} parent=1 // pred_region
      %54 = dma.done [#allocation5], 2048
    $region29: #{encoder_forward.7} parent=1 // pred_fallthru
      _
    %v55 = vld [vmem:[%s0] sm:$0xff]
    %v56 = vld [vmem:[%s0 + $0x8] sm:$0xff]
    %v57 = vld [vmem:[%s2] sm:$0xff]
    %v58 = vld [vmem:[%s2 + $0x8] sm:$0xff]
    %v59 = vld [vmem:[%s2 + $0x10] sm:$0xff]
    %v60 = vld [vmem:[%s2 + $0x18] sm:$0xff]
    %v61 = vld [vmem:[%s2 + $0x20] sm:$0xff]
    %v62 = vld [vmem:[%s2 + $0x28] sm:$0xff]
    %v63 = vld [vmem:[%s2 + $0x30] sm:$0xff]
    %v64 = vld [vmem:[%s2 + $0x38] sm:$0xff]
    %v65 = vld [vmem:[%s2 + $0x40] sm:$0xff]
    %v66 = vld [vmem:[%s2 + $0x48] sm:$0xff]
    %v67 = vld [vmem:[%s2 + $0x50] sm:$0xff]
    %v68 = vld [vmem:[%s2 + $0x58] sm:$0xff]
    %v69 = vld [vmem:[%s2 + $0x60] sm:$0xff]
    %v70 = vld [vmem:[%s2 + $0x68] sm:$0xff]
    %v71 = vld [vmem:[%s2 + $0x70] sm:$0xff]
    %v72 = vld [vmem:[%s2 + $0x78] sm:$0xff]
    %73 = vmatpush.msra.mxu0 %v72
    %74 = vmatpush.msra.mxu0 %v71
    %75 = vmatpush.msra.mxu0 %v70
    %76 = vmatpush.msra.mxu0 %v69
    %77 = vmatpush.msra.mxu0 %v68
    %78 = vmatpush.msra.mxu0 %v67
    %79 = vmatpush.msra.mxu0 %v66
    %80 = vmatpush.msra.mxu0 %v65
    %81 = vmatpush.msra.mxu0 %v64
    %82 = vmatpush.msra.mxu0 %v63
    %83 = vmatpush.msra.mxu0 %v62
    %84 = vmatpush.msra.mxu0 %v61
    %85 = vmatpush.msra.mxu0 %v60
    %86 = vmatpush.msra.mxu0 %v59
    %87 = vmatpush.msra.mxu0 %v58
    %88 = vmatpush.msra.mxu0 %v57
    %89 = vmatmul.f32.gmra.mxu0 %v55
    %v90 = vpop.f32.mrf.mxu0
    %v91 = vadd.f32 0.0, %v90
    %92 = vmatmul.f32.gmra.mxu0 %v56
    %v93 = vpop.f32.mrf.mxu0
    %v94 = vadd.f32 0.0, %v93
    %95 = vdwg.mxu0
    %96 = vst [vmem:[%s5] sm:$0xff] %v91
    %97 = vst [vmem:[%s5 + $0x8] sm:$0xff] %v94
    %v98 = vld [vmem:[%s1] sm:$0xff]
    %v99 = vld [vmem:[%s1 + $0x8] sm:$0xff]
    %v100 = vld [vmem:[#allocation2] sm:$0xff]
    %v101 = vld [vmem:[#allocation2 + $0x8] sm:$0xff]
    %v102 = vld [vmem:[#allocation2 + $0x10] sm:$0xff]
    %v103 = vld [vmem:[#allocation2 + $0x18] sm:$0xff]
    %v104 = vld [vmem:[#allocation2 + $0x20] sm:$0xff]
    %v105 = vld [vmem:[#allocation2 + $0x28] sm:$0xff]
    %v106 = vld [vmem:[#allocation2 + $0x30] sm:$0xff]
    %v107 = vld [vmem:[#allocation2 + $0x38] sm:$0xff]
    %v108 = vld [vmem:[#allocation2 + $0x40] sm:$0xff]
    %v109 = vld [vmem:[#allocation2 + $0x48] sm:$0xff]
    %v110 = vld [vmem:[#allocation2 + $0x50] sm:$0xff]
    %v111 = vld [vmem:[#allocation2 + $0x58] sm:$0xff]
    %v112 = vld [vmem:[#allocation2 + $0x60] sm:$0xff]
    %v113 = vld [vmem:[#allocation2 + $0x68] sm:$0xff]
    %v114 = vld [vmem:[#allocation2 + $0x70] sm:$0xff]
    %v115 = vld [vmem:[#allocation2 + $0x78] sm:$0xff]
    %116 = vmatpush.msra.mxu0 %v115
    %117 = vmatpush.msra.mxu0 %v114
    %118 = vmatpush.msra.mxu0 %v113
    %119 = vmatpush.msra.mxu0 %v112
    %120 = vmatpush.msra.mxu0 %v111
    %121 = vmatpush.msra.mxu0 %v110
    %122 = vmatpush.msra.mxu0 %v109
    %123 = vmatpush.msra.mxu0 %v108
    %124 = vmatpush.msra.mxu0 %v107
    %125 = vmatpush.msra.mxu0 %v106
    %126 = vmatpush.msra.mxu0 %v105
    %127 = vmatpush.msra.mxu0 %v104
    %128 = vmatpush.msra.mxu0 %v103
    %129 = vmatpush.msra.mxu0 %v102
    %130 = vmatpush.msra.mxu0 %v101
    %131 = vmatpush.msra.mxu0 %v100
    %132 = vmatmul.f32.gmra.mxu0 %v98
    %v133 = vpop.f32.mrf.mxu0
    %v134 = vadd.f32 0.0, %v133
    %135 = vmatmul.f32.gmra.mxu0 %v99
    %v136 = vpop.f32.mrf.mxu0
    %v137 = vadd.f32 0.0, %v136
    %138 = vdwg.mxu0
    %139 = vst [vmem:[%s6] sm:$0xff] %v134
    %140 = vst [vmem:[%s6 + $0x8] sm:$0xff] %v137
    %v141 = vld [vmem:[%s1] sm:$0xff]
    %v142 = vld [vmem:[%s1 + $0x8] sm:$0xff]
    %v143 = vld [vmem:[#allocation4] sm:$0xff]
    %v144 = vld [vmem:[#allocation4 + $0x8] sm:$0xff]
    %v145 = vld [vmem:[#allocation4 + $0x10] sm:$0xff]
    %v146 = vld [vmem:[#allocation4 + $0x18] sm:$0xff]
    %v147 = vld [vmem:[#allocation4 + $0x20] sm:$0xff]
    %v148 = vld [vmem:[#allocation4 + $0x28] sm:$0xff]
    %v149 = vld [vmem:[#allocation4 + $0x30] sm:$0xff]
    %v150 = vld [vmem:[#allocation4 + $0x38] sm:$0xff]
    %v151 = vld [vmem:[#allocation4 + $0x40] sm:$0xff]
    %v152 = vld [vmem:[#allocation4 + $0x48] sm:$0xff]
    %v153 = vld [vmem:[#allocation4 + $0x50] sm:$0xff]
    %v154 = vld [vmem:[#allocation4 + $0x58] sm:$0xff]
    %v155 = vld [vmem:[#allocation4 + $0x60] sm:$0xff]
    %v156 = vld [vmem:[#allocation4 + $0x68] sm:$0xff]
    %v157 = vld [vmem:[#allocation4 + $0x70] sm:$0xff]
    %v158 = vld [vmem:[#allocation4 + $0x78] sm:$0xff]
    %159 = vmatpush.msra.mxu0 %v158
    %160 = vmatpush.msra.mxu0 %v157
    %161 = vmatpush.msra.mxu0 %v156
    %162 = vmatpush.msra.mxu0 %v155
    %163 = vmatpush.msra.mxu0 %v154
    %164 = vmatpush.msra.mxu0 %v153
    %165 = vmatpush.msra.mxu0 %v152
    %166 = vmatpush.msra.mxu0 %v151
    %167 = vmatpush.msra.mxu0 %v150
    %168 = vmatpush.msra.mxu0 %v149
    %169 = vmatpush.msra.mxu0 %v148
    %170 = vmatpush.msra.mxu0 %v147
    %171 = vmatpush.msra.mxu0 %v146
    %172 = vmatpush.msra.mxu0 %v145
    %173 = vmatpush.msra.mxu0 %v144
    %174 = vmatpush.msra.mxu0 %v143
    %175 = vmatmul.f32.gmra.mxu0 %v141
    %v176 = vpop.f32.mrf.mxu0
    %v177 = vadd.f32 0.0, %v176
    %178 = vmatmul.f32.gmra.mxu0 %v142
    %v179 = vpop.f32.mrf.mxu0
    %v180 = vadd.f32 0.0, %v179
    %181 = vdwg.mxu0
    %182 = vst [vmem:[%s7] sm:$0xff] %v177
    %183 = vst [vmem:[%s7 + $0x8] sm:$0xff] %v180
    // Predicated region
    $region30: #{encoder_forward.7} parent=1 // pred_check
      _
    $region31: #{encoder_forward.7} parent=1 // pred_check_branch
      %185 = sbr.rel (0) target = $region33
    $region32: #{encoder_forward.7} parent=1 // pred_region
      _
    $region33: #{encoder_forward.7} parent=1 // pred_fallthru
      _
    // Predicated region
    $region34: #{encoder_forward.7} parent=1 // pred_check
      _
    $region35: #{encoder_forward.7} parent=1 // pred_check_branch
      %187 = sbr.rel (0) target = $region37
    $region36: #{encoder_forward.7} parent=1 // pred_region
      _
    $region37: #{encoder_forward.7} parent=1 // pred_fallthru
      _
    // Predicated region
    $region38: #{encoder_forward.7} parent=1 // pred_check
      _
    $region39: #{encoder_forward.7} parent=1 // pred_check_branch
      %189 = sbr.rel (0) target = $region41
    $region40: #{encoder_forward.7} parent=1 // pred_region
      _
    $region41: #{encoder_forward.7} parent=1 // pred_fallthru
      _
    // Predicated region
    $region42: #{encoder_forward.7} parent=1 // pred_check
      _
    $region43: #{encoder_forward.7} parent=1 // pred_check_branch
      %191 = sbr.rel (0) target = $region45
    $region44: #{encoder_forward.7} parent=1 // pred_region
      _
    $region45: #{encoder_forward.7} parent=1 // pred_fallthru
      _
    // Predicated region
    $region46: #{encoder_forward.7} parent=1 // pred_check
      _
    $region47: #{encoder_forward.7} parent=1 // pred_check_branch
      %193 = sbr.rel (0) target = $region49
    $region48: #{encoder_forward.7} parent=1 // pred_region
      _
    $region49: #{encoder_forward.7} parent=1 // pred_fallthru
      _
    // Predicated region
    $region50: #{encoder_forward.7} parent=1 // pred_check
      _
    $region51: #{encoder_forward.7} parent=1 // pred_check_branch
      %195 = sbr.rel (0) target = $region53
    $region52: #{encoder_forward.7} parent=1 // pred_region
      _
    $region53: #{encoder_forward.7} parent=1 // pred_fallthru
      _
    %196 = vsyncpa [#allocation3], 1
    %197 = vsyncpa [#allocation5], 1

// kernel: encoder_forward.8
$region0: #{encoder_forward.8}
  #allocation0 [shape = 'u32[]', space=smem, size = 0x4, offset = 0x4, fixed_abs, tag = 'smem constant byte address 0x4 - core index']
  #allocation1 [shape = 'u32[72,128]{1,0:T(1,128)}', space=vmem, size = 0x9000, scoped, tag = 'internal scratch']
  %s0 = inlined_call_operand.vmem [shape: f32[16,128], index: 0, kind: input, shape index: {}]
  %s1 = inlined_call_operand.vmem [shape: f32[16,128], index: 1, kind: input, shape index: {}]
  %s2 = inlined_call_operand.vmem [shape: f32[16,128], index: 2, kind: input, shape index: {}]
  %s3 = inlined_call_operand.vmem [shape: f32[16,128], index: 3, kind: input, shape index: {}]
  %s4 = inlined_call_operand.hbm [shape: f32[128,128], index: 4, kind: input, shape index: {}]
  %s5 = inlined_call_operand.vmem [shape: f32[1,128], index: 5, kind: input, shape index: {}]
  %s6 = inlined_call_operand.hbm [shape: f32[128,128], index: 6, kind: input, shape index: {}]
  %s7 = inlined_call_operand.vmem [shape: f32[16,128], index: 7, kind: output, shape index: {0}]
  %s8 = inlined_call_operand.hbm [shape: f32[16,16], index: 8, kind: output, shape index: {1}]
  %9 = xla_tuple %s7, %s8
  %s10 = sld [smem:[#allocation0]]
  $region54: #{encoder_forward.8} parent=0
    _
  %s12 = ssub.s32 1, %s10
  %s13 = scalar_select 0, %s12, %s10
  $region1: #{encoder_forward.8} parent=0
    #allocation2 [shape = 'u8[65536]{0}', space=vmem, size = 0x10000, scoped, tag = 'input window, operand 4, single buffered']
    #allocation3 [shape = 's32[1]{0}', space=sflag, size = 0x4, scoped, tag = 'scoped memory for encoder_forward.8']
    #allocation4 [shape = 's32[1]{0}', space=sflag, size = 0x4, scoped, tag = 'scoped memory for encoder_forward.8']
    #allocation5 [shape = 'u8[65536]{0}', space=vmem, size = 0x10000, scoped, tag = 'input window, operand 6, single buffered']
    #allocation6 [shape = 's32[1]{0}', space=sflag, size = 0x4, scoped, tag = 'scoped memory for encoder_forward.8']
    #allocation7 [shape = 'u8[8192]{0}', space=vmem, size = 0x2000, scoped, tag = 'output window, operand 1, single buffered']
    %14 = vsyncpa [#allocation3], 0
    %15 = vsyncpa [#allocation6], 0
    %16 = vsyncpa [#allocation4], 0
    // Predicated region
    $region2: #{encoder_forward.8} parent=1 // pred_check
      _
    $region3: #{encoder_forward.8} parent=1 // pred_check_branch
      %18 = sbr.rel (0) target = $region5
    $region4: #{encoder_forward.8} parent=1 // pred_region
      _
    $region5: #{encoder_forward.8} parent=1 // pred_fallthru
      _
    // Predicated region
    $region6: #{encoder_forward.8} parent=1 // pred_check
      _
    $region7: #{encoder_forward.8} parent=1 // pred_check_branch
      %20 = sbr.rel (0) target = $region9
    $region8: #{encoder_forward.8} parent=1 // pred_region
      _
    $region9: #{encoder_forward.8} parent=1 // pred_fallthru
      _
    // Predicated region
    $region10: #{encoder_forward.8} parent=1 // pred_check
      _
    $region11: #{encoder_forward.8} parent=1 // pred_check_branch
      %22 = sbr.rel (0) target = $region13
    $region12: #{encoder_forward.8} parent=1 // pred_region
      _
    $region13: #{encoder_forward.8} parent=1 // pred_fallthru
      _
    // Predicated region
    $region14: #{encoder_forward.8} parent=1 // pred_check
      _
    $region15: #{encoder_forward.8} parent=1 // pred_check_branch
      %24 = sbr.rel (0) target = $region17
    $region16: #{encoder_forward.8} parent=1 // pred_region
      _
    $region17: #{encoder_forward.8} parent=1 // pred_fallthru
      _
    // Predicated region
    $region18: #{encoder_forward.8} parent=1 // pred_check
      _
    $region19: #{encoder_forward.8} parent=1 // pred_check_branch
      %26 = sbr.rel (0) target = $region21
    $region20: #{encoder_forward.8} parent=1 // pred_region
      %28 = vsyncadd [#allocation3], 0
      %s29 = sshll.u32 %s4, 4
      %s30 = int_to_ptr.hbm [resolvable:$true] %s29
      %s31 = sshll.u32 [#allocation2], 4
      %s32 = int_to_ptr.vmem [resolvable:$true] %s31
      %37 = dma.hbm_to_vmem [thread:$0]  %s30, 2048, %s32, [#allocation3], 128, 128, 8
    $region21: #{encoder_forward.8} parent=1 // pred_fallthru
      _
    // Predicated region
    $region22: #{encoder_forward.8} parent=1 // pred_check
      _
    $region23: #{encoder_forward.8} parent=1 // pred_check_branch
      %39 = sbr.rel (0) target = $region25
    $region24: #{encoder_forward.8} parent=1 // pred_region
      _
    $region25: #{encoder_forward.8} parent=1 // pred_fallthru
      _
    // Predicated region
    $region26: #{encoder_forward.8} parent=1 // pred_check
      _
    $region27: #{encoder_forward.8} parent=1 // pred_check_branch
      %41 = sbr.rel (0) target = $region29
    $region28: #{encoder_forward.8} parent=1 // pred_region
      %43 = vsyncadd [#allocation6], 0
      %s44 = sshll.u32 %s6, 4
      %s45 = int_to_ptr.hbm [resolvable:$true] %s44
      %s46 = sshll.u32 [#allocation5], 4
      %s47 = int_to_ptr.vmem [resolvable:$true] %s46
      %52 = dma.hbm_to_vmem [thread:$0]  %s45, 2048, %s47, [#allocation6], 128, 128, 8
    $region29: #{encoder_forward.8} parent=1 // pred_fallthru
      _
    // Predicated region
    $region30: #{encoder_forward.8} parent=1 // pred_check
      _
    $region31: #{encoder_forward.8} parent=1 // pred_check_branch
      %54 = sbr.rel (0) target = $region33
    $region32: #{encoder_forward.8} parent=1 // pred_region
      %56 = dma.done [#allocation3], 2048
    $region33: #{encoder_forward.8} parent=1 // pred_fallthru
      _
    // Predicated region
    $region34: #{encoder_forward.8} parent=1 // pred_check
      _
    $region35: #{encoder_forward.8} parent=1 // pred_check_branch
      %58 = sbr.rel (0) target = $region37
    $region36: #{encoder_forward.8} parent=1 // pred_region
      %60 = dma.done [#allocation6], 2048
    $region37: #{encoder_forward.8} parent=1 // pred_fallthru
      _
    %v61 = vld [vmem:[%s0] sm:$0xff]
    %v62 = vld [vmem:[%s0 + $0x8] sm:$0xff]
    %v63 = vld [vmem:[%s1] sm:$0xff]
    %v64 = vld [vmem:[%s1 + $0x8] sm:$0xff]
    %65 = vmatpush.xpose.msra.mxu0 0.0
    %66 = vmatpush.xpose.msra.mxu0 0.0
    %67 = vmatpush.xpose.msra.mxu0 0.0
    %68 = vmatpush.xpose.msra.mxu0 0.0
    %69 = vmatpush.xpose.msra.mxu0 0.0
    %70 = vmatpush.xpose.msra.mxu0 0.0
    %71 = vmatpush.xpose.msra.mxu0 0.0
    %72 = vmatpush.xpose.msra.mxu0 0.0
    %73 = vmatpush.xpose.msra.mxu0 0.0
    %74 = vmatpush.xpose.msra.mxu0 0.0
    %75 = vmatpush.xpose.msra.mxu0 0.0
    %76 = vmatpush.xpose.msra.mxu0 0.0
    %77 = vmatpush.xpose.msra.mxu0 0.0
    %78 = vmatpush.xpose.msra.mxu0 0.0
    %79 = vmatpush.xpose.msra.mxu0 %v64
    %80 = vmatpush.xpose.msra.mxu0 %v63
    %81 = vmatmul.f32.gmra.mxu0 %v61
    %v82 = vpop.f32.mrf.mxu0
    %v83 = vadd.f32 0.0, %v82
    %84 = vmatmul.f32.gmra.mxu0 %v62
    %v85 = vpop.f32.mrf.mxu0
    %v86 = vadd.f32 0.0, %v85
    %87 = vdwg.mxu0
    %v88 = vmul.f32 %v83, 0.25
    %v89 = vmul.f32 %v86, 0.25
    %vm90 = vcmask 130048
    %v91 = vsel %vm90, %v88, -inf
    %92 = vmax.xlane.f32.xlu0 %v91
    %v93 = vpop.xlane.xlu0 %92
    %v94 = vsel %vm90, %v89, -inf
    %95 = vmax.xlane.f32.xlu0 %v94
    %v96 = vpop.xlane.xlu0 %95
    %v97 = vsub.f32 %v88, %v93
    %v98 = vsub.f32 %v89, %v96
    %v99 = vmul.f32 %v97, 1.442695
    %v100 = vpow.pop %v99
    %v101 = vmul.f32 %v98, 1.442695
    %v102 = vpow.pop %v101
    %v103 = vsel %vm90, %v100, 0.0
    %104 = vadd.xlane.f32.xlu0 %v103
    %v105 = vpop.xlane.xlu0 %104
    %v106 = vsel %vm90, %v102, 0.0
    %107 = vadd.xlane.f32.xlu0 %v106
    %v108 = vpop.xlane.xlu0 %107
    %v109 = vrcp.pop %v105
    %v110 = vmul.f32 %v105, %v109
    %v111 = vsub.f32 1.0, %v110
    %v112 = vmul.f32 %v109, %v111
    %v113 = vadd.f32 %v109, %v112
    %vm114 = vweird.f32 %v105
    %vm115 = vweird.f32 %v109
    %vm116 = vmor %vm114, %vm115
    %v117 = vsel %vm116, %v109, %v113
    %v118 = vand.u32 2147483647, %v105
    %vm119 = vcmp.eq.f32.partialorder %v118, 8.507059e+37
    %v120 = vand.u32 %v105, 2147483648
    %v121 = vor.u32 1.1754944e-38, %v120
    %v122 = vsel %vm119, %v121, %v117
    %v123 = vrcp.pop %v108
    %v124 = vmul.f32 %v108, %v123
    %v125 = vsub.f32 1.0, %v124
    %v126 = vmul.f32 %v123, %v125
    %v127 = vadd.f32 %v123, %v126
    %vm128 = vweird.f32 %v108
    %vm129 = vweird.f32 %v123
    %vm130 = vmor %vm128, %vm129
    %v131 = vsel %vm130, %v123, %v127
    %v132 = vand.u32 2147483647, %v108
    %vm133 = vcmp.eq.f32.partialorder %v132, 8.507059e+37
    %v134 = vand.u32 %v108, 2147483648
    %v135 = vor.u32 1.1754944e-38, %v134
    %v136 = vsel %vm133, %v135, %v131
    %v137 = vmul.f32 %v100, %v122
    %v138 = vmul.f32 %v102, %v136
    %v139 = vld [vmem:[%s2] sm:$0xff]
    %v140 = vld [vmem:[%s2 + $0x8] sm:$0xff]
    %v142 = vsel %vm90, %v137, 0
    %v145 = vsel %vm90, %v138, 0
    %147 = vmatpush.msra.mxu0 0.0
    %148 = vmatpush.msra.mxu0 0.0
    %149 = vmatpush.msra.mxu0 0.0
    %150 = vmatpush.msra.mxu0 0.0
    %151 = vmatpush.msra.mxu0 0.0
    %152 = vmatpush.msra.mxu0 0.0
    %153 = vmatpush.msra.mxu0 0.0
    %154 = vmatpush.msra.mxu0 0.0
    %155 = vmatpush.msra.mxu0 0.0
    %156 = vmatpush.msra.mxu0 0.0
    %157 = vmatpush.msra.mxu0 0.0
    %158 = vmatpush.msra.mxu0 0.0
    %159 = vmatpush.msra.mxu0 0.0
    %160 = vmatpush.msra.mxu0 0.0
    %161 = vmatpush.msra.mxu0 %v140
    %162 = vmatpush.msra.mxu0 %v139
    %163 = vmatmul.f32.gmra.mxu0 %v142
    %v164 = vpop.f32.mrf.mxu0
    %v165 = vadd.f32 0.0, %v164
    %166 = vmatmul.f32.gmra.mxu0 %v145
    %v167 = vpop.f32.mrf.mxu0
    %v168 = vadd.f32 0.0, %v167
    %169 = vdwg.mxu0
    %v170 = vld [vmem:[#allocation2] sm:$0xff]
    %v171 = vld [vmem:[#allocation2 + $0x8] sm:$0xff]
    %v172 = vld [vmem:[#allocation2 + $0x10] sm:$0xff]
    %v173 = vld [vmem:[#allocation2 + $0x18] sm:$0xff]
    %v174 = vld [vmem:[#allocation2 + $0x20] sm:$0xff]
    %v175 = vld [vmem:[#allocation2 + $0x28] sm:$0xff]
    %v176 = vld [vmem:[#allocation2 + $0x30] sm:$0xff]
    %v177 = vld [vmem:[#allocation2 + $0x38] sm:$0xff]
    %v178 = vld [vmem:[#allocation2 + $0x40] sm:$0xff]
    %v179 = vld [vmem:[#allocation2 + $0x48] sm:$0xff]
    %v180 = vld [vmem:[#allocation2 + $0x50] sm:$0xff]
    %v181 = vld [vmem:[#allocation2 + $0x58] sm:$0xff]
    %v182 = vld [vmem:[#allocation2 + $0x60] sm:$0xff]
    %v183 = vld [vmem:[#allocation2 + $0x68] sm:$0xff]
    %v184 = vld [vmem:[#allocation2 + $0x70] sm:$0xff]
    %v185 = vld [vmem:[#allocation2 + $0x78] sm:$0xff]
    %v186 = vld [vmem:[%s3] sm:$0xff]
    %v187 = vld [vmem:[%s3 + $0x8] sm:$0xff]
    %v188 = vld [vmem:[#allocation5] sm:$0xff]
    %v189 = vld [vmem:[#allocation5 + $0x8] sm:$0xff]
    %v190 = vld [vmem:[#allocation5 + $0x10] sm:$0xff]
    %v191 = vld [vmem:[#allocation5 + $0x18] sm:$0xff]
    %v192 = vld [vmem:[#allocation5 + $0x20] sm:$0xff]
    %v193 = vld [vmem:[#allocation5 + $0x28] sm:$0xff]
    %v194 = vld [vmem:[#allocation5 + $0x30] sm:$0xff]
    %v195 = vld [vmem:[#allocation5 + $0x38] sm:$0xff]
    %v196 = vld [vmem:[#allocation5 + $0x40] sm:$0xff]
    %v197 = vld [vmem:[#allocation5 + $0x48] sm:$0xff]
    %v198 = vld [vmem:[#allocation5 + $0x50] sm:$0xff]
    %v199 = vld [vmem:[#allocation5 + $0x58] sm:$0xff]
    %v200 = vld [vmem:[#allocation5 + $0x60] sm:$0xff]
    %v201 = vld [vmem:[#allocation5 + $0x68] sm:$0xff]
    %v202 = vld [vmem:[#allocation5 + $0x70] sm:$0xff]
    %v203 = vld [vmem:[#allocation5 + $0x78] sm:$0xff]
    %204 = vmatpush.msra.mxu0 %v203
    %205 = vmatpush.msra.mxu0 %v202
    %206 = vmatpush.msra.mxu0 %v201
    %207 = vmatpush.msra.mxu0 %v200
    %208 = vmatpush.msra.mxu0 %v199
    %209 = vmatpush.msra.mxu0 %v198
    %210 = vmatpush.msra.mxu0 %v197
    %211 = vmatpush.msra.mxu0 %v196
    %212 = vmatpush.msra.mxu0 %v195
    %213 = vmatpush.msra.mxu0 %v194
    %214 = vmatpush.msra.mxu0 %v193
    %215 = vmatpush.msra.mxu0 %v192
    %216 = vmatpush.msra.mxu0 %v191
    %217 = vmatpush.msra.mxu0 %v190
    %218 = vmatpush.msra.mxu0 %v189
    %219 = vmatpush.msra.mxu0 %v188
    %220 = vmatmul.f32.gmra.mxu0 %v186
    %v221 = vpop.f32.mrf.mxu0
    %v222 = vadd.f32 0.0, %v221
    %223 = vmatmul.f32.gmra.mxu0 %v187
    %v224 = vpop.f32.mrf.mxu0
    %v225 = vadd.f32 0.0, %v224
    %226 = vdwg.mxu0
    %227 = vmatpush.msra.mxu0 %v185
    %228 = vmatpush.msra.mxu0 %v184
    %229 = vmatpush.msra.mxu0 %v183
    %230 = vmatpush.msra.mxu0 %v182
    %231 = vmatpush.msra.mxu0 %v181
    %232 = vmatpush.msra.mxu0 %v180
    %233 = vmatpush.msra.mxu0 %v179
    %234 = vmatpush.msra.mxu0 %v178
    %235 = vmatpush.msra.mxu0 %v177
    %236 = vmatpush.msra.mxu0 %v176
    %237 = vmatpush.msra.mxu0 %v175
    %238 = vmatpush.msra.mxu0 %v174
    %239 = vmatpush.msra.mxu0 %v173
    %240 = vmatpush.msra.mxu0 %v172
    %241 = vmatpush.msra.mxu0 %v171
    %242 = vmatpush.msra.mxu0 %v170
    %243 = vmatmul.f32.gmra.mxu0 %v165
    %v244 = vpop.f32.mrf.mxu0
    %v245 = vadd.f32 %v222, %v244
    %246 = vmatmul.f32.gmra.mxu0 %v168
    %v247 = vpop.f32.mrf.mxu0
    %v248 = vadd.f32 %v225, %v247
    %249 = vdwg.mxu0
    %v250 = vld [vmem:[%s5] sm:$0x1]
    %v252 = vperm.slane %v250, 0
    %v254 = vadd.f32 %v245, %v252
    %v255 = vadd.f32 %v248, %v252
    %v256 = vtanh.pop %v254
    %v257 = vtanh.pop %v255
    %258 = vst [vmem:[%s7] sm:$0xff] %v256
    %259 = vst [vmem:[%s7 + $0x8] sm:$0xff] %v257
    %260 = vst.msk [vmem:[#allocation7] sm:$0xff] %vm90, %v137
    %261 = vst.msk [vmem:[#allocation7 + $0x8] sm:$0xff] %vm90, %v138
    // Predicated region
    $region38: #{encoder_forward.8} parent=1 // pred_check
      _
    $region39: #{encoder_forward.8} parent=1 // pred_check_branch
      %263 = sbr.rel (0) target = $region41
    $region40: #{encoder_forward.8} parent=1 // pred_region
      _
    $region41: #{encoder_forward.8} parent=1 // pred_fallthru
      _
    // Predicated region
    $region42: #{encoder_forward.8} parent=1 // pred_check
      _
    $region43: #{encoder_forward.8} parent=1 // pred_check_branch
      %265 = sbr.rel (0) target = $region45
    $region44: #{encoder_forward.8} parent=1 // pred_region
      %267 = vsyncadd [#allocation4], 0
      %s268 = sshll.u32 [#allocation7], 4
      %s269 = int_to_ptr.vmem [resolvable:$true] %s268
      %s270 = sshll.u32 %s8, 4
      %s271 = int_to_ptr.hbm [resolvable:$true] %s270
      %276 = dma.vmem_to_hbm [thread:$0]  %s269, 256, %s271, [#allocation4], 128, 128, 8
    $region45: #{encoder_forward.8} parent=1 // pred_fallthru
      _
    // Predicated region
    $region46: #{encoder_forward.8} parent=1 // pred_check
      _
    $region47: #{encoder_forward.8} parent=1 // pred_check_branch
      %278 = sbr.rel (0) target = $region49
    $region48: #{encoder_forward.8} parent=1 // pred_region
      _
    $region49: #{encoder_forward.8} parent=1 // pred_fallthru
      _
    // Predicated region
    $region50: #{encoder_forward.8} parent=1 // pred_check
      _
    $region51: #{encoder_forward.8} parent=1 // pred_check_branch
      %280 = sbr.rel (0) target = $region53
    $region52: #{encoder_forward.8} parent=1 // pred_region
      %282 = dma.done [#allocation4], 256
    $region53: #{encoder_forward.8} parent=1 // pred_fallthru
      _
    %283 = vsyncpa [#allocation3], 1
    %284 = vsyncpa [#allocation6], 1
    %285 = vsyncpa [#allocation4], 1

// kernel: encoder_forward.11
$region0: #{encoder_forward.11}
  #allocation0 [shape = 'u32[]', space=smem, size = 0x4, offset = 0x4, fixed_abs, tag = 'smem constant byte address 0x4 - core index']
  #allocation1 [shape = 'u32[72,128]{1,0:T(1,128)}', space=vmem, size = 0x9000, scoped, tag = 'internal scratch']
  %s0 = inlined_call_operand.vmem [shape: f32[16,128], index: 0, kind: input, shape index: {}]
  %s1 = inlined_call_operand.hbm [shape: f32[128,128], index: 1, kind: input, shape index: {}]
  %s2 = inlined_call_operand.vmem [shape: f32[1,128], index: 2, kind: input, shape index: {}]
  %s3 = inlined_call_operand.vmem [shape: f32[1,128], index: 3, kind: input, shape index: {}]
  %s4 = inlined_call_operand.vmem [shape: f32[1,128], index: 4, kind: input, shape index: {}]
  %s5 = inlined_call_operand.hbm [shape: f32[128,128], index: 5, kind: input, shape index: {}]
  %s6 = inlined_call_operand.vmem [shape: f32[1,128], index: 6, kind: input, shape index: {}]
  %s7 = inlined_call_operand.hbm [shape: f32[128,128], index: 7, kind: input, shape index: {}]
  %s8 = inlined_call_operand.vmem [shape: f32[1,128], index: 8, kind: input, shape index: {}]
  %s9 = inlined_call_operand.vmem [shape: f32[1,128], index: 9, kind: input, shape index: {}]
  %s10 = inlined_call_operand.hbm [shape: f32[16,16], index: 10, kind: output, shape index: {}]
  %s11 = sld [smem:[#allocation0]]
  $region62: #{encoder_forward.11} parent=0
    _
  %s13 = ssub.s32 1, %s11
  %s14 = scalar_select 0, %s13, %s11
  $region1: #{encoder_forward.11} parent=0
    #allocation2 [shape = 'u8[65536]{0}', space=vmem, size = 0x10000, scoped, tag = 'input window, operand 1, single buffered']
    #allocation3 [shape = 's32[1]{0}', space=sflag, size = 0x4, scoped, tag = 'scoped memory for encoder_forward.11']
    #allocation4 [shape = 's32[1]{0}', space=sflag, size = 0x4, scoped, tag = 'scoped memory for encoder_forward.11']
    #allocation5 [shape = 'u8[65536]{0}', space=vmem, size = 0x10000, scoped, tag = 'input window, operand 5, single buffered']
    #allocation6 [shape = 's32[1]{0}', space=sflag, size = 0x4, scoped, tag = 'scoped memory for encoder_forward.11']
    #allocation7 [shape = 'u8[65536]{0}', space=vmem, size = 0x10000, scoped, tag = 'input window, operand 7, single buffered']
    #allocation8 [shape = 'u8[8192]{0}', space=vmem, size = 0x2000, scoped, tag = 'output window, operand 0, single buffered']
    %15 = vsyncpa [#allocation3], 0
    %16 = vsyncpa [#allocation6], 0
    %17 = vsyncpa [#allocation4], 0
    // Predicated region
    $region2: #{encoder_forward.11} parent=1 // pred_check
      _
    $region3: #{encoder_forward.11} parent=1 // pred_check_branch
      %19 = sbr.rel (0) target = $region5
    $region4: #{encoder_forward.11} parent=1 // pred_region
      _
    $region5: #{encoder_forward.11} parent=1 // pred_fallthru
      _
    // Predicated region
    $region6: #{encoder_forward.11} parent=1 // pred_check
      _
    $region7: #{encoder_forward.11} parent=1 // pred_check_branch
      %21 = sbr.rel (0) target = $region9
    $region8: #{encoder_forward.11} parent=1 // pred_region
      %23 = vsyncadd [#allocation3], 0
      %s24 = sshll.u32 %s1, 4
      %s25 = int_to_ptr.hbm [resolvable:$true] %s24
      %s26 = sshll.u32 [#allocation2], 4
      %s27 = int_to_ptr.vmem [resolvable:$true] %s26
      %32 = dma.hbm_to_vmem [thread:$0]  %s25, 2048, %s27, [#allocation3], 128, 128, 8
    $region9: #{encoder_forward.11} parent=1 // pred_fallthru
      _
    // Predicated region
    $region10: #{encoder_forward.11} parent=1 // pred_check
      _
    $region11: #{encoder_forward.11} parent=1 // pred_check_branch
      %34 = sbr.rel (0) target = $region13
    $region12: #{encoder_forward.11} parent=1 // pred_region
      _
    $region13: #{encoder_forward.11} parent=1 // pred_fallthru
      _
    // Predicated region
    $region14: #{encoder_forward.11} parent=1 // pred_check
      _
    $region15: #{encoder_forward.11} parent=1 // pred_check_branch
      %36 = sbr.rel (0) target = $region17
    $region16: #{encoder_forward.11} parent=1 // pred_region
      _
    $region17: #{encoder_forward.11} parent=1 // pred_fallthru
      _
    // Predicated region
    $region18: #{encoder_forward.11} parent=1 // pred_check
      _
    $region19: #{encoder_forward.11} parent=1 // pred_check_branch
      %38 = sbr.rel (0) target = $region21
    $region20: #{encoder_forward.11} parent=1 // pred_region
      _
    $region21: #{encoder_forward.11} parent=1 // pred_fallthru
      _
    // Predicated region
    $region22: #{encoder_forward.11} parent=1 // pred_check
      _
    $region23: #{encoder_forward.11} parent=1 // pred_check_branch
      %40 = sbr.rel (0) target = $region25
    $region24: #{encoder_forward.11} parent=1 // pred_region
      %42 = vsyncadd [#allocation6], 0
      %s43 = sshll.u32 %s5, 4
      %s44 = int_to_ptr.hbm [resolvable:$true] %s43
      %s45 = sshll.u32 [#allocation5], 4
      %s46 = int_to_ptr.vmem [resolvable:$true] %s45
      %51 = dma.hbm_to_vmem [thread:$0]  %s44, 2048, %s46, [#allocation6], 128, 128, 8
    $region25: #{encoder_forward.11} parent=1 // pred_fallthru
      _
    // Predicated region
    $region26: #{encoder_forward.11} parent=1 // pred_check
      _
    $region27: #{encoder_forward.11} parent=1 // pred_check_branch
      %53 = sbr.rel (0) target = $region29
    $region28: #{encoder_forward.11} parent=1 // pred_region
      _
    $region29: #{encoder_forward.11} parent=1 // pred_fallthru
      _
    // Predicated region
    $region30: #{encoder_forward.11} parent=1 // pred_check
      _
    $region31: #{encoder_forward.11} parent=1 // pred_check_branch
      %55 = sbr.rel (0) target = $region33
    $region32: #{encoder_forward.11} parent=1 // pred_region
      %57 = vsyncadd [#allocation6], 0
      %s58 = sshll.u32 %s7, 4
      %s59 = int_to_ptr.hbm [resolvable:$true] %s58
      %s60 = sshll.u32 [#allocation7], 4
      %s61 = int_to_ptr.vmem [resolvable:$true] %s60
      %66 = dma.hbm_to_vmem [thread:$0]  %s59, 2048, %s61, [#allocation6], 128, 128, 8
    $region33: #{encoder_forward.11} parent=1 // pred_fallthru
      _
    // Predicated region
    $region34: #{encoder_forward.11} parent=1 // pred_check
      _
    $region35: #{encoder_forward.11} parent=1 // pred_check_branch
      %68 = sbr.rel (0) target = $region37
    $region36: #{encoder_forward.11} parent=1 // pred_region
      _
    $region37: #{encoder_forward.11} parent=1 // pred_fallthru
      _
    // Predicated region
    $region38: #{encoder_forward.11} parent=1 // pred_check
      _
    $region39: #{encoder_forward.11} parent=1 // pred_check_branch
      %70 = sbr.rel (0) target = $region41
    $region40: #{encoder_forward.11} parent=1 // pred_region
      _
    $region41: #{encoder_forward.11} parent=1 // pred_fallthru
      _
    // Predicated region
    $region42: #{encoder_forward.11} parent=1 // pred_check
      _
    $region43: #{encoder_forward.11} parent=1 // pred_check_branch
      %72 = sbr.rel (0) target = $region45
    $region44: #{encoder_forward.11} parent=1 // pred_region
      %74 = dma.done [#allocation3], 2048
    $region45: #{encoder_forward.11} parent=1 // pred_fallthru
      _
    // Predicated region
    $region46: #{encoder_forward.11} parent=1 // pred_check
      _
    $region47: #{encoder_forward.11} parent=1 // pred_check_branch
      %76 = sbr.rel (0) target = $region49
    $region48: #{encoder_forward.11} parent=1 // pred_region
      %78 = dma.done [#allocation6], 2048
    $region49: #{encoder_forward.11} parent=1 // pred_fallthru
      _
    // Predicated region
    $region50: #{encoder_forward.11} parent=1 // pred_check
      _
    $region51: #{encoder_forward.11} parent=1 // pred_check_branch
      %80 = sbr.rel (0) target = $region53
    $region52: #{encoder_forward.11} parent=1 // pred_region
      %82 = dma.done [#allocation6], 2048
    $region53: #{encoder_forward.11} parent=1 // pred_fallthru
      _
    %v83 = vld [vmem:[%s0] sm:$0xff]
    %v84 = vld [vmem:[%s0 + $0x8] sm:$0xff]
    %v85 = vld [vmem:[#allocation2] sm:$0xff]
    %v86 = vld [vmem:[#allocation2 + $0x8] sm:$0xff]
    %v87 = vld [vmem:[#allocation2 + $0x10] sm:$0xff]
    %v88 = vld [vmem:[#allocation2 + $0x18] sm:$0xff]
    %v89 = vld [vmem:[#allocation2 + $0x20] sm:$0xff]
    %v90 = vld [vmem:[#allocation2 + $0x28] sm:$0xff]
    %v91 = vld [vmem:[#allocation2 + $0x30] sm:$0xff]
    %v92 = vld [vmem:[#allocation2 + $0x38] sm:$0xff]
    %v93 = vld [vmem:[#allocation2 + $0x40] sm:$0xff]
    %v94 = vld [vmem:[#allocation2 + $0x48] sm:$0xff]
    %v95 = vld [vmem:[#allocation2 + $0x50] sm:$0xff]
    %v96 = vld [vmem:[#allocation2 + $0x58] sm:$0xff]
    %v97 = vld [vmem:[#allocation2 + $0x60] sm:$0xff]
    %v98 = vld [vmem:[#allocation2 + $0x68] sm:$0xff]
    %v99 = vld [vmem:[#allocation2 + $0x70] sm:$0xff]
    %v100 = vld [vmem:[#allocation2 + $0x78] sm:$0xff]
    %v101 = vld [vmem:[%s2] sm:$0x1]
    %v103 = vperm.slane %v101, 0
    %105 = vmatpush.msra.mxu0 %v100
    %106 = vmatpush.msra.mxu0 %v99
    %107 = vmatpush.msra.mxu0 %v98
    %108 = vmatpush.msra.mxu0 %v97
    %109 = vmatpush.msra.mxu0 %v96
    %110 = vmatpush.msra.mxu0 %v95
    %111 = vmatpush.msra.mxu0 %v94
    %112 = vmatpush.msra.mxu0 %v93
    %113 = vmatpush.msra.mxu0 %v92
    %114 = vmatpush.msra.mxu0 %v91
    %115 = vmatpush.msra.mxu0 %v90
    %116 = vmatpush.msra.mxu0 %v89
    %117 = vmatpush.msra.mxu0 %v88
    %118 = vmatpush.msra.mxu0 %v87
    %119 = vmatpush.msra.mxu0 %v86
    %120 = vmatpush.msra.mxu0 %v85
    %121 = vmatmul.f32.gmra.mxu0 %v83
    %v122 = vpop.f32.mrf.mxu0
    %v123 = vadd.f32 %v103, %v122
    %124 = vmatmul.f32.gmra.mxu0 %v84
    %v125 = vpop.f32.mrf.mxu0
    %v126 = vadd.f32 %v103, %v125
    %127 = vdwg.mxu0
    %v128 = vmax.f32 %v123, 0.0
    %v129 = vmax.f32 %v126, 0.0
    %v130 = vadd.f32 %v128, %v129
    %v131 = vrot.slane %v130, 4
    %v132 = vadd.f32 %v130, %v131
    %v133 = vrot.slane %v132, 2
    %v134 = vadd.f32 %v132, %v133
    %v135 = vrot.slane %v134, 1
    %v136 = vadd.f32 %v134, %v135
    %v137 = vrcp.pop 16.0
    %v138 = vmul.f32 16.0, %v137
    %v139 = vsub.f32 1.0, %v138
    %v140 = vmul.f32 %v137, %v139
    %v141 = vadd.f32 %v137, %v140
    %vm142 = vweird.f32 %v137
    %v143 = vsel %vm142, %v137, %v141
    %v144 = vmul.f32 %v136, %v143
    %v145 = vsub.f32 %v128, %v144
    %v146 = vsub.f32 %v129, %v144
    %v147 = vmul.f32 %v145, %v145
    %v148 = vmul.f32 %v146, %v146
    %v149 = vadd.f32 %v147, %v148
    %v150 = vrot.slane %v149, 4
    %v151 = vadd.f32 %v149, %v150
    %v152 = vrot.slane %v151, 2
    %v153 = vadd.f32 %v151, %v152
    %v154 = vrot.slane %v153, 1
    %v155 = vadd.f32 %v153, %v154
    %v156 = vmul.f32 %v155, %v143
    %v157 = vadd.f32 %v156, 1e-05
    %v158 = vrsqrt.pop %v157
    %v159 = vmul.f32 %v158, %v157
    %v160 = vmul.f32 %v159, %v158
    %v161 = vmul.f32 0.5, %v160
    %v162 = vsub.f32 1.5, %v161
    %v163 = vmul.f32 %v158, %v162
    %vm164 = vweird.f32 %v157
    %vm165 = vweird.f32 %v158
    %vm166 = vmor %vm164, %vm165
    %v167 = vsel %vm166, %v158, %v163
    %v168 = vmul.f32 %v145, %v167
    %v169 = vmul.f32 %v146, %v167
    %v170 = vld [vmem:[%s3] sm:$0x1]
    %v172 = vperm.slane %v170, 0
    %v174 = vmul.f32 %v168, %v172
    %v175 = vmul.f32 %v169, %v172
    %v176 = vld [vmem:[%s4] sm:$0x1]
    %v178 = vperm.slane %v176, 0
    %v180 = vadd.f32 %v174, %v178
    %v181 = vadd.f32 %v175, %v178
    %v182 = vld [vmem:[#allocation5] sm:$0xff]
    %v183 = vld [vmem:[#allocation5 + $0x8] sm:$0xff]
    %v184 = vld [vmem:[#allocation5 + $0x10] sm:$0xff]
    %v185 = vld [vmem:[#allocation5 + $0x18] sm:$0xff]
    %v186 = vld [vmem:[#allocation5 + $0x20] sm:$0xff]
    %v187 = vld [vmem:[#allocation5 + $0x28] sm:$0xff]
    %v188 = vld [vmem:[#allocation5 + $0x30] sm:$0xff]
    %v189 = vld [vmem:[#allocation5 + $0x38] sm:$0xff]
    %v190 = vld [vmem:[#allocation5 + $0x40] sm:$0xff]
    %v191 = vld [vmem:[#allocation5 + $0x48] sm:$0xff]
    %v192 = vld [vmem:[#allocation5 + $0x50] sm:$0xff]
    %v193 = vld [vmem:[#allocation5 + $0x58] sm:$0xff]
    %v194 = vld [vmem:[#allocation5 + $0x60] sm:$0xff]
    %v195 = vld [vmem:[#allocation5 + $0x68] sm:$0xff]
    %v196 = vld [vmem:[#allocation5 + $0x70] sm:$0xff]
    %v197 = vld [vmem:[#allocation5 + $0x78] sm:$0xff]
    %v198 = vld [vmem:[%s6] sm:$0x1]
    %v200 = vperm.slane %v198, 0
    %202 = vmatpush.msra.mxu0 %v197
    %203 = vmatpush.msra.mxu0 %v196
    %204 = vmatpush.msra.mxu0 %v195
    %205 = vmatpush.msra.mxu0 %v194
    %206 = vmatpush.msra.mxu0 %v193
    %207 = vmatpush.msra.mxu0 %v192
    %208 = vmatpush.msra.mxu0 %v191
    %209 = vmatpush.msra.mxu0 %v190
    %210 = vmatpush.msra.mxu0 %v189
    %211 = vmatpush.msra.mxu0 %v188
    %212 = vmatpush.msra.mxu0 %v187
    %213 = vmatpush.msra.mxu0 %v186
    %214 = vmatpush.msra.mxu0 %v185
    %215 = vmatpush.msra.mxu0 %v184
    %216 = vmatpush.msra.mxu0 %v183
    %217 = vmatpush.msra.mxu0 %v182
    %218 = vmatmul.f32.gmra.mxu0 %v180
    %v219 = vpop.f32.mrf.mxu0
    %v220 = vadd.f32 %v200, %v219
    %221 = vmatmul.f32.gmra.mxu0 %v181
    %v222 = vpop.f32.mrf.mxu0
    %v223 = vadd.f32 %v200, %v222
    %224 = vdwg.mxu0
    %v225 = vmax.f32 %v220, 0.0
    %v226 = vmax.f32 %v223, 0.0
    %v227 = vld [vmem:[#allocation7] sm:$0xff]
    %v228 = vld [vmem:[#allocation7 + $0x8] sm:$0xff]
    %v229 = vld [vmem:[#allocation7 + $0x10] sm:$0xff]
    %v230 = vld [vmem:[#allocation7 + $0x18] sm:$0xff]
    %v231 = vld [vmem:[#allocation7 + $0x20] sm:$0xff]
    %v232 = vld [vmem:[#allocation7 + $0x28] sm:$0xff]
    %v233 = vld [vmem:[#allocation7 + $0x30] sm:$0xff]
    %v234 = vld [vmem:[#allocation7 + $0x38] sm:$0xff]
    %v235 = vld [vmem:[#allocation7 + $0x40] sm:$0xff]
    %v236 = vld [vmem:[#allocation7 + $0x48] sm:$0xff]
    %v237 = vld [vmem:[#allocation7 + $0x50] sm:$0xff]
    %v238 = vld [vmem:[#allocation7 + $0x58] sm:$0xff]
    %v239 = vld [vmem:[#allocation7 + $0x60] sm:$0xff]
    %v240 = vld [vmem:[#allocation7 + $0x68] sm:$0xff]
    %v241 = vld [vmem:[#allocation7 + $0x70] sm:$0xff]
    %v242 = vld [vmem:[#allocation7 + $0x78] sm:$0xff]
    %v243 = vld [vmem:[%s9] sm:$0x1]
    %v245 = vperm.slane %v243, 0
    %247 = vmatpush.msra.mxu0 %v242
    %248 = vmatpush.msra.mxu0 %v241
    %249 = vmatpush.msra.mxu0 %v240
    %250 = vmatpush.msra.mxu0 %v239
    %251 = vmatpush.msra.mxu0 %v238
    %252 = vmatpush.msra.mxu0 %v237
    %253 = vmatpush.msra.mxu0 %v236
    %254 = vmatpush.msra.mxu0 %v235
    %255 = vmatpush.msra.mxu0 %v234
    %256 = vmatpush.msra.mxu0 %v233
    %257 = vmatpush.msra.mxu0 %v232
    %258 = vmatpush.msra.mxu0 %v231
    %259 = vmatpush.msra.mxu0 %v230
    %260 = vmatpush.msra.mxu0 %v229
    %261 = vmatpush.msra.mxu0 %v228
    %262 = vmatpush.msra.mxu0 %v227
    %263 = vmatmul.f32.gmra.mxu0 %v225
    %v264 = vpop.f32.mrf.mxu0
    %v265 = vadd.f32 %v245, %v264
    %266 = vmatmul.f32.gmra.mxu0 %v226
    %v267 = vpop.f32.mrf.mxu0
    %v268 = vadd.f32 %v245, %v267
    %269 = vdwg.mxu0
    %v270 = vld [vmem:[%s8] sm:$0x1]
    %271 = vset.pattern.permute.xlu0 1
    %272 = vperm.xlu0 %271, %v243
    %v273 = vpop.permute.xlu0 %272
    %v275 = vperm.slane %v273, 0
    %276 = vmatpush.xpose.msra.mxu0 0.0
    %277 = vmatpush.xpose.msra.mxu0 0.0
    %278 = vmatpush.xpose.msra.mxu0 0.0
    %279 = vmatpush.xpose.msra.mxu0 0.0
    %280 = vmatpush.xpose.msra.mxu0 0.0
    %281 = vmatpush.xpose.msra.mxu0 0.0
    %282 = vmatpush.xpose.msra.mxu0 0.0
    %283 = vmatpush.xpose.msra.mxu0 0.0
    %284 = vmatpush.xpose.msra.mxu0 0.0
    %285 = vmatpush.xpose.msra.mxu0 0.0
    %286 = vmatpush.xpose.msra.mxu0 0.0
    %287 = vmatpush.xpose.msra.mxu0 0.0
    %288 = vmatpush.xpose.msra.mxu0 0.0
    %289 = vmatpush.xpose.msra.mxu0 0.0
    %290 = vmatpush.xpose.msra.mxu0 %v226
    %291 = vmatpush.xpose.msra.mxu0 %v225
    %292 = vmatmul.f32.gmra.mxu0 %v270
    %v293 = vpop.f32.mrf.mxu0
    %v294 = vadd.f32 %v275, %v293
    %295 = vdwg.mxu0
    %297 = vset.pattern.permute.xlu0 0
    %298 = vperm.xlu0 %297, %v265
    %v299 = vpop.permute.xlu0 %298
    %302 = vset.pattern.permute.xlu0 0
    %303 = vperm.xlu0 %302, %v268
    %v304 = vpop.permute.xlu0 %303
    %v306 = vperm.slane %v294, 0
    %v307 = vmul.f32 %v299, %v306
    %v308 = vmul.f32 %v304, %v306
    %vm309 = vcmask 130048
    %310 = vst.msk [vmem:[#allocation8] sm:$0xff] %vm309, %v307
    %311 = vst.msk [vmem:[#allocation8 + $0x8] sm:$0xff] %vm309, %v308
    // Predicated region
    $region54: #{encoder_forward.11} parent=1 // pred_check
      _
    $region55: #{encoder_forward.11} parent=1 // pred_check_branch
      %313 = sbr.rel (0) target = $region57
    $region56: #{encoder_forward.11} parent=1 // pred_region
      %315 = vsyncadd [#allocation4], 0
      %s316 = sshll.u32 [#allocation8], 4
      %s317 = int_to_ptr.vmem [resolvable:$true] %s316
      %s318 = sshll.u32 %s10, 4
      %s319 = int_to_ptr.hbm [resolvable:$true] %s318
      %324 = dma.vmem_to_hbm [thread:$0]  %s317, 256, %s319, [#allocation4], 128, 128, 8
    $region57: #{encoder_forward.11} parent=1 // pred_fallthru
      _
    // Predicated region
    $region58: #{encoder_forward.11} parent=1 // pred_check
      _
    $region59: #{encoder_forward.11} parent=1 // pred_check_branch
      %326 = sbr.rel (0) target = $region61
    $region60: #{encoder_forward.11} parent=1 // pred_region
      %328 = dma.done [#allocation4], 256
    $region61: #{encoder_forward.11} parent=1 // pred_fallthru
      _
    %329 = vsyncpa [#allocation3], 1
    %330 = vsyncpa [#allocation6], 1
    %331 = vsyncpa [#allocation4], 1

// kernel: encoder_forward.6
$region0: #{encoder_forward.6}
  #allocation0 [shape = 'u32[]', space=smem, size = 0x4, offset = 0x4, fixed_abs, tag = 'smem constant byte address 0x4 - core index']
  #allocation1 [shape = 'u32[72,128]{1,0:T(1,128)}', space=vmem, size = 0x9000, scoped, tag = 'internal scratch']
  %s0 = inlined_call_operand.vmem [shape: f32[2,16,128], index: 0, kind: input, shape index: {}]
  %s1 = inlined_call_operand.vmem [shape: f32[2,16,128], index: 1, kind: input, shape index: {}, may-alias: {1,13}]
  %s2 = inlined_call_operand.vmem [shape: f32[2,16,16], index: 2, kind: input, shape index: {}]
  %s3 = inlined_call_operand.vmem [shape: f32[2,16,16], index: 3, kind: input, shape index: {}]
  %s4 = inlined_call_operand.hbm [shape: f32[5,128,128], index: 4, kind: input, shape index: {}]
  %s5 = inlined_call_operand.hbm [shape: f32[5,128,128], index: 5, kind: input, shape index: {}]
  %s6 = inlined_call_operand.hbm [shape: f32[5,128,128], index: 6, kind: input, shape index: {}]
  %s7 = inlined_call_operand.hbm [shape: f32[5,128,128], index: 7, kind: input, shape index: {}]
  %s8 = inlined_call_operand.hbm [shape: f32[5,128,128], index: 8, kind: input, shape index: {}]
  %s9 = inlined_call_operand.hbm [shape: f32[5,128,128], index: 9, kind: input, shape index: {}]
  %s10 = inlined_call_operand.vmem [shape: f32[1,128], index: 10, kind: input, shape index: {}]
  %s11 = inlined_call_operand.vmem [shape: f32[1,128], index: 11, kind: input, shape index: {}]
  %s12 = inlined_call_operand.vmem [shape: f32[1,128], index: 12, kind: input, shape index: {}]
  %s13 = inlined_call_operand.vmem [shape: f32[2,16,128], index: 13, kind: output, shape index: {}, may-alias: {1,13}]
  %s14 = sld [smem:[#allocation0]]
  $region109: #{encoder_forward.6} parent=0
    _
  %s16 = ssub.s32 1, %s14
  %s17 = scalar_select 0, %s16, %s14
  $region1: #{encoder_forward.6} parent=0
    #allocation2 [shape = 'u8[327680]{0}', space=vmem, size = 0x50000, scoped, tag = 'input window, operand 4, single buffered']
    #allocation3 [shape = 's32[2]{0}', space=sflag, size = 0x8, scoped, tag = 'scoped memory for encoder_forward.6']
    #allocation4 [shape = 'u8[327680]{0}', space=vmem, size = 0x50000, scoped, tag = 'input window, operand 5, single buffered']
    #allocation5 [shape = 's32[1]{0}', space=sflag, size = 0x4, scoped, tag = 'scoped memory for encoder_forward.6']
    #allocation6 [shape = 'u8[327680]{0}', space=vmem, size = 0x50000, scoped, tag = 'input window, operand 6, single buffered']
    #allocation7 [shape = 'u8[327680]{0}', space=vmem, size = 0x50000, scoped, tag = 'input window, operand 7, single buffered']
    #allocation8 [shape = 's32[1]{0}', space=sflag, size = 0x4, scoped, tag = 'scoped memory for encoder_forward.6']
    #allocation9 [shape = 'u8[327680]{0}', space=vmem, size = 0x50000, scoped, tag = 'input window, operand 8, single buffered']
    #allocation10 [shape = 'u8[327680]{0}', space=vmem, size = 0x50000, scoped, tag = 'input window, operand 9, single buffered']
    #allocation11 [shape = 's32[1]{0}', space=sflag, size = 0x4, scoped, tag = 'scoped memory for encoder_forward.6']
    %18 = vsyncpa [#allocation3], 0
    %19 = vsyncpa [#allocation5], 0
    %20 = vsyncpa [#allocation8], 0
    %21 = vsyncpa [#allocation11], 0
    loop: start=0, step=1, limit=4
    $region2: #{encoder_forward.6} parent=1 // loop_pre_header
      _
    $region3: #{encoder_forward.6} parent=1 // loop_header
      %s23 = sphi 0, %s27
      %p24 = scmp.ge.s32.totalorder %s23, 4
      %s33 = sphi 0, %s35
      %s36 = sphi 0, %s33
      %s37 = sphi 0, %s36
      %s53 = sphi 0, %s37
      %s59 = sphi 0, %s61
      %s62 = sphi 0, %s59
      %s63 = sphi 0, %s62
      %s79 = sphi 0, %s63
      %s83 = sphi 0, %s83
      %s85 = sphi 0, %s83
      %s86 = sphi 0, %s85
      %s100 = sphi 0, %s86
      %s104 = sphi 0, %s104
      %s106 = sphi 0, %s104
      %s107 = sphi 0, %s106
      %s121 = sphi 0, %s107
      %s125 = sphi 0, %s125
      %s127 = sphi 0, %s125
      %s128 = sphi 0, %s127
      %s142 = sphi 0, %s128
      %s146 = sphi 0, %s146
      %s148 = sphi 0, %s146
      %s149 = sphi 0, %s148
      %s163 = sphi 0, %s149
      %s167 = sphi 0, %s167
      %s169 = sphi 0, %s167
      %s170 = sphi 0, %s169
      %s184 = sphi 0, %s170
      %s188 = sphi 0, %s188
      %s190 = sphi 0, %s188
      %s191 = sphi 0, %s190
      %s205 = sphi 0, %s191
      %s209 = sphi 0, %s209
      %s211 = sphi 0, %s209
      %s212 = sphi 0, %s211
      %s226 = sphi 0, %s212
      %s230 = sphi 0, %s230
      %s232 = sphi 0, %s230
      %s233 = sphi 0, %s232
      %s247 = sphi 0, %s233
      %s251 = sphi 0, %s251
      %s253 = sphi 0, %s251
      %s254 = sphi 0, %s253
      %s268 = sphi 0, %s254
      %s272 = sphi 0, %s272
      %s274 = sphi 0, %s272
      %s275 = sphi 0, %s274
      %s289 = sphi 0, %s275
      %s293 = sphi 0, %s293
      %s295 = sphi 0, %s293
      %s296 = sphi 0, %s295
      %s310 = sphi 0, %s296
      %s316 = sphi 0, %s318
      %s319 = sphi 0, %s316
      %s320 = sphi 0, %s319
      %s336 = sphi 0, %s320
    $region4: #{encoder_forward.6} parent=1 // loop_header_branch
      %26 = sbr.rel (%p24) target = $region8
    $region5: #{encoder_forward.6} parent=1 // loop_body
      %s28 = ssub.s32 %s23, 1
      %s29 = ssub.s32 %s23, 2
      %s30 = sadd.s32 %s23, 1
      %s31 = ssub.s32 %s23, %s30
      %p32 = scmp.eq.s32.totalorder %s31, 0
      %s34 = sadd.s32 %s33, 1
      %s35 = scalar_select %p32, %s33, %s34
      %p38 = pneg %p32
      %p39 = scmp.eq.s32.totalorder %s23, 1
      %p40 = por %p38, %p39
      %p41 = scmp.ne.s32.totalorder %s33, %s36
      %p42 = scmp.eq.s32.totalorder %s23, 0
      %p43 = por %p41, %p42
      %p44 = scmp.ne.s32.totalorder %s33, %s36
      %p45 = scmp.eq.s32.totalorder %s28, 1
      %p46 = por %p44, %p45
      %p47 = scmp.ne.s32.totalorder %s36, %s37
      %p48 = scmp.eq.s32.totalorder %s28, 0
      %p49 = por %p47, %p48
      %p50 = scmp.ne.s32.totalorder %s36, %s37
      %p51 = scmp.eq.s32.totalorder %s29, 1
      %p52 = por %p50, %p51
      %p54 = scmp.ne.s32.totalorder %s37, %s53
      %p55 = scmp.eq.s32.totalorder %s29, 0
      %p56 = por %p54, %p55
      %s57 = ssub.s32 %s23, %s30
      %p58 = scmp.eq.s32.totalorder %s57, 0
      %s60 = sadd.s32 %s59, 1
      %s61 = scalar_select %p58, %s59, %s60
      %p64 = pneg %p58
      %p65 = scmp.eq.s32.totalorder %s23, 1
      %p66 = por %p64, %p65
      %p67 = scmp.ne.s32.totalorder %s59, %s62
      %p68 = scmp.eq.s32.totalorder %s23, 0
      %p69 = por %p67, %p68
      %p70 = scmp.ne.s32.totalorder %s59, %s62
      %p71 = scmp.eq.s32.totalorder %s28, 1
      %p72 = por %p70, %p71
      %p73 = scmp.ne.s32.totalorder %s62, %s63
      %p74 = scmp.eq.s32.totalorder %s28, 0
      %p75 = por %p73, %p74
      %p76 = scmp.ne.s32.totalorder %s62, %s63
      %p77 = scmp.eq.s32.totalorder %s29, 1
      %p78 = por %p76, %p77
      %p80 = scmp.ne.s32.totalorder %s63, %s79
      %p81 = scmp.eq.s32.totalorder %s29, 0
      %p82 = por %p80, %p81
      %s84 = sadd.s32 %s83, 1
      %p87 = scmp.eq.s32.totalorder %s23, 1
      %p88 = scmp.ne.s32.totalorder %s83, %s85
      %p89 = scmp.eq.s32.totalorder %s23, 0
      %p90 = por %p88, %p89
      %p91 = scmp.ne.s32.totalorder %s83, %s85
      %p92 = scmp.eq.s32.totalorder %s28, 1
      %p93 = por %p91, %p92
      %p94 = scmp.ne.s32.totalorder %s85, %s86
      %p95 = scmp.eq.s32.totalorder %s28, 0
      %p96 = por %p94, %p95
      %p97 = scmp.ne.s32.totalorder %s85, %s86
      %p98 = scmp.eq.s32.totalorder %s29, 1
      %p99 = por %p97, %p98
      %p101 = scmp.ne.s32.totalorder %s86, %s100
      %p102 = scmp.eq.s32.totalorder %s29, 0
      %p103 = por %p101, %p102
      %s105 = sadd.s32 %s104, 1
      %p108 = scmp.eq.s32.totalorder %s23, 1
      %p109 = scmp.ne.s32.totalorder %s104, %s106
      %p110 = scmp.eq.s32.totalorder %s23, 0
      %p111 = por %p109, %p110
      %p112 = scmp.ne.s32.totalorder %s104, %s106
      %p113 = scmp.eq.s32.totalorder %s28, 1
      %p114 = por %p112, %p113
      %p115 = scmp.ne.s32.totalorder %s106, %s107
      %p116 = scmp.eq.s32.totalorder %s28, 0
      %p117 = por %p115, %p116
      %p118 = scmp.ne.s32.totalorder %s106, %s107
      %p119 = scmp.eq.s32.totalorder %s29, 1
      %p120 = por %p118, %p119
      %p122 = scmp.ne.s32.totalorder %s107, %s121
      %p123 = scmp.eq.s32.totalorder %s29, 0
      %p124 = por %p122, %p123
      %s126 = sadd.s32 %s125, 1
      %p129 = scmp.eq.s32.totalorder %s23, 1
      %p130 = scmp.ne.s32.totalorder %s125, %s127
      %p131 = scmp.eq.s32.totalorder %s23, 0
      %p132 = por %p130, %p131
      %p133 = scmp.ne.s32.totalorder %s125, %s127
      %p134 = scmp.eq.s32.totalorder %s28, 1
      %p135 = por %p133, %p134
      %p136 = scmp.ne.s32.totalorder %s127, %s128
      %p137 = scmp.eq.s32.totalorder %s28, 0
      %p138 = por %p136, %p137
      %p139 = scmp.ne.s32.totalorder %s127, %s128
      %p140 = scmp.eq.s32.totalorder %s29, 1
      %p141 = por %p139, %p140
      %p143 = scmp.ne.s32.totalorder %s128, %s142
      %p144 = scmp.eq.s32.totalorder %s29, 0
      %p145 = por %p143, %p144
      %s147 = sadd.s32 %s146, 1
      %p150 = scmp.eq.s32.totalorder %s23, 1
      %p151 = scmp.ne.s32.totalorder %s146, %s148
      %p152 = scmp.eq.s32.totalorder %s23, 0
      %p153 = por %p151, %p152
      %p154 = scmp.ne.s32.totalorder %s146, %s148
      %p155 = scmp.eq.s32.totalorder %s28, 1
      %p156 = por %p154, %p155
      %p157 = scmp.ne.s32.totalorder %s148, %s149
      %p158 = scmp.eq.s32.totalorder %s28, 0
      %p159 = por %p157, %p158
      %p160 = scmp.ne.s32.totalorder %s148, %s149
      %p161 = scmp.eq.s32.totalorder %s29, 1
      %p162 = por %p160, %p161
      %p164 = scmp.ne.s32.totalorder %s149, %s163
      %p165 = scmp.eq.s32.totalorder %s29, 0
      %p166 = por %p164, %p165
      %s168 = sadd.s32 %s167, 1
      %p171 = scmp.eq.s32.totalorder %s23, 1
      %p172 = scmp.ne.s32.totalorder %s167, %s169
      %p173 = scmp.eq.s32.totalorder %s23, 0
      %p174 = por %p172, %p173
      %p175 = scmp.ne.s32.totalorder %s167, %s169
      %p176 = scmp.eq.s32.totalorder %s28, 1
      %p177 = por %p175, %p176
      %p178 = scmp.ne.s32.totalorder %s169, %s170
      %p179 = scmp.eq.s32.totalorder %s28, 0
      %p180 = por %p178, %p179
      %p181 = scmp.ne.s32.totalorder %s169, %s170
      %p182 = scmp.eq.s32.totalorder %s29, 1
      %p183 = por %p181, %p182
      %p185 = scmp.ne.s32.totalorder %s170, %s184
      %p186 = scmp.eq.s32.totalorder %s29, 0
      %p187 = por %p185, %p186
      %s189 = sadd.s32 %s188, 1
      %p192 = scmp.eq.s32.totalorder %s23, 1
      %p193 = scmp.ne.s32.totalorder %s188, %s190
      %p194 = scmp.eq.s32.totalorder %s23, 0
      %p195 = por %p193, %p194
      %p196 = scmp.ne.s32.totalorder %s188, %s190
      %p197 = scmp.eq.s32.totalorder %s28, 1
      %p198 = por %p196, %p197
      %p199 = scmp.ne.s32.totalorder %s190, %s191
      %p200 = scmp.eq.s32.totalorder %s28, 0
      %p201 = por %p199, %p200
      %p202 = scmp.ne.s32.totalorder %s190, %s191
      %p203 = scmp.eq.s32.totalorder %s29, 1
      %p204 = por %p202, %p203
      %p206 = scmp.ne.s32.totalorder %s191, %s205
      %p207 = scmp.eq.s32.totalorder %s29, 0
      %p208 = por %p206, %p207
      %s210 = sadd.s32 %s209, 1
      %p213 = scmp.eq.s32.totalorder %s23, 1
      %p214 = scmp.ne.s32.totalorder %s209, %s211
      %p215 = scmp.eq.s32.totalorder %s23, 0
      %p216 = por %p214, %p215
      %p217 = scmp.ne.s32.totalorder %s209, %s211
      %p218 = scmp.eq.s32.totalorder %s28, 1
      %p219 = por %p217, %p218
      %p220 = scmp.ne.s32.totalorder %s211, %s212
      %p221 = scmp.eq.s32.totalorder %s28, 0
      %p222 = por %p220, %p221
      %p223 = scmp.ne.s32.totalorder %s211, %s212
      %p224 = scmp.eq.s32.totalorder %s29, 1
      %p225 = por %p223, %p224
      %p227 = scmp.ne.s32.totalorder %s212, %s226
      %p228 = scmp.eq.s32.totalorder %s29, 0
      %p229 = por %p227, %p228
      %s231 = sadd.s32 %s230, 1
      %p234 = scmp.eq.s32.totalorder %s23, 1
      %p235 = scmp.ne.s32.totalorder %s230, %s232
      %p236 = scmp.eq.s32.totalorder %s23, 0
      %p237 = por %p235, %p236
      %p238 = scmp.ne.s32.totalorder %s230, %s232
      %p239 = scmp.eq.s32.totalorder %s28, 1
      %p240 = por %p238, %p239
      %p241 = scmp.ne.s32.totalorder %s232, %s233
      %p242 = scmp.eq.s32.totalorder %s28, 0
      %p243 = por %p241, %p242
      %p244 = scmp.ne.s32.totalorder %s232, %s233
      %p245 = scmp.eq.s32.totalorder %s29, 1
      %p246 = por %p244, %p245
      %p248 = scmp.ne.s32.totalorder %s233, %s247
      %p249 = scmp.eq.s32.totalorder %s29, 0
      %p250 = por %p248, %p249
      %s252 = sadd.s32 %s251, 1
      %p255 = scmp.eq.s32.totalorder %s23, 1
      %p256 = scmp.ne.s32.totalorder %s251, %s253
      %p257 = scmp.eq.s32.totalorder %s23, 0
      %p258 = por %p256, %p257
      %p259 = scmp.ne.s32.totalorder %s251, %s253
      %p260 = scmp.eq.s32.totalorder %s28, 1
      %p261 = por %p259, %p260
      %p262 = scmp.ne.s32.totalorder %s253, %s254
      %p263 = scmp.eq.s32.totalorder %s28, 0
      %p264 = por %p262, %p263
      %p265 = scmp.ne.s32.totalorder %s253, %s254
      %p266 = scmp.eq.s32.totalorder %s29, 1
      %p267 = por %p265, %p266
      %p269 = scmp.ne.s32.totalorder %s254, %s268
      %p270 = scmp.eq.s32.totalorder %s29, 0
      %p271 = por %p269, %p270
      %s273 = sadd.s32 %s272, 1
      %p276 = scmp.eq.s32.totalorder %s23, 1
      %p277 = scmp.ne.s32.totalorder %s272, %s274
      %p278 = scmp.eq.s32.totalorder %s23, 0
      %p279 = por %p277, %p278
      %p280 = scmp.ne.s32.totalorder %s272, %s274
      %p281 = scmp.eq.s32.totalorder %s28, 1
      %p282 = por %p280, %p281
      %p283 = scmp.ne.s32.totalorder %s274, %s275
      %p284 = scmp.eq.s32.totalorder %s28, 0
      %p285 = por %p283, %p284
      %p286 = scmp.ne.s32.totalorder %s274, %s275
      %p287 = scmp.eq.s32.totalorder %s29, 1
      %p288 = por %p286, %p287
      %p290 = scmp.ne.s32.totalorder %s275, %s289
      %p291 = scmp.eq.s32.totalorder %s29, 0
      %p292 = por %p290, %p291
      %s294 = sadd.s32 %s293, 1
      %p297 = scmp.eq.s32.totalorder %s23, 1
      %p298 = scmp.ne.s32.totalorder %s293, %s295
      %p299 = scmp.eq.s32.totalorder %s23, 0
      %p300 = por %p298, %p299
      %p301 = scmp.ne.s32.totalorder %s293, %s295
      %p302 = scmp.eq.s32.totalorder %s28, 1
      %p303 = por %p301, %p302
      %p304 = scmp.ne.s32.totalorder %s295, %s296
      %p305 = scmp.eq.s32.totalorder %s28, 0
      %p306 = por %p304, %p305
      %p307 = scmp.ne.s32.totalorder %s295, %s296
      %p308 = scmp.eq.s32.totalorder %s29, 1
      %p309 = por %p307, %p308
      %p311 = scmp.ne.s32.totalorder %s296, %s310
      %p312 = scmp.eq.s32.totalorder %s29, 0
      %p313 = por %p311, %p312
      %s314 = ssub.s32 %s23, %s30
      %p315 = scmp.eq.s32.totalorder %s314, 0
      %s317 = sadd.s32 %s316, 1
      %s318 = scalar_select %p315, %s316, %s317
      %p321 = pneg %p315
      %p322 = scmp.eq.s32.totalorder %s23, 1
      %p323 = por %p321, %p322
      %p324 = scmp.ne.s32.totalorder %s316, %s319
      %p325 = scmp.eq.s32.totalorder %s23, 0
      %p326 = por %p324, %p325
      %p327 = scmp.ne.s32.totalorder %s316, %s319
      %p328 = scmp.eq.s32.totalorder %s28, 1
      %p329 = por %p327, %p328
      %p330 = scmp.ne.s32.totalorder %s319, %s320
      %p331 = scmp.eq.s32.totalorder %s28, 0
      %p332 = por %p330, %p331
      %p333 = scmp.ne.s32.totalorder %s319, %s320
      %p334 = scmp.eq.s32.totalorder %s29, 1
      %p335 = por %p333, %p334
      %p337 = scmp.ne.s32.totalorder %s320, %s336
      %p338 = scmp.eq.s32.totalorder %s29, 0
      %p339 = por %p337, %p338
      %p340 = scmp.le.s32.totalorder 1, %s23
      %p341 = scmp.lt.s32.totalorder %s23, 3
      %p342 = pnand %p340, %p341
      %p343 = pneg %p342
      // Predicated region
      $region9: #{encoder_forward.6} parent=5 // pred_check
        _
      $region10: #{encoder_forward.6} parent=5 // pred_check_branch
        %345 = sbr.rel (%p342) target = $region12
      $region11: #{encoder_forward.6} parent=5 // pred_region
        %s346 = ssub.s32 %s23, 1
        // Predicated region
        $region13: #{encoder_forward.6} parent=11 // pred_check
          %p347 = pneg %p96
        $region14: #{encoder_forward.6} parent=11 // pred_check_branch
          %349 = sbr.rel (%p347) target = $region16
        $region15: #{encoder_forward.6} parent=11 // pred_region
          _
        $region16: #{encoder_forward.6} parent=11 // pred_fallthru
          _
        // Predicated region
        $region17: #{encoder_forward.6} parent=11 // pred_check
          %p350 = pneg %p117
        $region18: #{encoder_forward.6} parent=11 // pred_check_branch
          %352 = sbr.rel (%p350) target = $region20
        $region19: #{encoder_forward.6} parent=11 // pred_region
          _
        $region20: #{encoder_forward.6} parent=11 // pred_fallthru
          _
        // Predicated region
        $region21: #{encoder_forward.6} parent=11 // pred_check
          %p353 = pneg %p138
        $region22: #{encoder_forward.6} parent=11 // pred_check_branch
          %355 = sbr.rel (%p353) target = $region24
        $region23: #{encoder_forward.6} parent=11 // pred_region
          %357 = vsyncadd [#allocation3], 0
          %s358 = sshll.u32 %s4, 4
          %s359 = int_to_ptr.hbm [resolvable:$true] %s358
          %s360 = sshll.u32 [#allocation2], 4
          %s361 = int_to_ptr.vmem [resolvable:$true] %s360
          %366 = dma.hbm_to_vmem [thread:$0]  %s359, 10240, %s361, [#allocation3], 128, 128, 8
        $region24: #{encoder_forward.6} parent=11 // pred_fallthru
          _
        // Predicated region
        $region25: #{encoder_forward.6} parent=11 // pred_check
          %p367 = pneg %p159
        $region26: #{encoder_forward.6} parent=11 // pred_check_branch
          %369 = sbr.rel (%p367) target = $region28
        $region27: #{encoder_forward.6} parent=11 // pred_region
          %371 = vsyncadd [#allocation5], 0
          %s372 = sshll.u32 %s5, 4
          %s373 = int_to_ptr.hbm [resolvable:$true] %s372
          %s374 = sshll.u32 [#allocation4], 4
          %s375 = int_to_ptr.vmem [resolvable:$true] %s374
          %380 = dma.hbm_to_vmem [thread:$0]  %s373, 10240, %s375, [#allocation5], 128, 128, 8
        $region28: #{encoder_forward.6} parent=11 // pred_fallthru
          _
        // Predicated region
        $region29: #{encoder_forward.6} parent=11 // pred_check
          %p381 = pneg %p180
        $region30: #{encoder_forward.6} parent=11 // pred_check_branch
          %383 = sbr.rel (%p381) target = $region32
        $region31: #{encoder_forward.6} parent=11 // pred_region
          %385 = vsyncadd [#allocation5], 0
          %s386 = sshll.u32 %s6, 4
          %s387 = int_to_ptr.hbm [resolvable:$true] %s386
          %s388 = sshll.u32 [#allocation6], 4
          %s389 = int_to_ptr.vmem [resolvable:$true] %s388
          %394 = dma.hbm_to_vmem [thread:$0]  %s387, 10240, %s389, [#allocation5], 128, 128, 8
        $region32: #{encoder_forward.6} parent=11 // pred_fallthru
          _
        // Predicated region
        $region33: #{encoder_forward.6} parent=11 // pred_check
          %p395 = pneg %p201
        $region34: #{encoder_forward.6} parent=11 // pred_check_branch
          %397 = sbr.rel (%p395) target = $region36
        $region35: #{encoder_forward.6} parent=11 // pred_region
          %399 = vsyncadd [#allocation8], 0
          %s400 = sshll.u32 %s7, 4
          %s401 = int_to_ptr.hbm [resolvable:$true] %s400
          %s402 = sshll.u32 [#allocation7], 4
          %s403 = int_to_ptr.vmem [resolvable:$true] %s402
          %408 = dma.hbm_to_vmem [thread:$0]  %s401, 10240, %s403, [#allocation8], 128, 128, 8
        $region36: #{encoder_forward.6} parent=11 // pred_fallthru
          _
        // Predicated region
        $region37: #{encoder_forward.6} parent=11 // pred_check
          %p409 = pneg %p222
        $region38: #{encoder_forward.6} parent=11 // pred_check_branch
          %411 = sbr.rel (%p409) target = $region40
        $region39: #{encoder_forward.6} parent=11 // pred_region
          %413 = vsyncadd [#allocation8], 0
          %s414 = sshll.u32 %s8, 4
          %s415 = int_to_ptr.hbm [resolvable:$true] %s414
          %s416 = sshll.u32 [#allocation9], 4
          %s417 = int_to_ptr.vmem [resolvable:$true] %s416
          %422 = dma.hbm_to_vmem [thread:$0]  %s415, 10240, %s417, [#allocation8], 128, 128, 8
        $region40: #{encoder_forward.6} parent=11 // pred_fallthru
          _
        // Predicated region
        $region41: #{encoder_forward.6} parent=11 // pred_check
          %p423 = pneg %p243
        $region42: #{encoder_forward.6} parent=11 // pred_check_branch
          %425 = sbr.rel (%p423) target = $region44
        $region43: #{encoder_forward.6} parent=11 // pred_region
          %427 = vsyncadd [#allocation11], 0
          %s428 = sshll.u32 %s9, 4
          %s429 = int_to_ptr.hbm [resolvable:$true] %s428
          %s430 = sshll.u32 [#allocation10], 4
          %s431 = int_to_ptr.vmem [resolvable:$true] %s430
          %436 = dma.hbm_to_vmem [thread:$0]  %s429, 10240, %s431, [#allocation11], 128, 128, 8
        $region44: #{encoder_forward.6} parent=11 // pred_fallthru
          _
        // Predicated region
        $region45: #{encoder_forward.6} parent=11 // pred_check
          %p437 = pneg %p264
        $region46: #{encoder_forward.6} parent=11 // pred_check_branch
          %439 = sbr.rel (%p437) target = $region48
        $region47: #{encoder_forward.6} parent=11 // pred_region
          _
        $region48: #{encoder_forward.6} parent=11 // pred_fallthru
          _
        // Predicated region
        $region49: #{encoder_forward.6} parent=11 // pred_check
          %p440 = pneg %p285
        $region50: #{encoder_forward.6} parent=11 // pred_check_branch
          %442 = sbr.rel (%p440) target = $region52
        $region51: #{encoder_forward.6} parent=11 // pred_region
          _
        $region52: #{encoder_forward.6} parent=11 // pred_fallthru
          _
        // Predicated region
        $region53: #{encoder_forward.6} parent=11 // pred_check
          %p443 = pneg %p306
        $region54: #{encoder_forward.6} parent=11 // pred_check_branch
          %445 = sbr.rel (%p443) target = $region56
        $region55: #{encoder_forward.6} parent=11 // pred_region
          _
        $region56: #{encoder_forward.6} parent=11 // pred_fallthru
          _
      $region12: #{encoder_forward.6} parent=5 // pred_fallthru
        _
      %p446 = scmp.lt.s32.totalorder %s23, 2
      // Predicated region
      $region57: #{encoder_forward.6} parent=5 // pred_check
        %p447 = pneg %p446
      $region58: #{encoder_forward.6} parent=5 // pred_check_branch
        %449 = sbr.rel (%p447) target = $region60
      $region59: #{encoder_forward.6} parent=5 // pred_region
        // Predicated region
        $region61: #{encoder_forward.6} parent=59 // pred_check
          %p450 = pneg %p43
        $region62: #{encoder_forward.6} parent=59 // pred_check_branch
          %452 = sbr.rel (%p450) target = $region64
        $region63: #{encoder_forward.6} parent=59 // pred_region
          %p453 = scmp.lt.s32.totalorder %s23, 1
          %s454 = scalar_select %p453, %s23, 1
          %s455 = smul.addr %s454, 2
          %s456 = smul.addr %s455, 8
          %s457 = scalar_lea.vmem %s0, %s456
        $region64: #{encoder_forward.6} parent=59 // pred_fallthru
          _
        // Predicated region
        $region65: #{encoder_forward.6} parent=59 // pred_check
          %p458 = pneg %p69
        $region66: #{encoder_forward.6} parent=59 // pred_check_branch
          %460 = sbr.rel (%p458) target = $region68
        $region67: #{encoder_forward.6} parent=59 // pred_region
          %p461 = scmp.lt.s32.totalorder %s23, 1
          %s462 = scalar_select %p461, %s23, 1
          %s463 = smul.addr %s462, 2
          %s464 = smul.addr %s463, 8
          %s465 = scalar_lea.vmem %s1, %s464
        $region68: #{encoder_forward.6} parent=59 // pred_fallthru
          _
      $region60: #{encoder_forward.6} parent=5 // pred_fallthru
        _
      %p466 = scmp.le.s32.totalorder 1, %s23
      %p467 = scmp.lt.s32.totalorder %s23, 3
      %p468 = pnand %p466, %p467
      %p469 = pneg %p468
      // Predicated region
      $region69: #{encoder_forward.6} parent=5 // pred_check
        _
      $region70: #{encoder_forward.6} parent=5 // pred_check_branch
        %471 = sbr.rel (%p468) target = $region72
      $region71: #{encoder_forward.6} parent=5 // pred_region
        %s472 = ssub.s32 %s23, 1
        // Predicated region
        $region73: #{encoder_forward.6} parent=71 // pred_check
          %p473 = pneg %p138
        $region74: #{encoder_forward.6} parent=71 // pred_check_branch
          %475 = sbr.rel (%p473) target = $region76
        $region75: #{encoder_forward.6} parent=71 // pred_region
          %477 = dma.done [#allocation3], 10240
        $region76: #{encoder_forward.6} parent=71 // pred_fallthru
          _
        // Predicated region
        $region77: #{encoder_forward.6} parent=71 // pred_check
          %p478 = pneg %p159
        $region78: #{encoder_forward.6} parent=71 // pred_check_branch
          %480 = sbr.rel (%p478) target = $region80
        $region79: #{encoder_forward.6} parent=71 // pred_region
          %482 = dma.done [#allocation5], 10240
        $region80: #{encoder_forward.6} parent=71 // pred_fallthru
          _
        // Predicated region
        $region81: #{encoder_forward.6} parent=71 // pred_check
          %p483 = pneg %p180
        $region82: #{encoder_forward.6} parent=71 // pred_check_branch
          %485 = sbr.rel (%p483) target = $region84
        $region83: #{encoder_forward.6} parent=71 // pred_region
          %487 = dma.done [#allocation5], 10240
        $region84: #{encoder_forward.6} parent=71 // pred_fallthru
          _
        // Predicated region
        $region85: #{encoder_forward.6} parent=71 // pred_check
          %p488 = pneg %p201
        $region86: #{encoder_forward.6} parent=71 // pred_check_branch
          %490 = sbr.rel (%p488) target = $region88
        $region87: #{encoder_forward.6} parent=71 // pred_region
          %492 = dma.done [#allocation8], 10240
        $region88: #{encoder_forward.6} parent=71 // pred_fallthru
          _
        // Predicated region
        $region89: #{encoder_forward.6} parent=71 // pred_check
          %p493 = pneg %p222
        $region90: #{encoder_forward.6} parent=71 // pred_check_branch
          %495 = sbr.rel (%p493) target = $region92
        $region91: #{encoder_forward.6} parent=71 // pred_region
          %497 = dma.done [#allocation8], 10240
        $region92: #{encoder_forward.6} parent=71 // pred_fallthru
          _
        // Predicated region
        $region93: #{encoder_forward.6} parent=71 // pred_check
          %p498 = pneg %p243
        $region94: #{encoder_forward.6} parent=71 // pred_check_branch
          %500 = sbr.rel (%p498) target = $region96
        $region95: #{encoder_forward.6} parent=71 // pred_region
          %502 = dma.done [#allocation11], 10240
        $region96: #{encoder_forward.6} parent=71 // pred_fallthru
          _
        %p503 = scmp.lt.s32.totalorder %s28, 1
        %s504 = scalar_select %p503, %s28, 1
        %s505 = smul.addr %s504, 2
        %s506 = smul.addr %s505, 8
        %s507 = scalar_lea.vmem %s0, %s506
        %p508 = pneg %p49
        %p509 = pneg %p46
        %p510 = scmp.lt.s32.totalorder %s28, 1
        %s511 = scalar_select %p510, %s28, 1
        %s512 = smul.addr %s511, 2
        %s513 = smul.addr %s512, 8
        %s514 = scalar_lea.vmem %s1, %s513
        %p515 = pneg %p75
        %p516 = pneg %p72
        %p517 = pneg %p96
        %p518 = pneg %p93
        %p519 = pneg %p117
        %p520 = pneg %p114
        %p521 = pneg %p138
        %p522 = pneg %p135
        %p523 = pneg %p159
        %p524 = pneg %p156
        %p525 = pneg %p180
        %p526 = pneg %p177
        %p527 = pneg %p201
        %p528 = pneg %p198
        %p529 = pneg %p222
        %p530 = pneg %p219
        %p531 = pneg %p243
        %p532 = pneg %p240
        %p533 = pneg %p264
        %p534 = pneg %p261
        %p535 = pneg %p285
        %p536 = pneg %p282
        %p537 = pneg %p306
        %p538 = pneg %p303
        %p539 = pneg %p332
        %p540 = pneg %p329
        %p541 = scmp.lt.s32.totalorder %s28, 1
        %s542 = scalar_select %p541, %s28, 1
        %s543 = smul.addr %s542, 2
        %s544 = smul.addr %s543, 8
        %s545 = scalar_lea.vmem %s13, %s544
        %p546 = scmp.lt.s32.totalorder %s28, 1
        %s547 = scalar_select %p546, %s28, 1
        %s548 = smul.addr %s547, 2
        %s549 = smul.addr %s548, 8
        %s550 = scalar_lea.vmem %s0, %s549
        %p551 = scmp.lt.s32.totalorder %s28, 1
        %s552 = scalar_select %p551, %s28, 1
        %s553 = smul.addr %s552, 2
        %s554 = smul.addr %s553, 8
        %s555 = scalar_lea.vmem %s1, %s554
        %p556 = scmp.lt.s32.totalorder %s28, 1
        %s557 = scalar_select %p556, %s28, 1
        %s558 = smul.addr %s557, 2
        %s559 = smul.addr %s558, 8
        %s560 = scalar_lea.vmem %s13, %s559
        %v561 = vld [vmem:[%s550] sm:$0xff]
        %v562 = vld [vmem:[%s550 + $0x8] sm:$0xff]
        %v563 = vld [vmem:[%s555] sm:$0xff]
        %v564 = vld [vmem:[%s555 + $0x8] sm:$0xff]
        %v565 = vld [vmem:[#allocation2] sm:$0xff]
        %v566 = vld [vmem:[#allocation2 + $0x8] sm:$0xff]
        %v567 = vld [vmem:[#allocation2 + $0x10] sm:$0xff]
        %v568 = vld [vmem:[#allocation2 + $0x18] sm:$0xff]
        %v569 = vld [vmem:[#allocation2 + $0x20] sm:$0xff]
        %v570 = vld [vmem:[#allocation2 + $0x28] sm:$0xff]
        %v571 = vld [vmem:[#allocation2 + $0x30] sm:$0xff]
        %v572 = vld [vmem:[#allocation2 + $0x38] sm:$0xff]
        %v573 = vld [vmem:[#allocation2 + $0x40] sm:$0xff]
        %v574 = vld [vmem:[#allocation2 + $0x48] sm:$0xff]
        %v575 = vld [vmem:[#allocation2 + $0x50] sm:$0xff]
        %v576 = vld [vmem:[#allocation2 + $0x58] sm:$0xff]
        %v577 = vld [vmem:[#allocation2 + $0x60] sm:$0xff]
        %v578 = vld [vmem:[#allocation2 + $0x68] sm:$0xff]
        %v579 = vld [vmem:[#allocation2 + $0x70] sm:$0xff]
        %v580 = vld [vmem:[#allocation2 + $0x78] sm:$0xff]
        %v581 = vld [vmem:[#allocation4] sm:$0xff]
        %v582 = vld [vmem:[#allocation4 + $0x8] sm:$0xff]
        %v583 = vld [vmem:[#allocation4 + $0x10] sm:$0xff]
        %v584 = vld [vmem:[#allocation4 + $0x18] sm:$0xff]
        %v585 = vld [vmem:[#allocation4 + $0x20] sm:$0xff]
        %v586 = vld [vmem:[#allocation4 + $0x28] sm:$0xff]
        %v587 = vld [vmem:[#allocation4 + $0x30] sm:$0xff]
        %v588 = vld [vmem:[#allocation4 + $0x38] sm:$0xff]
        %v589 = vld [vmem:[#allocation4 + $0x40] sm:$0xff]
        %v590 = vld [vmem:[#allocation4 + $0x48] sm:$0xff]
        %v591 = vld [vmem:[#allocation4 + $0x50] sm:$0xff]
        %v592 = vld [vmem:[#allocation4 + $0x58] sm:$0xff]
        %v593 = vld [vmem:[#allocation4 + $0x60] sm:$0xff]
        %v594 = vld [vmem:[#allocation4 + $0x68] sm:$0xff]
        %v595 = vld [vmem:[#allocation4 + $0x70] sm:$0xff]
        %v596 = vld [vmem:[#allocation4 + $0x78] sm:$0xff]
        %597 = vmatpush.msra.mxu0 %v596
        %598 = vmatpush.msra.mxu0 %v595
        %599 = vmatpush.msra.mxu0 %v594
        %600 = vmatpush.msra.mxu0 %v593
        %601 = vmatpush.msra.mxu0 %v592
        %602 = vmatpush.msra.mxu0 %v591
        %603 = vmatpush.msra.mxu0 %v590
        %604 = vmatpush.msra.mxu0 %v589
        %605 = vmatpush.msra.mxu0 %v588
        %606 = vmatpush.msra.mxu0 %v587
        %607 = vmatpush.msra.mxu0 %v586
        %608 = vmatpush.msra.mxu0 %v585
        %609 = vmatpush.msra.mxu0 %v584
        %610 = vmatpush.msra.mxu0 %v583
        %611 = vmatpush.msra.mxu0 %v582
        %612 = vmatpush.msra.mxu0 %v581
        %613 = vmatmul.f32.gmra.mxu0 %v563
        %v614 = vpop.f32.mrf.mxu0
        %v615 = vadd.f32 0.0, %v614
        %616 = vmatmul.f32.gmra.mxu0 %v564
        %v617 = vpop.f32.mrf.mxu0
        %v618 = vadd.f32 0.0, %v617
        %619 = vdwg.mxu0
        %620 = vmatpush.msra.mxu0 %v580
        %621 = vmatpush.msra.mxu0 %v579
        %622 = vmatpush.msra.mxu0 %v578
        %623 = vmatpush.msra.mxu0 %v577
        %624 = vmatpush.msra.mxu0 %v576
        %625 = vmatpush.msra.mxu0 %v575
        %626 = vmatpush.msra.mxu0 %v574
        %627 = vmatpush.msra.mxu0 %v573
        %628 = vmatpush.msra.mxu0 %v572
        %629 = vmatpush.msra.mxu0 %v571
        %630 = vmatpush.msra.mxu0 %v570
        %631 = vmatpush.msra.mxu0 %v569
        %632 = vmatpush.msra.mxu0 %v568
        %633 = vmatpush.msra.mxu0 %v567
        %634 = vmatpush.msra.mxu0 %v566
        %635 = vmatpush.msra.mxu0 %v565
        %636 = vmatmul.f32.gmra.mxu0 %v561
        %v637 = vpop.f32.mrf.mxu0
        %v638 = vadd.f32 %v615, %v637
        %639 = vmatmul.f32.gmra.mxu0 %v562
        %v640 = vpop.f32.mrf.mxu0
        %v641 = vadd.f32 %v618, %v640
        %642 = vdwg.mxu0
        %v643 = vld [vmem:[%s10] sm:$0x1]
        %v645 = vperm.slane %v643, 0
        %v647 = vadd.f32 %v638, %v645
        %v648 = vadd.f32 %v641, %v645
        %v649 = vld [vmem:[#allocation6] sm:$0xff]
        %v650 = vld [vmem:[#allocation6 + $0x8] sm:$0xff]
        %v651 = vld [vmem:[#allocation6 + $0x10] sm:$0xff]
        %v652 = vld [vmem:[#allocation6 + $0x18] sm:$0xff]
        %v653 = vld [vmem:[#allocation6 + $0x20] sm:$0xff]
        %v654 = vld [vmem:[#allocation6 + $0x28] sm:$0xff]
        %v655 = vld [vmem:[#allocation6 + $0x30] sm:$0xff]
        %v656 = vld [vmem:[#allocation6 + $0x38] sm:$0xff]
        %v657 = vld [vmem:[#allocation6 + $0x40] sm:$0xff]
        %v658 = vld [vmem:[#allocation6 + $0x48] sm:$0xff]
        %v659 = vld [vmem:[#allocation6 + $0x50] sm:$0xff]
        %v660 = vld [vmem:[#allocation6 + $0x58] sm:$0xff]
        %v661 = vld [vmem:[#allocation6 + $0x60] sm:$0xff]
        %v662 = vld [vmem:[#allocation6 + $0x68] sm:$0xff]
        %v663 = vld [vmem:[#allocation6 + $0x70] sm:$0xff]
        %v664 = vld [vmem:[#allocation6 + $0x78] sm:$0xff]
        %v665 = vld [vmem:[#allocation7] sm:$0xff]
        %v666 = vld [vmem:[#allocation7 + $0x8] sm:$0xff]
        %v667 = vld [vmem:[#allocation7 + $0x10] sm:$0xff]
        %v668 = vld [vmem:[#allocation7 + $0x18] sm:$0xff]
        %v669 = vld [vmem:[#allocation7 + $0x20] sm:$0xff]
        %v670 = vld [vmem:[#allocation7 + $0x28] sm:$0xff]
        %v671 = vld [vmem:[#allocation7 + $0x30] sm:$0xff]
        %v672 = vld [vmem:[#allocation7 + $0x38] sm:$0xff]
        %v673 = vld [vmem:[#allocation7 + $0x40] sm:$0xff]
        %v674 = vld [vmem:[#allocation7 + $0x48] sm:$0xff]
        %v675 = vld [vmem:[#allocation7 + $0x50] sm:$0xff]
        %v676 = vld [vmem:[#allocation7 + $0x58] sm:$0xff]
        %v677 = vld [vmem:[#allocation7 + $0x60] sm:$0xff]
        %v678 = vld [vmem:[#allocation7 + $0x68] sm:$0xff]
        %v679 = vld [vmem:[#allocation7 + $0x70] sm:$0xff]
        %v680 = vld [vmem:[#allocation7 + $0x78] sm:$0xff]
        %681 = vmatpush.msra.mxu0 %v680
        %682 = vmatpush.msra.mxu0 %v679
        %683 = vmatpush.msra.mxu0 %v678
        %684 = vmatpush.msra.mxu0 %v677
        %685 = vmatpush.msra.mxu0 %v676
        %686 = vmatpush.msra.mxu0 %v675
        %687 = vmatpush.msra.mxu0 %v674
        %688 = vmatpush.msra.mxu0 %v673
        %689 = vmatpush.msra.mxu0 %v672
        %690 = vmatpush.msra.mxu0 %v671
        %691 = vmatpush.msra.mxu0 %v670
        %692 = vmatpush.msra.mxu0 %v669
        %693 = vmatpush.msra.mxu0 %v668
        %694 = vmatpush.msra.mxu0 %v667
        %695 = vmatpush.msra.mxu0 %v666
        %696 = vmatpush.msra.mxu0 %v665
        %697 = vmatmul.f32.gmra.mxu0 %v563
        %v698 = vpop.f32.mrf.mxu0
        %v699 = vadd.f32 0.0, %v698
        %700 = vmatmul.f32.gmra.mxu0 %v564
        %v701 = vpop.f32.mrf.mxu0
        %v702 = vadd.f32 0.0, %v701
        %703 = vdwg.mxu0
        %704 = vmatpush.msra.mxu0 %v664
        %705 = vmatpush.msra.mxu0 %v663
        %706 = vmatpush.msra.mxu0 %v662
        %707 = vmatpush.msra.mxu0 %v661
        %708 = vmatpush.msra.mxu0 %v660
        %709 = vmatpush.msra.mxu0 %v659
        %710 = vmatpush.msra.mxu0 %v658
        %711 = vmatpush.msra.mxu0 %v657
        %712 = vmatpush.msra.mxu0 %v656
        %713 = vmatpush.msra.mxu0 %v655
        %714 = vmatpush.msra.mxu0 %v654
        %715 = vmatpush.msra.mxu0 %v653
        %716 = vmatpush.msra.mxu0 %v652
        %717 = vmatpush.msra.mxu0 %v651
        %718 = vmatpush.msra.mxu0 %v650
        %719 = vmatpush.msra.mxu0 %v649
        %720 = vmatmul.f32.gmra.mxu0 %v561
        %v721 = vpop.f32.mrf.mxu0
        %v722 = vadd.f32 %v699, %v721
        %723 = vmatmul.f32.gmra.mxu0 %v562
        %v724 = vpop.f32.mrf.mxu0
        %v725 = vadd.f32 %v702, %v724
        %726 = vdwg.mxu0
        %v727 = vld [vmem:[%s11] sm:$0x1]
        %v729 = vperm.slane %v727, 0
        %v731 = vadd.f32 %v722, %v729
        %v732 = vadd.f32 %v725, %v729
        %v733 = vld [vmem:[#allocation9] sm:$0xff]
        %v734 = vld [vmem:[#allocation9 + $0x8] sm:$0xff]
        %v735 = vld [vmem:[#allocation9 + $0x10] sm:$0xff]
        %v736 = vld [vmem:[#allocation9 + $0x18] sm:$0xff]
        %v737 = vld [vmem:[#allocation9 + $0x20] sm:$0xff]
        %v738 = vld [vmem:[#allocation9 + $0x28] sm:$0xff]
        %v739 = vld [vmem:[#allocation9 + $0x30] sm:$0xff]
        %v740 = vld [vmem:[#allocation9 + $0x38] sm:$0xff]
        %v741 = vld [vmem:[#allocation9 + $0x40] sm:$0xff]
        %v742 = vld [vmem:[#allocation9 + $0x48] sm:$0xff]
        %v743 = vld [vmem:[#allocation9 + $0x50] sm:$0xff]
        %v744 = vld [vmem:[#allocation9 + $0x58] sm:$0xff]
        %v745 = vld [vmem:[#allocation9 + $0x60] sm:$0xff]
        %v746 = vld [vmem:[#allocation9 + $0x68] sm:$0xff]
        %v747 = vld [vmem:[#allocation9 + $0x70] sm:$0xff]
        %v748 = vld [vmem:[#allocation9 + $0x78] sm:$0xff]
        %v749 = vld [vmem:[%s12] sm:$0x1]
        %v751 = vperm.slane %v749, 0
        %753 = vmatpush.msra.mxu0 %v748
        %754 = vmatpush.msra.mxu0 %v747
        %755 = vmatpush.msra.mxu0 %v746
        %756 = vmatpush.msra.mxu0 %v745
        %757 = vmatpush.msra.mxu0 %v744
        %758 = vmatpush.msra.mxu0 %v743
        %759 = vmatpush.msra.mxu0 %v742
        %760 = vmatpush.msra.mxu0 %v741
        %761 = vmatpush.msra.mxu0 %v740
        %762 = vmatpush.msra.mxu0 %v739
        %763 = vmatpush.msra.mxu0 %v738
        %764 = vmatpush.msra.mxu0 %v737
        %765 = vmatpush.msra.mxu0 %v736
        %766 = vmatpush.msra.mxu0 %v735
        %767 = vmatpush.msra.mxu0 %v734
        %768 = vmatpush.msra.mxu0 %v733
        %769 = vmatmul.f32.gmra.mxu0 %v561
        %v770 = vpop.f32.mrf.mxu0
        %v771 = vadd.f32 %v751, %v770
        %772 = vmatmul.f32.gmra.mxu0 %v562
        %v773 = vpop.f32.mrf.mxu0
        %v774 = vadd.f32 %v751, %v773
        %775 = vdwg.mxu0
        %v776 = vld [vmem:[%s2] sm:$0xff]
        %v777 = vld [vmem:[%s2 + $0x8] sm:$0xff]
        %v778 = vld [vmem:[%s3] sm:$0xff]
        %v779 = vld [vmem:[%s3 + $0x8] sm:$0xff]
        %vm780 = vcmask 130048
        %v782 = vsel %vm780, %v776, 0
        %v785 = vsel %vm780, %v777, 0
        %787 = vmatpush.msra.mxu0 0.0
        %788 = vmatpush.msra.mxu0 0.0
        %789 = vmatpush.msra.mxu0 0.0
        %790 = vmatpush.msra.mxu0 0.0
        %791 = vmatpush.msra.mxu0 0.0
        %792 = vmatpush.msra.mxu0 0.0
        %793 = vmatpush.msra.mxu0 0.0
        %794 = vmatpush.msra.mxu0 0.0
        %795 = vmatpush.msra.mxu0 0.0
        %796 = vmatpush.msra.mxu0 0.0
        %797 = vmatpush.msra.mxu0 0.0
        %798 = vmatpush.msra.mxu0 0.0
        %799 = vmatpush.msra.mxu0 0.0
        %800 = vmatpush.msra.mxu0 0.0
        %801 = vmatpush.msra.mxu0 %v562
        %802 = vmatpush.msra.mxu0 %v561
        %803 = vmatmul.f32.gmra.mxu0 %v782
        %v804 = vpop.f32.mrf.mxu0
        %v805 = vadd.f32 0.0, %v804
        %806 = vmatmul.f32.gmra.mxu0 %v785
        %v807 = vpop.f32.mrf.mxu0
        %v808 = vadd.f32 0.0, %v807
        %809 = vdwg.mxu0
        %810 = vmatpush.msra.mxu0 0.0
        %811 = vmatpush.msra.mxu0 0.0
        %812 = vmatpush.msra.mxu0 0.0
        %813 = vmatpush.msra.mxu0 0.0
        %814 = vmatpush.msra.mxu0 0.0
        %815 = vmatpush.msra.mxu0 0.0
        %816 = vmatpush.msra.mxu0 0.0
        %817 = vmatpush.msra.mxu0 0.0
        %818 = vmatpush.msra.mxu0 0.0
        %819 = vmatpush.msra.mxu0 0.0
        %820 = vmatpush.msra.mxu0 0.0
        %821 = vmatpush.msra.mxu0 0.0
        %822 = vmatpush.msra.mxu0 0.0
        %823 = vmatpush.msra.mxu0 0.0
        %824 = vmatpush.msra.mxu0 %v564
        %825 = vmatpush.msra.mxu0 %v563
        %826 = vmatmul.f32.gmra.mxu0 %v782
        %v827 = vpop.f32.mrf.mxu0
        %v828 = vadd.f32 0.0, %v827
        %829 = vmatmul.f32.gmra.mxu0 %v785
        %v830 = vpop.f32.mrf.mxu0
        %v831 = vadd.f32 0.0, %v830
        %832 = vdwg.mxu0
        %s833 = scalar_lea.vmem [#allocation2], 128
        %v834 = vld [vmem:[%s833] sm:$0xff]
        %v835 = vld [vmem:[%s833 + $0x8] sm:$0xff]
        %v836 = vld [vmem:[%s833 + $0x10] sm:$0xff]
        %v837 = vld [vmem:[%s833 + $0x18] sm:$0xff]
        %v838 = vld [vmem:[%s833 + $0x20] sm:$0xff]
        %v839 = vld [vmem:[%s833 + $0x28] sm:$0xff]
        %v840 = vld [vmem:[%s833 + $0x30] sm:$0xff]
        %v841 = vld [vmem:[%s833 + $0x38] sm:$0xff]
        %v842 = vld [vmem:[%s833 + $0x40] sm:$0xff]
        %v843 = vld [vmem:[%s833 + $0x48] sm:$0xff]
        %v844 = vld [vmem:[%s833 + $0x50] sm:$0xff]
        %v845 = vld [vmem:[%s833 + $0x58] sm:$0xff]
        %v846 = vld [vmem:[%s833 + $0x60] sm:$0xff]
        %v847 = vld [vmem:[%s833 + $0x68] sm:$0xff]
        %v848 = vld [vmem:[%s833 + $0x70] sm:$0xff]
        %v849 = vld [vmem:[%s833 + $0x78] sm:$0xff]
        %s850 = scalar_lea.vmem [#allocation4], 128
        %v851 = vld [vmem:[%s850] sm:$0xff]
        %v852 = vld [vmem:[%s850 + $0x8] sm:$0xff]
        %v853 = vld [vmem:[%s850 + $0x10] sm:$0xff]
        %v854 = vld [vmem:[%s850 + $0x18] sm:$0xff]
        %v855 = vld [vmem:[%s850 + $0x20] sm:$0xff]
        %v856 = vld [vmem:[%s850 + $0x28] sm:$0xff]
        %v857 = vld [vmem:[%s850 + $0x30] sm:$0xff]
        %v858 = vld [vmem:[%s850 + $0x38] sm:$0xff]
        %v859 = vld [vmem:[%s850 + $0x40] sm:$0xff]
        %v860 = vld [vmem:[%s850 + $0x48] sm:$0xff]
        %v861 = vld [vmem:[%s850 + $0x50] sm:$0xff]
        %v862 = vld [vmem:[%s850 + $0x58] sm:$0xff]
        %v863 = vld [vmem:[%s850 + $0x60] sm:$0xff]
        %v864 = vld [vmem:[%s850 + $0x68] sm:$0xff]
        %v865 = vld [vmem:[%s850 + $0x70] sm:$0xff]
        %v866 = vld [vmem:[%s850 + $0x78] sm:$0xff]
        %867 = vmatpush.msra.mxu0 %v866
        %868 = vmatpush.msra.mxu0 %v865
        %869 = vmatpush.msra.mxu0 %v864
        %870 = vmatpush.msra.mxu0 %v863
        %871 = vmatpush.msra.mxu0 %v862
        %872 = vmatpush.msra.mxu0 %v861
        %873 = vmatpush.msra.mxu0 %v860
        %874 = vmatpush.msra.mxu0 %v859
        %875 = vmatpush.msra.mxu0 %v858
        %876 = vmatpush.msra.mxu0 %v857
        %877 = vmatpush.msra.mxu0 %v856
        %878 = vmatpush.msra.mxu0 %v855
        %879 = vmatpush.msra.mxu0 %v854
        %880 = vmatpush.msra.mxu0 %v853
        %881 = vmatpush.msra.mxu0 %v852
        %882 = vmatpush.msra.mxu0 %v851
        %883 = vmatmul.f32.gmra.mxu0 %v828
        %v884 = vpop.f32.mrf.mxu0
        %v885 = vadd.f32 0.0, %v884
        %886 = vmatmul.f32.gmra.mxu0 %v831
        %v887 = vpop.f32.mrf.mxu0
        %v888 = vadd.f32 0.0, %v887
        %889 = vdwg.mxu0
        %890 = vmatpush.msra.mxu0 %v849
        %891 = vmatpush.msra.mxu0 %v848
        %892 = vmatpush.msra.mxu0 %v847
        %893 = vmatpush.msra.mxu0 %v846
        %894 = vmatpush.msra.mxu0 %v845
        %895 = vmatpush.msra.mxu0 %v844
        %896 = vmatpush.msra.mxu0 %v843
        %897 = vmatpush.msra.mxu0 %v842
        %898 = vmatpush.msra.mxu0 %v841
        %899 = vmatpush.msra.mxu0 %v840
        %900 = vmatpush.msra.mxu0 %v839
        %901 = vmatpush.msra.mxu0 %v838
        %902 = vmatpush.msra.mxu0 %v837
        %903 = vmatpush.msra.mxu0 %v836
        %904 = vmatpush.msra.mxu0 %v835
        %905 = vmatpush.msra.mxu0 %v834
        %906 = vmatmul.f32.gmra.mxu0 %v805
        %v907 = vpop.f32.mrf.mxu0
        %v908 = vadd.f32 %v885, %v907
        %909 = vmatmul.f32.gmra.mxu0 %v808
        %v910 = vpop.f32.mrf.mxu0
        %v911 = vadd.f32 %v888, %v910
        %912 = vdwg.mxu0
        %v913 = vadd.f32 %v647, %v908
        %v914 = vadd.f32 %v648, %v911
        %s915 = scalar_lea.vmem [#allocation6], 128
        %v916 = vld [vmem:[%s915] sm:$0xff]
        %v917 = vld [vmem:[%s915 + $0x8] sm:$0xff]
        %v918 = vld [vmem:[%s915 + $0x10] sm:$0xff]
        %v919 = vld [vmem:[%s915 + $0x18] sm:$0xff]
        %v920 = vld [vmem:[%s915 + $0x20] sm:$0xff]
        %v921 = vld [vmem:[%s915 + $0x28] sm:$0xff]
        %v922 = vld [vmem:[%s915 + $0x30] sm:$0xff]
        %v923 = vld [vmem:[%s915 + $0x38] sm:$0xff]
        %v924 = vld [vmem:[%s915 + $0x40] sm:$0xff]
        %v925 = vld [vmem:[%s915 + $0x48] sm:$0xff]
        %v926 = vld [vmem:[%s915 + $0x50] sm:$0xff]
        %v927 = vld [vmem:[%s915 + $0x58] sm:$0xff]
        %v928 = vld [vmem:[%s915 + $0x60] sm:$0xff]
        %v929 = vld [vmem:[%s915 + $0x68] sm:$0xff]
        %v930 = vld [vmem:[%s915 + $0x70] sm:$0xff]
        %v931 = vld [vmem:[%s915 + $0x78] sm:$0xff]
        %s932 = scalar_lea.vmem [#allocation7], 128
        %v933 = vld [vmem:[%s932] sm:$0xff]
        %v934 = vld [vmem:[%s932 + $0x8] sm:$0xff]
        %v935 = vld [vmem:[%s932 + $0x10] sm:$0xff]
        %v936 = vld [vmem:[%s932 + $0x18] sm:$0xff]
        %v937 = vld [vmem:[%s932 + $0x20] sm:$0xff]
        %v938 = vld [vmem:[%s932 + $0x28] sm:$0xff]
        %v939 = vld [vmem:[%s932 + $0x30] sm:$0xff]
        %v940 = vld [vmem:[%s932 + $0x38] sm:$0xff]
        %v941 = vld [vmem:[%s932 + $0x40] sm:$0xff]
        %v942 = vld [vmem:[%s932 + $0x48] sm:$0xff]
        %v943 = vld [vmem:[%s932 + $0x50] sm:$0xff]
        %v944 = vld [vmem:[%s932 + $0x58] sm:$0xff]
        %v945 = vld [vmem:[%s932 + $0x60] sm:$0xff]
        %v946 = vld [vmem:[%s932 + $0x68] sm:$0xff]
        %v947 = vld [vmem:[%s932 + $0x70] sm:$0xff]
        %v948 = vld [vmem:[%s932 + $0x78] sm:$0xff]
        %949 = vmatpush.msra.mxu0 %v948
        %950 = vmatpush.msra.mxu0 %v947
        %951 = vmatpush.msra.mxu0 %v946
        %952 = vmatpush.msra.mxu0 %v945
        %953 = vmatpush.msra.mxu0 %v944
        %954 = vmatpush.msra.mxu0 %v943
        %955 = vmatpush.msra.mxu0 %v942
        %956 = vmatpush.msra.mxu0 %v941
        %957 = vmatpush.msra.mxu0 %v940
        %958 = vmatpush.msra.mxu0 %v939
        %959 = vmatpush.msra.mxu0 %v938
        %960 = vmatpush.msra.mxu0 %v937
        %961 = vmatpush.msra.mxu0 %v936
        %962 = vmatpush.msra.mxu0 %v935
        %963 = vmatpush.msra.mxu0 %v934
        %964 = vmatpush.msra.mxu0 %v933
        %965 = vmatmul.f32.gmra.mxu0 %v828
        %v966 = vpop.f32.mrf.mxu0
        %v967 = vadd.f32 0.0, %v966
        %968 = vmatmul.f32.gmra.mxu0 %v831
        %v969 = vpop.f32.mrf.mxu0
        %v970 = vadd.f32 0.0, %v969
        %971 = vdwg.mxu0
        %972 = vmatpush.msra.mxu0 %v931
        %973 = vmatpush.msra.mxu0 %v930
        %974 = vmatpush.msra.mxu0 %v929
        %975 = vmatpush.msra.mxu0 %v928
        %976 = vmatpush.msra.mxu0 %v927
        %977 = vmatpush.msra.mxu0 %v926
        %978 = vmatpush.msra.mxu0 %v925
        %979 = vmatpush.msra.mxu0 %v924
        %980 = vmatpush.msra.mxu0 %v923
        %981 = vmatpush.msra.mxu0 %v922
        %982 = vmatpush.msra.mxu0 %v921
        %983 = vmatpush.msra.mxu0 %v920
        %984 = vmatpush.msra.mxu0 %v919
        %985 = vmatpush.msra.mxu0 %v918
        %986 = vmatpush.msra.mxu0 %v917
        %987 = vmatpush.msra.mxu0 %v916
        %988 = vmatmul.f32.gmra.mxu0 %v805
        %v989 = vpop.f32.mrf.mxu0
        %v990 = vadd.f32 %v967, %v989
        %991 = vmatmul.f32.gmra.mxu0 %v808
        %v992 = vpop.f32.mrf.mxu0
        %v993 = vadd.f32 %v970, %v992
        %994 = vdwg.mxu0
        %v995 = vadd.f32 %v731, %v990
        %v996 = vadd.f32 %v732, %v993
        %s997 = scalar_lea.vmem [#allocation9], 128
        %v998 = vld [vmem:[%s997] sm:$0xff]
        %v999 = vld [vmem:[%s997 + $0x8] sm:$0xff]
        %v1000 = vld [vmem:[%s997 + $0x10] sm:$0xff]
        %v1001 = vld [vmem:[%s997 + $0x18] sm:$0xff]
        %v1002 = vld [vmem:[%s997 + $0x20] sm:$0xff]
        %v1003 = vld [vmem:[%s997 + $0x28] sm:$0xff]
        %v1004 = vld [vmem:[%s997 + $0x30] sm:$0xff]
        %v1005 = vld [vmem:[%s997 + $0x38] sm:$0xff]
        %v1006 = vld [vmem:[%s997 + $0x40] sm:$0xff]
        %v1007 = vld [vmem:[%s997 + $0x48] sm:$0xff]
        %v1008 = vld [vmem:[%s997 + $0x50] sm:$0xff]
        %v1009 = vld [vmem:[%s997 + $0x58] sm:$0xff]
        %v1010 = vld [vmem:[%s997 + $0x60] sm:$0xff]
        %v1011 = vld [vmem:[%s997 + $0x68] sm:$0xff]
        %v1012 = vld [vmem:[%s997 + $0x70] sm:$0xff]
        %v1013 = vld [vmem:[%s997 + $0x78] sm:$0xff]
        %1014 = vmatpush.msra.mxu0 %v1013
        %1015 = vmatpush.msra.mxu0 %v1012
        %1016 = vmatpush.msra.mxu0 %v1011
        %1017 = vmatpush.msra.mxu0 %v1010
        %1018 = vmatpush.msra.mxu0 %v1009
        %1019 = vmatpush.msra.mxu0 %v1008
        %1020 = vmatpush.msra.mxu0 %v1007
        %1021 = vmatpush.msra.mxu0 %v1006
        %1022 = vmatpush.msra.mxu0 %v1005
        %1023 = vmatpush.msra.mxu0 %v1004
        %1024 = vmatpush.msra.mxu0 %v1003
        %1025 = vmatpush.msra.mxu0 %v1002
        %1026 = vmatpush.msra.mxu0 %v1001
        %1027 = vmatpush.msra.mxu0 %v1000
        %1028 = vmatpush.msra.mxu0 %v999
        %1029 = vmatpush.msra.mxu0 %v998
        %1030 = vmatmul.f32.gmra.mxu0 %v805
        %v1031 = vpop.f32.mrf.mxu0
        %v1032 = vadd.f32 0.0, %v1031
        %1033 = vmatmul.f32.gmra.mxu0 %v808
        %v1034 = vpop.f32.mrf.mxu0
        %v1035 = vadd.f32 0.0, %v1034
        %1036 = vdwg.mxu0
        %v1037 = vadd.f32 %v771, %v1032
        %v1038 = vadd.f32 %v774, %v1035
        %v1040 = vsel %vm780, %v778, 0
        %v1043 = vsel %vm780, %v779, 0
        %1045 = vmatpush.msra.mxu0 0.0
        %1046 = vmatpush.msra.mxu0 0.0
        %1047 = vmatpush.msra.mxu0 0.0
        %1048 = vmatpush.msra.mxu0 0.0
        %1049 = vmatpush.msra.mxu0 0.0
        %1050 = vmatpush.msra.mxu0 0.0
        %1051 = vmatpush.msra.mxu0 0.0
        %1052 = vmatpush.msra.mxu0 0.0
        %1053 = vmatpush.msra.mxu0 0.0
        %1054 = vmatpush.msra.mxu0 0.0
        %1055 = vmatpush.msra.mxu0 0.0
        %1056 = vmatpush.msra.mxu0 0.0
        %1057 = vmatpush.msra.mxu0 0.0
        %1058 = vmatpush.msra.mxu0 0.0
        %1059 = vmatpush.msra.mxu0 %v808
        %1060 = vmatpush.msra.mxu0 %v805
        %1061 = vmatmul.f32.gmra.mxu0 %v1040
        %v1062 = vpop.f32.mrf.mxu0
        %v1063 = vadd.f32 0.0, %v1062
        %1064 = vmatmul.f32.gmra.mxu0 %v1043
        %v1065 = vpop.f32.mrf.mxu0
        %v1066 = vadd.f32 0.0, %v1065
        %1067 = vdwg.mxu0
        %v1068 = vsub.f32 %v1063, %v561
        %v1069 = vsub.f32 %v1066, %v562
        %1070 = vmatpush.msra.mxu0 0.0
        %1071 = vmatpush.msra.mxu0 0.0
        %1072 = vmatpush.msra.mxu0 0.0
        %1073 = vmatpush.msra.mxu0 0.0
        %1074 = vmatpush.msra.mxu0 0.0
        %1075 = vmatpush.msra.mxu0 0.0
        %1076 = vmatpush.msra.mxu0 0.0
        %1077 = vmatpush.msra.mxu0 0.0
        %1078 = vmatpush.msra.mxu0 0.0
        %1079 = vmatpush.msra.mxu0 0.0
        %1080 = vmatpush.msra.mxu0 0.0
        %1081 = vmatpush.msra.mxu0 0.0
        %1082 = vmatpush.msra.mxu0 0.0
        %1083 = vmatpush.msra.mxu0 0.0
        %1084 = vmatpush.msra.mxu0 %v831
        %1085 = vmatpush.msra.mxu0 %v828
        %1086 = vmatmul.f32.gmra.mxu0 %v1040
        %v1087 = vpop.f32.mrf.mxu0
        %v1088 = vadd.f32 0.0, %v1087
        %1089 = vmatmul.f32.gmra.mxu0 %v1043
        %v1090 = vpop.f32.mrf.mxu0
        %v1091 = vadd.f32 0.0, %v1090
        %1092 = vdwg.mxu0
        %v1093 = vsub.f32 %v1088, %v563
        %v1094 = vsub.f32 %v1091, %v564
        %s1095 = scalar_lea.vmem [#allocation2], 256
        %v1096 = vld [vmem:[%s1095] sm:$0xff]
        %v1097 = vld [vmem:[%s1095 + $0x8] sm:$0xff]
        %v1098 = vld [vmem:[%s1095 + $0x10] sm:$0xff]
        %v1099 = vld [vmem:[%s1095 + $0x18] sm:$0xff]
        %v1100 = vld [vmem:[%s1095 + $0x20] sm:$0xff]
        %v1101 = vld [vmem:[%s1095 + $0x28] sm:$0xff]
        %v1102 = vld [vmem:[%s1095 + $0x30] sm:$0xff]
        %v1103 = vld [vmem:[%s1095 + $0x38] sm:$0xff]
        %v1104 = vld [vmem:[%s1095 + $0x40] sm:$0xff]
        %v1105 = vld [vmem:[%s1095 + $0x48] sm:$0xff]
        %v1106 = vld [vmem:[%s1095 + $0x50] sm:$0xff]
        %v1107 = vld [vmem:[%s1095 + $0x58] sm:$0xff]
        %v1108 = vld [vmem:[%s1095 + $0x60] sm:$0xff]
        %v1109 = vld [vmem:[%s1095 + $0x68] sm:$0xff]
        %v1110 = vld [vmem:[%s1095 + $0x70] sm:$0xff]
        %v1111 = vld [vmem:[%s1095 + $0x78] sm:$0xff]
        %s1112 = scalar_lea.vmem [#allocation4], 256
        %v1113 = vld [vmem:[%s1112] sm:$0xff]
        %v1114 = vld [vmem:[%s1112 + $0x8] sm:$0xff]
        %v1115 = vld [vmem:[%s1112 + $0x10] sm:$0xff]
        %v1116 = vld [vmem:[%s1112 + $0x18] sm:$0xff]
        %v1117 = vld [vmem:[%s1112 + $0x20] sm:$0xff]
        %v1118 = vld [vmem:[%s1112 + $0x28] sm:$0xff]
        %v1119 = vld [vmem:[%s1112 + $0x30] sm:$0xff]
        %v1120 = vld [vmem:[%s1112 + $0x38] sm:$0xff]
        %v1121 = vld [vmem:[%s1112 + $0x40] sm:$0xff]
        %v1122 = vld [vmem:[%s1112 + $0x48] sm:$0xff]
        %v1123 = vld [vmem:[%s1112 + $0x50] sm:$0xff]
        %v1124 = vld [vmem:[%s1112 + $0x58] sm:$0xff]
        %v1125 = vld [vmem:[%s1112 + $0x60] sm:$0xff]
        %v1126 = vld [vmem:[%s1112 + $0x68] sm:$0xff]
        %v1127 = vld [vmem:[%s1112 + $0x70] sm:$0xff]
        %v1128 = vld [vmem:[%s1112 + $0x78] sm:$0xff]
        %1129 = vmatpush.msra.mxu0 %v1128
        %1130 = vmatpush.msra.mxu0 %v1127
        %1131 = vmatpush.msra.mxu0 %v1126
        %1132 = vmatpush.msra.mxu0 %v1125
        %1133 = vmatpush.msra.mxu0 %v1124
        %1134 = vmatpush.msra.mxu0 %v1123
        %1135 = vmatpush.msra.mxu0 %v1122
        %1136 = vmatpush.msra.mxu0 %v1121
        %1137 = vmatpush.msra.mxu0 %v1120
        %1138 = vmatpush.msra.mxu0 %v1119
        %1139 = vmatpush.msra.mxu0 %v1118
        %1140 = vmatpush.msra.mxu0 %v1117
        %1141 = vmatpush.msra.mxu0 %v1116
        %1142 = vmatpush.msra.mxu0 %v1115
        %1143 = vmatpush.msra.mxu0 %v1114
        %1144 = vmatpush.msra.mxu0 %v1113
        %1145 = vmatmul.f32.gmra.mxu0 %v1093
        %v1146 = vpop.f32.mrf.mxu0
        %v1147 = vadd.f32 0.0, %v1146
        %1148 = vmatmul.f32.gmra.mxu0 %v1094
        %v1149 = vpop.f32.mrf.mxu0
        %v1150 = vadd.f32 0.0, %v1149
        %1151 = vdwg.mxu0
        %1152 = vmatpush.msra.mxu0 %v1111
        %1153 = vmatpush.msra.mxu0 %v1110
        %1154 = vmatpush.msra.mxu0 %v1109
        %1155 = vmatpush.msra.mxu0 %v1108
        %1156 = vmatpush.msra.mxu0 %v1107
        %1157 = vmatpush.msra.mxu0 %v1106
        %1158 = vmatpush.msra.mxu0 %v1105
        %1159 = vmatpush.msra.mxu0 %v1104
        %1160 = vmatpush.msra.mxu0 %v1103
        %1161 = vmatpush.msra.mxu0 %v1102
        %1162 = vmatpush.msra.mxu0 %v1101
        %1163 = vmatpush.msra.mxu0 %v1100
        %1164 = vmatpush.msra.mxu0 %v1099
        %1165 = vmatpush.msra.mxu0 %v1098
        %1166 = vmatpush.msra.mxu0 %v1097
        %1167 = vmatpush.msra.mxu0 %v1096
        %1168 = vmatmul.f32.gmra.mxu0 %v1068
        %v1169 = vpop.f32.mrf.mxu0
        %v1170 = vadd.f32 %v1147, %v1169
        %1171 = vmatmul.f32.gmra.mxu0 %v1069
        %v1172 = vpop.f32.mrf.mxu0
        %v1173 = vadd.f32 %v1150, %v1172
        %1174 = vdwg.mxu0
        %v1175 = vadd.f32 %v913, %v1170
        %v1176 = vadd.f32 %v914, %v1173
        %s1177 = scalar_lea.vmem [#allocation6], 256
        %v1178 = vld [vmem:[%s1177] sm:$0xff]
        %v1179 = vld [vmem:[%s1177 + $0x8] sm:$0xff]
        %v1180 = vld [vmem:[%s1177 + $0x10] sm:$0xff]
        %v1181 = vld [vmem:[%s1177 + $0x18] sm:$0xff]
        %v1182 = vld [vmem:[%s1177 + $0x20] sm:$0xff]
        %v1183 = vld [vmem:[%s1177 + $0x28] sm:$0xff]
        %v1184 = vld [vmem:[%s1177 + $0x30] sm:$0xff]
        %v1185 = vld [vmem:[%s1177 + $0x38] sm:$0xff]
        %v1186 = vld [vmem:[%s1177 + $0x40] sm:$0xff]
        %v1187 = vld [vmem:[%s1177 + $0x48] sm:$0xff]
        %v1188 = vld [vmem:[%s1177 + $0x50] sm:$0xff]
        %v1189 = vld [vmem:[%s1177 + $0x58] sm:$0xff]
        %v1190 = vld [vmem:[%s1177 + $0x60] sm:$0xff]
        %v1191 = vld [vmem:[%s1177 + $0x68] sm:$0xff]
        %v1192 = vld [vmem:[%s1177 + $0x70] sm:$0xff]
        %v1193 = vld [vmem:[%s1177 + $0x78] sm:$0xff]
        %s1194 = scalar_lea.vmem [#allocation7], 256
        %v1195 = vld [vmem:[%s1194] sm:$0xff]
        %v1196 = vld [vmem:[%s1194 + $0x8] sm:$0xff]
        %v1197 = vld [vmem:[%s1194 + $0x10] sm:$0xff]
        %v1198 = vld [vmem:[%s1194 + $0x18] sm:$0xff]
        %v1199 = vld [vmem:[%s1194 + $0x20] sm:$0xff]
        %v1200 = vld [vmem:[%s1194 + $0x28] sm:$0xff]
        %v1201 = vld [vmem:[%s1194 + $0x30] sm:$0xff]
        %v1202 = vld [vmem:[%s1194 + $0x38] sm:$0xff]
        %v1203 = vld [vmem:[%s1194 + $0x40] sm:$0xff]
        %v1204 = vld [vmem:[%s1194 + $0x48] sm:$0xff]
        %v1205 = vld [vmem:[%s1194 + $0x50] sm:$0xff]
        %v1206 = vld [vmem:[%s1194 + $0x58] sm:$0xff]
        %v1207 = vld [vmem:[%s1194 + $0x60] sm:$0xff]
        %v1208 = vld [vmem:[%s1194 + $0x68] sm:$0xff]
        %v1209 = vld [vmem:[%s1194 + $0x70] sm:$0xff]
        %v1210 = vld [vmem:[%s1194 + $0x78] sm:$0xff]
        %1211 = vmatpush.msra.mxu0 %v1210
        %1212 = vmatpush.msra.mxu0 %v1209
        %1213 = vmatpush.msra.mxu0 %v1208
        %1214 = vmatpush.msra.mxu0 %v1207
        %1215 = vmatpush.msra.mxu0 %v1206
        %1216 = vmatpush.msra.mxu0 %v1205
        %1217 = vmatpush.msra.mxu0 %v1204
        %1218 = vmatpush.msra.mxu0 %v1203
        %1219 = vmatpush.msra.mxu0 %v1202
        %1220 = vmatpush.msra.mxu0 %v1201
        %1221 = vmatpush.msra.mxu0 %v1200
        %1222 = vmatpush.msra.mxu0 %v1199
        %1223 = vmatpush.msra.mxu0 %v1198
        %1224 = vmatpush.msra.mxu0 %v1197
        %1225 = vmatpush.msra.mxu0 %v1196
        %1226 = vmatpush.msra.mxu0 %v1195
        %1227 = vmatmul.f32.gmra.mxu0 %v1093
        %v1228 = vpop.f32.mrf.mxu0
        %v1229 = vadd.f32 0.0, %v1228
        %1230 = vmatmul.f32.gmra.mxu0 %v1094
        %v1231 = vpop.f32.mrf.mxu0
        %v1232 = vadd.f32 0.0, %v1231
        %1233 = vdwg.mxu0
        %1234 = vmatpush.msra.mxu0 %v1193
        %1235 = vmatpush.msra.mxu0 %v1192
        %1236 = vmatpush.msra.mxu0 %v1191
        %1237 = vmatpush.msra.mxu0 %v1190
        %1238 = vmatpush.msra.mxu0 %v1189
        %1239 = vmatpush.msra.mxu0 %v1188
        %1240 = vmatpush.msra.mxu0 %v1187
        %1241 = vmatpush.msra.mxu0 %v1186
        %1242 = vmatpush.msra.mxu0 %v1185
        %1243 = vmatpush.msra.mxu0 %v1184
        %1244 = vmatpush.msra.mxu0 %v1183
        %1245 = vmatpush.msra.mxu0 %v1182
        %1246 = vmatpush.msra.mxu0 %v1181
        %1247 = vmatpush.msra.mxu0 %v1180
        %1248 = vmatpush.msra.mxu0 %v1179
        %1249 = vmatpush.msra.mxu0 %v1178
        %1250 = vmatmul.f32.gmra.mxu0 %v1068
        %v1251 = vpop.f32.mrf.mxu0
        %v1252 = vadd.f32 %v1229, %v1251
        %1253 = vmatmul.f32.gmra.mxu0 %v1069
        %v1254 = vpop.f32.mrf.mxu0
        %v1255 = vadd.f32 %v1232, %v1254
        %1256 = vdwg.mxu0
        %v1257 = vadd.f32 %v995, %v1252
        %v1258 = vadd.f32 %v996, %v1255
        %s1259 = scalar_lea.vmem [#allocation9], 256
        %v1260 = vld [vmem:[%s1259] sm:$0xff]
        %v1261 = vld [vmem:[%s1259 + $0x8] sm:$0xff]
        %v1262 = vld [vmem:[%s1259 + $0x10] sm:$0xff]
        %v1263 = vld [vmem:[%s1259 + $0x18] sm:$0xff]
        %v1264 = vld [vmem:[%s1259 + $0x20] sm:$0xff]
        %v1265 = vld [vmem:[%s1259 + $0x28] sm:$0xff]
        %v1266 = vld [vmem:[%s1259 + $0x30] sm:$0xff]
        %v1267 = vld [vmem:[%s1259 + $0x38] sm:$0xff]
        %v1268 = vld [vmem:[%s1259 + $0x40] sm:$0xff]
        %v1269 = vld [vmem:[%s1259 + $0x48] sm:$0xff]
        %v1270 = vld [vmem:[%s1259 + $0x50] sm:$0xff]
        %v1271 = vld [vmem:[%s1259 + $0x58] sm:$0xff]
        %v1272 = vld [vmem:[%s1259 + $0x60] sm:$0xff]
        %v1273 = vld [vmem:[%s1259 + $0x68] sm:$0xff]
        %v1274 = vld [vmem:[%s1259 + $0x70] sm:$0xff]
        %v1275 = vld [vmem:[%s1259 + $0x78] sm:$0xff]
        %1276 = vmatpush.msra.mxu0 %v1275
        %1277 = vmatpush.msra.mxu0 %v1274
        %1278 = vmatpush.msra.mxu0 %v1273
        %1279 = vmatpush.msra.mxu0 %v1272
        %1280 = vmatpush.msra.mxu0 %v1271
        %1281 = vmatpush.msra.mxu0 %v1270
        %1282 = vmatpush.msra.mxu0 %v1269
        %1283 = vmatpush.msra.mxu0 %v1268
        %1284 = vmatpush.msra.mxu0 %v1267
        %1285 = vmatpush.msra.mxu0 %v1266
        %1286 = vmatpush.msra.mxu0 %v1265
        %1287 = vmatpush.msra.mxu0 %v1264
        %1288 = vmatpush.msra.mxu0 %v1263
        %1289 = vmatpush.msra.mxu0 %v1262
        %1290 = vmatpush.msra.mxu0 %v1261
        %1291 = vmatpush.msra.mxu0 %v1260
        %1292 = vmatmul.f32.gmra.mxu0 %v1068
        %v1293 = vpop.f32.mrf.mxu0
        %v1294 = vadd.f32 0.0, %v1293
        %1295 = vmatmul.f32.gmra.mxu0 %v1069
        %v1296 = vpop.f32.mrf.mxu0
        %v1297 = vadd.f32 0.0, %v1296
        %1298 = vdwg.mxu0
        %v1299 = vadd.f32 %v1037, %v1294
        %v1300 = vadd.f32 %v1038, %v1297
        %s1301 = scalar_lea.vmem %s2, 16
        %v1302 = vld [vmem:[%s1301] sm:$0xff]
        %v1303 = vld [vmem:[%s1301 + $0x8] sm:$0xff]
        %s1304 = scalar_lea.vmem %s3, 16
        %v1305 = vld [vmem:[%s1304] sm:$0xff]
        %v1306 = vld [vmem:[%s1304 + $0x8] sm:$0xff]
        %v1308 = vsel %vm780, %v1302, 0
        %v1311 = vsel %vm780, %v1303, 0
        %1313 = vmatpush.msra.mxu0 0.0
        %1314 = vmatpush.msra.mxu0 0.0
        %1315 = vmatpush.msra.mxu0 0.0
        %1316 = vmatpush.msra.mxu0 0.0
        %1317 = vmatpush.msra.mxu0 0.0
        %1318 = vmatpush.msra.mxu0 0.0
        %1319 = vmatpush.msra.mxu0 0.0
        %1320 = vmatpush.msra.mxu0 0.0
        %1321 = vmatpush.msra.mxu0 0.0
        %1322 = vmatpush.msra.mxu0 0.0
        %1323 = vmatpush.msra.mxu0 0.0
        %1324 = vmatpush.msra.mxu0 0.0
        %1325 = vmatpush.msra.mxu0 0.0
        %1326 = vmatpush.msra.mxu0 0.0
        %1327 = vmatpush.msra.mxu0 %v562
        %1328 = vmatpush.msra.mxu0 %v561
        %1329 = vmatmul.f32.gmra.mxu0 %v1308
        %v1330 = vpop.f32.mrf.mxu0
        %v1331 = vadd.f32 0.0, %v1330
        %1332 = vmatmul.f32.gmra.mxu0 %v1311
        %v1333 = vpop.f32.mrf.mxu0
        %v1334 = vadd.f32 0.0, %v1333
        %1335 = vdwg.mxu0
        %1336 = vmatpush.msra.mxu0 0.0
        %1337 = vmatpush.msra.mxu0 0.0
        %1338 = vmatpush.msra.mxu0 0.0
        %1339 = vmatpush.msra.mxu0 0.0
        %1340 = vmatpush.msra.mxu0 0.0
        %1341 = vmatpush.msra.mxu0 0.0
        %1342 = vmatpush.msra.mxu0 0.0
        %1343 = vmatpush.msra.mxu0 0.0
        %1344 = vmatpush.msra.mxu0 0.0
        %1345 = vmatpush.msra.mxu0 0.0
        %1346 = vmatpush.msra.mxu0 0.0
        %1347 = vmatpush.msra.mxu0 0.0
        %1348 = vmatpush.msra.mxu0 0.0
        %1349 = vmatpush.msra.mxu0 0.0
        %1350 = vmatpush.msra.mxu0 %v564
        %1351 = vmatpush.msra.mxu0 %v563
        %1352 = vmatmul.f32.gmra.mxu0 %v1308
        %v1353 = vpop.f32.mrf.mxu0
        %v1354 = vadd.f32 0.0, %v1353
        %1355 = vmatmul.f32.gmra.mxu0 %v1311
        %v1356 = vpop.f32.mrf.mxu0
        %v1357 = vadd.f32 0.0, %v1356
        %1358 = vdwg.mxu0
        %s1359 = scalar_lea.vmem [#allocation2], 384
        %v1360 = vld [vmem:[%s1359] sm:$0xff]
        %v1361 = vld [vmem:[%s1359 + $0x8] sm:$0xff]
        %v1362 = vld [vmem:[%s1359 + $0x10] sm:$0xff]
        %v1363 = vld [vmem:[%s1359 + $0x18] sm:$0xff]
        %v1364 = vld [vmem:[%s1359 + $0x20] sm:$0xff]
        %v1365 = vld [vmem:[%s1359 + $0x28] sm:$0xff]
        %v1366 = vld [vmem:[%s1359 + $0x30] sm:$0xff]
        %v1367 = vld [vmem:[%s1359 + $0x38] sm:$0xff]
        %v1368 = vld [vmem:[%s1359 + $0x40] sm:$0xff]
        %v1369 = vld [vmem:[%s1359 + $0x48] sm:$0xff]
        %v1370 = vld [vmem:[%s1359 + $0x50] sm:$0xff]
        %v1371 = vld [vmem:[%s1359 + $0x58] sm:$0xff]
        %v1372 = vld [vmem:[%s1359 + $0x60] sm:$0xff]
        %v1373 = vld [vmem:[%s1359 + $0x68] sm:$0xff]
        %v1374 = vld [vmem:[%s1359 + $0x70] sm:$0xff]
        %v1375 = vld [vmem:[%s1359 + $0x78] sm:$0xff]
        %s1376 = scalar_lea.vmem [#allocation4], 384
        %v1377 = vld [vmem:[%s1376] sm:$0xff]
        %v1378 = vld [vmem:[%s1376 + $0x8] sm:$0xff]
        %v1379 = vld [vmem:[%s1376 + $0x10] sm:$0xff]
        %v1380 = vld [vmem:[%s1376 + $0x18] sm:$0xff]
        %v1381 = vld [vmem:[%s1376 + $0x20] sm:$0xff]
        %v1382 = vld [vmem:[%s1376 + $0x28] sm:$0xff]
        %v1383 = vld [vmem:[%s1376 + $0x30] sm:$0xff]
        %v1384 = vld [vmem:[%s1376 + $0x38] sm:$0xff]
        %v1385 = vld [vmem:[%s1376 + $0x40] sm:$0xff]
        %v1386 = vld [vmem:[%s1376 + $0x48] sm:$0xff]
        %v1387 = vld [vmem:[%s1376 + $0x50] sm:$0xff]
        %v1388 = vld [vmem:[%s1376 + $0x58] sm:$0xff]
        %v1389 = vld [vmem:[%s1376 + $0x60] sm:$0xff]
        %v1390 = vld [vmem:[%s1376 + $0x68] sm:$0xff]
        %v1391 = vld [vmem:[%s1376 + $0x70] sm:$0xff]
        %v1392 = vld [vmem:[%s1376 + $0x78] sm:$0xff]
        %1393 = vmatpush.msra.mxu0 %v1392
        %1394 = vmatpush.msra.mxu0 %v1391
        %1395 = vmatpush.msra.mxu0 %v1390
        %1396 = vmatpush.msra.mxu0 %v1389
        %1397 = vmatpush.msra.mxu0 %v1388
        %1398 = vmatpush.msra.mxu0 %v1387
        %1399 = vmatpush.msra.mxu0 %v1386
        %1400 = vmatpush.msra.mxu0 %v1385
        %1401 = vmatpush.msra.mxu0 %v1384
        %1402 = vmatpush.msra.mxu0 %v1383
        %1403 = vmatpush.msra.mxu0 %v1382
        %1404 = vmatpush.msra.mxu0 %v1381
        %1405 = vmatpush.msra.mxu0 %v1380
        %1406 = vmatpush.msra.mxu0 %v1379
        %1407 = vmatpush.msra.mxu0 %v1378
        %1408 = vmatpush.msra.mxu0 %v1377
        %1409 = vmatmul.f32.gmra.mxu0 %v1354
        %v1410 = vpop.f32.mrf.mxu0
        %v1411 = vadd.f32 0.0, %v1410
        %1412 = vmatmul.f32.gmra.mxu0 %v1357
        %v1413 = vpop.f32.mrf.mxu0
        %v1414 = vadd.f32 0.0, %v1413
        %1415 = vdwg.mxu0
        %1416 = vmatpush.msra.mxu0 %v1375
        %1417 = vmatpush.msra.mxu0 %v1374
        %1418 = vmatpush.msra.mxu0 %v1373
        %1419 = vmatpush.msra.mxu0 %v1372
        %1420 = vmatpush.msra.mxu0 %v1371
        %1421 = vmatpush.msra.mxu0 %v1370
        %1422 = vmatpush.msra.mxu0 %v1369
        %1423 = vmatpush.msra.mxu0 %v1368
        %1424 = vmatpush.msra.mxu0 %v1367
        %1425 = vmatpush.msra.mxu0 %v1366
        %1426 = vmatpush.msra.mxu0 %v1365
        %1427 = vmatpush.msra.mxu0 %v1364
        %1428 = vmatpush.msra.mxu0 %v1363
        %1429 = vmatpush.msra.mxu0 %v1362
        %1430 = vmatpush.msra.mxu0 %v1361
        %1431 = vmatpush.msra.mxu0 %v1360
        %1432 = vmatmul.f32.gmra.mxu0 %v1331
        %v1433 = vpop.f32.mrf.mxu0
        %v1434 = vadd.f32 %v1411, %v1433
        %1435 = vmatmul.f32.gmra.mxu0 %v1334
        %v1436 = vpop.f32.mrf.mxu0
        %v1437 = vadd.f32 %v1414, %v1436
        %1438 = vdwg.mxu0
        %v1439 = vadd.f32 %v1175, %v1434
        %v1440 = vadd.f32 %v1176, %v1437
        %s1441 = scalar_lea.vmem [#allocation6], 384
        %v1442 = vld [vmem:[%s1441] sm:$0xff]
        %v1443 = vld [vmem:[%s1441 + $0x8] sm:$0xff]
        %v1444 = vld [vmem:[%s1441 + $0x10] sm:$0xff]
        %v1445 = vld [vmem:[%s1441 + $0x18] sm:$0xff]
        %v1446 = vld [vmem:[%s1441 + $0x20] sm:$0xff]
        %v1447 = vld [vmem:[%s1441 + $0x28] sm:$0xff]
        %v1448 = vld [vmem:[%s1441 + $0x30] sm:$0xff]
        %v1449 = vld [vmem:[%s1441 + $0x38] sm:$0xff]
        %v1450 = vld [vmem:[%s1441 + $0x40] sm:$0xff]
        %v1451 = vld [vmem:[%s1441 + $0x48] sm:$0xff]
        %v1452 = vld [vmem:[%s1441 + $0x50] sm:$0xff]
        %v1453 = vld [vmem:[%s1441 + $0x58] sm:$0xff]
        %v1454 = vld [vmem:[%s1441 + $0x60] sm:$0xff]
        %v1455 = vld [vmem:[%s1441 + $0x68] sm:$0xff]
        %v1456 = vld [vmem:[%s1441 + $0x70] sm:$0xff]
        %v1457 = vld [vmem:[%s1441 + $0x78] sm:$0xff]
        %s1458 = scalar_lea.vmem [#allocation7], 384
        %v1459 = vld [vmem:[%s1458] sm:$0xff]
        %v1460 = vld [vmem:[%s1458 + $0x8] sm:$0xff]
        %v1461 = vld [vmem:[%s1458 + $0x10] sm:$0xff]
        %v1462 = vld [vmem:[%s1458 + $0x18] sm:$0xff]
        %v1463 = vld [vmem:[%s1458 + $0x20] sm:$0xff]
        %v1464 = vld [vmem:[%s1458 + $0x28] sm:$0xff]
        %v1465 = vld [vmem:[%s1458 + $0x30] sm:$0xff]
        %v1466 = vld [vmem:[%s1458 + $0x38] sm:$0xff]
        %v1467 = vld [vmem:[%s1458 + $0x40] sm:$0xff]
        %v1468 = vld [vmem:[%s1458 + $0x48] sm:$0xff]
        %v1469 = vld [vmem:[%s1458 + $0x50] sm:$0xff]
        %v1470 = vld [vmem:[%s1458 + $0x58] sm:$0xff]
        %v1471 = vld [vmem:[%s1458 + $0x60] sm:$0xff]
        %v1472 = vld [vmem:[%s1458 + $0x68] sm:$0xff]
        %v1473 = vld [vmem:[%s1458 + $0x70] sm:$0xff]
        %v1474 = vld [vmem:[%s1458 + $0x78] sm:$0xff]
        %1475 = vmatpush.msra.mxu0 %v1474
        %1476 = vmatpush.msra.mxu0 %v1473
        %1477 = vmatpush.msra.mxu0 %v1472
        %1478 = vmatpush.msra.mxu0 %v1471
        %1479 = vmatpush.msra.mxu0 %v1470
        %1480 = vmatpush.msra.mxu0 %v1469
        %1481 = vmatpush.msra.mxu0 %v1468
        %1482 = vmatpush.msra.mxu0 %v1467
        %1483 = vmatpush.msra.mxu0 %v1466
        %1484 = vmatpush.msra.mxu0 %v1465
        %1485 = vmatpush.msra.mxu0 %v1464
        %1486 = vmatpush.msra.mxu0 %v1463
        %1487 = vmatpush.msra.mxu0 %v1462
        %1488 = vmatpush.msra.mxu0 %v1461
        %1489 = vmatpush.msra.mxu0 %v1460
        %1490 = vmatpush.msra.mxu0 %v1459
        %1491 = vmatmul.f32.gmra.mxu0 %v1354
        %v1492 = vpop.f32.mrf.mxu0
        %v1493 = vadd.f32 0.0, %v1492
        %1494 = vmatmul.f32.gmra.mxu0 %v1357
        %v1495 = vpop.f32.mrf.mxu0
        %v1496 = vadd.f32 0.0, %v1495
        %1497 = vdwg.mxu0
        %1498 = vmatpush.msra.mxu0 %v1457
        %1499 = vmatpush.msra.mxu0 %v1456
        %1500 = vmatpush.msra.mxu0 %v1455
        %1501 = vmatpush.msra.mxu0 %v1454
        %1502 = vmatpush.msra.mxu0 %v1453
        %1503 = vmatpush.msra.mxu0 %v1452
        %1504 = vmatpush.msra.mxu0 %v1451
        %1505 = vmatpush.msra.mxu0 %v1450
        %1506 = vmatpush.msra.mxu0 %v1449
        %1507 = vmatpush.msra.mxu0 %v1448
        %1508 = vmatpush.msra.mxu0 %v1447
        %1509 = vmatpush.msra.mxu0 %v1446
        %1510 = vmatpush.msra.mxu0 %v1445
        %1511 = vmatpush.msra.mxu0 %v1444
        %1512 = vmatpush.msra.mxu0 %v1443
        %1513 = vmatpush.msra.mxu0 %v1442
        %1514 = vmatmul.f32.gmra.mxu0 %v1331
        %v1515 = vpop.f32.mrf.mxu0
        %v1516 = vadd.f32 %v1493, %v1515
        %1517 = vmatmul.f32.gmra.mxu0 %v1334
        %v1518 = vpop.f32.mrf.mxu0
        %v1519 = vadd.f32 %v1496, %v1518
        %1520 = vdwg.mxu0
        %v1521 = vadd.f32 %v1257, %v1516
        %v1522 = vadd.f32 %v1258, %v1519
        %s1523 = scalar_lea.vmem [#allocation9], 384
        %v1524 = vld [vmem:[%s1523] sm:$0xff]
        %v1525 = vld [vmem:[%s1523 + $0x8] sm:$0xff]
        %v1526 = vld [vmem:[%s1523 + $0x10] sm:$0xff]
        %v1527 = vld [vmem:[%s1523 + $0x18] sm:$0xff]
        %v1528 = vld [vmem:[%s1523 + $0x20] sm:$0xff]
        %v1529 = vld [vmem:[%s1523 + $0x28] sm:$0xff]
        %v1530 = vld [vmem:[%s1523 + $0x30] sm:$0xff]
        %v1531 = vld [vmem:[%s1523 + $0x38] sm:$0xff]
        %v1532 = vld [vmem:[%s1523 + $0x40] sm:$0xff]
        %v1533 = vld [vmem:[%s1523 + $0x48] sm:$0xff]
        %v1534 = vld [vmem:[%s1523 + $0x50] sm:$0xff]
        %v1535 = vld [vmem:[%s1523 + $0x58] sm:$0xff]
        %v1536 = vld [vmem:[%s1523 + $0x60] sm:$0xff]
        %v1537 = vld [vmem:[%s1523 + $0x68] sm:$0xff]
        %v1538 = vld [vmem:[%s1523 + $0x70] sm:$0xff]
        %v1539 = vld [vmem:[%s1523 + $0x78] sm:$0xff]
        %1540 = vmatpush.msra.mxu0 %v1539
        %1541 = vmatpush.msra.mxu0 %v1538
        %1542 = vmatpush.msra.mxu0 %v1537
        %1543 = vmatpush.msra.mxu0 %v1536
        %1544 = vmatpush.msra.mxu0 %v1535
        %1545 = vmatpush.msra.mxu0 %v1534
        %1546 = vmatpush.msra.mxu0 %v1533
        %1547 = vmatpush.msra.mxu0 %v1532
        %1548 = vmatpush.msra.mxu0 %v1531
        %1549 = vmatpush.msra.mxu0 %v1530
        %1550 = vmatpush.msra.mxu0 %v1529
        %1551 = vmatpush.msra.mxu0 %v1528
        %1552 = vmatpush.msra.mxu0 %v1527
        %1553 = vmatpush.msra.mxu0 %v1526
        %1554 = vmatpush.msra.mxu0 %v1525
        %1555 = vmatpush.msra.mxu0 %v1524
        %1556 = vmatmul.f32.gmra.mxu0 %v1331
        %v1557 = vpop.f32.mrf.mxu0
        %v1558 = vadd.f32 0.0, %v1557
        %1559 = vmatmul.f32.gmra.mxu0 %v1334
        %v1560 = vpop.f32.mrf.mxu0
        %v1561 = vadd.f32 0.0, %v1560
        %1562 = vdwg.mxu0
        %v1563 = vadd.f32 %v1299, %v1558
        %v1564 = vadd.f32 %v1300, %v1561
        %v1566 = vsel %vm780, %v1305, 0
        %v1569 = vsel %vm780, %v1306, 0
        %1571 = vmatpush.msra.mxu0 0.0
        %1572 = vmatpush.msra.mxu0 0.0
        %1573 = vmatpush.msra.mxu0 0.0
        %1574 = vmatpush.msra.mxu0 0.0
        %1575 = vmatpush.msra.mxu0 0.0
        %1576 = vmatpush.msra.mxu0 0.0
        %1577 = vmatpush.msra.mxu0 0.0
        %1578 = vmatpush.msra.mxu0 0.0
        %1579 = vmatpush.msra.mxu0 0.0
        %1580 = vmatpush.msra.mxu0 0.0
        %1581 = vmatpush.msra.mxu0 0.0
        %1582 = vmatpush.msra.mxu0 0.0
        %1583 = vmatpush.msra.mxu0 0.0
        %1584 = vmatpush.msra.mxu0 0.0
        %1585 = vmatpush.msra.mxu0 %v1334
        %1586 = vmatpush.msra.mxu0 %v1331
        %1587 = vmatmul.f32.gmra.mxu0 %v1566
        %v1588 = vpop.f32.mrf.mxu0
        %v1589 = vadd.f32 0.0, %v1588
        %1590 = vmatmul.f32.gmra.mxu0 %v1569
        %v1591 = vpop.f32.mrf.mxu0
        %v1592 = vadd.f32 0.0, %v1591
        %1593 = vdwg.mxu0
        %v1594 = vsub.f32 %v1589, %v561
        %v1595 = vsub.f32 %v1592, %v562
        %1596 = vmatpush.msra.mxu0 0.0
        %1597 = vmatpush.msra.mxu0 0.0
        %1598 = vmatpush.msra.mxu0 0.0
        %1599 = vmatpush.msra.mxu0 0.0
        %1600 = vmatpush.msra.mxu0 0.0
        %1601 = vmatpush.msra.mxu0 0.0
        %1602 = vmatpush.msra.mxu0 0.0
        %1603 = vmatpush.msra.mxu0 0.0
        %1604 = vmatpush.msra.mxu0 0.0
        %1605 = vmatpush.msra.mxu0 0.0
        %1606 = vmatpush.msra.mxu0 0.0
        %1607 = vmatpush.msra.mxu0 0.0
        %1608 = vmatpush.msra.mxu0 0.0
        %1609 = vmatpush.msra.mxu0 0.0
        %1610 = vmatpush.msra.mxu0 %v1357
        %1611 = vmatpush.msra.mxu0 %v1354
        %1612 = vmatmul.f32.gmra.mxu0 %v1566
        %v1613 = vpop.f32.mrf.mxu0
        %v1614 = vadd.f32 0.0, %v1613
        %1615 = vmatmul.f32.gmra.mxu0 %v1569
        %v1616 = vpop.f32.mrf.mxu0
        %v1617 = vadd.f32 0.0, %v1616
        %1618 = vdwg.mxu0
        %v1619 = vsub.f32 %v1614, %v563
        %v1620 = vsub.f32 %v1617, %v564
        %s1621 = scalar_lea.vmem [#allocation2], 512
        %v1622 = vld [vmem:[%s1621] sm:$0xff]
        %v1623 = vld [vmem:[%s1621 + $0x8] sm:$0xff]
        %v1624 = vld [vmem:[%s1621 + $0x10] sm:$0xff]
        %v1625 = vld [vmem:[%s1621 + $0x18] sm:$0xff]
        %v1626 = vld [vmem:[%s1621 + $0x20] sm:$0xff]
        %v1627 = vld [vmem:[%s1621 + $0x28] sm:$0xff]
        %v1628 = vld [vmem:[%s1621 + $0x30] sm:$0xff]
        %v1629 = vld [vmem:[%s1621 + $0x38] sm:$0xff]
        %v1630 = vld [vmem:[%s1621 + $0x40] sm:$0xff]
        %v1631 = vld [vmem:[%s1621 + $0x48] sm:$0xff]
        %v1632 = vld [vmem:[%s1621 + $0x50] sm:$0xff]
        %v1633 = vld [vmem:[%s1621 + $0x58] sm:$0xff]
        %v1634 = vld [vmem:[%s1621 + $0x60] sm:$0xff]
        %v1635 = vld [vmem:[%s1621 + $0x68] sm:$0xff]
        %v1636 = vld [vmem:[%s1621 + $0x70] sm:$0xff]
        %v1637 = vld [vmem:[%s1621 + $0x78] sm:$0xff]
        %s1638 = scalar_lea.vmem [#allocation4], 512
        %v1639 = vld [vmem:[%s1638] sm:$0xff]
        %v1640 = vld [vmem:[%s1638 + $0x8] sm:$0xff]
        %v1641 = vld [vmem:[%s1638 + $0x10] sm:$0xff]
        %v1642 = vld [vmem:[%s1638 + $0x18] sm:$0xff]
        %v1643 = vld [vmem:[%s1638 + $0x20] sm:$0xff]
        %v1644 = vld [vmem:[%s1638 + $0x28] sm:$0xff]
        %v1645 = vld [vmem:[%s1638 + $0x30] sm:$0xff]
        %v1646 = vld [vmem:[%s1638 + $0x38] sm:$0xff]
        %v1647 = vld [vmem:[%s1638 + $0x40] sm:$0xff]
        %v1648 = vld [vmem:[%s1638 + $0x48] sm:$0xff]
        %v1649 = vld [vmem:[%s1638 + $0x50] sm:$0xff]
        %v1650 = vld [vmem:[%s1638 + $0x58] sm:$0xff]
        %v1651 = vld [vmem:[%s1638 + $0x60] sm:$0xff]
        %v1652 = vld [vmem:[%s1638 + $0x68] sm:$0xff]
        %v1653 = vld [vmem:[%s1638 + $0x70] sm:$0xff]
        %v1654 = vld [vmem:[%s1638 + $0x78] sm:$0xff]
        %1655 = vmatpush.msra.mxu0 %v1654
        %1656 = vmatpush.msra.mxu0 %v1653
        %1657 = vmatpush.msra.mxu0 %v1652
        %1658 = vmatpush.msra.mxu0 %v1651
        %1659 = vmatpush.msra.mxu0 %v1650
        %1660 = vmatpush.msra.mxu0 %v1649
        %1661 = vmatpush.msra.mxu0 %v1648
        %1662 = vmatpush.msra.mxu0 %v1647
        %1663 = vmatpush.msra.mxu0 %v1646
        %1664 = vmatpush.msra.mxu0 %v1645
        %1665 = vmatpush.msra.mxu0 %v1644
        %1666 = vmatpush.msra.mxu0 %v1643
        %1667 = vmatpush.msra.mxu0 %v1642
        %1668 = vmatpush.msra.mxu0 %v1641
        %1669 = vmatpush.msra.mxu0 %v1640
        %1670 = vmatpush.msra.mxu0 %v1639
        %1671 = vmatmul.f32.gmra.mxu0 %v1619
        %v1672 = vpop.f32.mrf.mxu0
        %v1673 = vadd.f32 0.0, %v1672
        %1674 = vmatmul.f32.gmra.mxu0 %v1620
        %v1675 = vpop.f32.mrf.mxu0
        %v1676 = vadd.f32 0.0, %v1675
        %1677 = vdwg.mxu0
        %1678 = vmatpush.msra.mxu0 %v1637
        %1679 = vmatpush.msra.mxu0 %v1636
        %1680 = vmatpush.msra.mxu0 %v1635
        %1681 = vmatpush.msra.mxu0 %v1634
        %1682 = vmatpush.msra.mxu0 %v1633
        %1683 = vmatpush.msra.mxu0 %v1632
        %1684 = vmatpush.msra.mxu0 %v1631
        %1685 = vmatpush.msra.mxu0 %v1630
        %1686 = vmatpush.msra.mxu0 %v1629
        %1687 = vmatpush.msra.mxu0 %v1628
        %1688 = vmatpush.msra.mxu0 %v1627
        %1689 = vmatpush.msra.mxu0 %v1626
        %1690 = vmatpush.msra.mxu0 %v1625
        %1691 = vmatpush.msra.mxu0 %v1624
        %1692 = vmatpush.msra.mxu0 %v1623
        %1693 = vmatpush.msra.mxu0 %v1622
        %1694 = vmatmul.f32.gmra.mxu0 %v1594
        %v1695 = vpop.f32.mrf.mxu0
        %v1696 = vadd.f32 %v1673, %v1695
        %1697 = vmatmul.f32.gmra.mxu0 %v1595
        %v1698 = vpop.f32.mrf.mxu0
        %v1699 = vadd.f32 %v1676, %v1698
        %1700 = vdwg.mxu0
        %v1701 = vadd.f32 %v1439, %v1696
        %v1702 = vadd.f32 %v1440, %v1699
        %s1703 = scalar_lea.vmem [#allocation6], 512
        %v1704 = vld [vmem:[%s1703] sm:$0xff]
        %v1705 = vld [vmem:[%s1703 + $0x8] sm:$0xff]
        %v1706 = vld [vmem:[%s1703 + $0x10] sm:$0xff]
        %v1707 = vld [vmem:[%s1703 + $0x18] sm:$0xff]
        %v1708 = vld [vmem:[%s1703 + $0x20] sm:$0xff]
        %v1709 = vld [vmem:[%s1703 + $0x28] sm:$0xff]
        %v1710 = vld [vmem:[%s1703 + $0x30] sm:$0xff]
        %v1711 = vld [vmem:[%s1703 + $0x38] sm:$0xff]
        %v1712 = vld [vmem:[%s1703 + $0x40] sm:$0xff]
        %v1713 = vld [vmem:[%s1703 + $0x48] sm:$0xff]
        %v1714 = vld [vmem:[%s1703 + $0x50] sm:$0xff]
        %v1715 = vld [vmem:[%s1703 + $0x58] sm:$0xff]
        %v1716 = vld [vmem:[%s1703 + $0x60] sm:$0xff]
        %v1717 = vld [vmem:[%s1703 + $0x68] sm:$0xff]
        %v1718 = vld [vmem:[%s1703 + $0x70] sm:$0xff]
        %v1719 = vld [vmem:[%s1703 + $0x78] sm:$0xff]
        %s1720 = scalar_lea.vmem [#allocation7], 512
        %v1721 = vld [vmem:[%s1720] sm:$0xff]
        %v1722 = vld [vmem:[%s1720 + $0x8] sm:$0xff]
        %v1723 = vld [vmem:[%s1720 + $0x10] sm:$0xff]
        %v1724 = vld [vmem:[%s1720 + $0x18] sm:$0xff]
        %v1725 = vld [vmem:[%s1720 + $0x20] sm:$0xff]
        %v1726 = vld [vmem:[%s1720 + $0x28] sm:$0xff]
        %v1727 = vld [vmem:[%s1720 + $0x30] sm:$0xff]
        %v1728 = vld [vmem:[%s1720 + $0x38] sm:$0xff]
        %v1729 = vld [vmem:[%s1720 + $0x40] sm:$0xff]
        %v1730 = vld [vmem:[%s1720 + $0x48] sm:$0xff]
        %v1731 = vld [vmem:[%s1720 + $0x50] sm:$0xff]
        %v1732 = vld [vmem:[%s1720 + $0x58] sm:$0xff]
        %v1733 = vld [vmem:[%s1720 + $0x60] sm:$0xff]
        %v1734 = vld [vmem:[%s1720 + $0x68] sm:$0xff]
        %v1735 = vld [vmem:[%s1720 + $0x70] sm:$0xff]
        %v1736 = vld [vmem:[%s1720 + $0x78] sm:$0xff]
        %1737 = vmatpush.msra.mxu0 %v1736
        %1738 = vmatpush.msra.mxu0 %v1735
        %1739 = vmatpush.msra.mxu0 %v1734
        %1740 = vmatpush.msra.mxu0 %v1733
        %1741 = vmatpush.msra.mxu0 %v1732
        %1742 = vmatpush.msra.mxu0 %v1731
        %1743 = vmatpush.msra.mxu0 %v1730
        %1744 = vmatpush.msra.mxu0 %v1729
        %1745 = vmatpush.msra.mxu0 %v1728
        %1746 = vmatpush.msra.mxu0 %v1727
        %1747 = vmatpush.msra.mxu0 %v1726
        %1748 = vmatpush.msra.mxu0 %v1725
        %1749 = vmatpush.msra.mxu0 %v1724
        %1750 = vmatpush.msra.mxu0 %v1723
        %1751 = vmatpush.msra.mxu0 %v1722
        %1752 = vmatpush.msra.mxu0 %v1721
        %1753 = vmatmul.f32.gmra.mxu0 %v1619
        %v1754 = vpop.f32.mrf.mxu0
        %v1755 = vadd.f32 0.0, %v1754
        %1756 = vmatmul.f32.gmra.mxu0 %v1620
        %v1757 = vpop.f32.mrf.mxu0
        %v1758 = vadd.f32 0.0, %v1757
        %1759 = vdwg.mxu0
        %1760 = vmatpush.msra.mxu0 %v1719
        %1761 = vmatpush.msra.mxu0 %v1718
        %1762 = vmatpush.msra.mxu0 %v1717
        %1763 = vmatpush.msra.mxu0 %v1716
        %1764 = vmatpush.msra.mxu0 %v1715
        %1765 = vmatpush.msra.mxu0 %v1714
        %1766 = vmatpush.msra.mxu0 %v1713
        %1767 = vmatpush.msra.mxu0 %v1712
        %1768 = vmatpush.msra.mxu0 %v1711
        %1769 = vmatpush.msra.mxu0 %v1710
        %1770 = vmatpush.msra.mxu0 %v1709
        %1771 = vmatpush.msra.mxu0 %v1708
        %1772 = vmatpush.msra.mxu0 %v1707
        %1773 = vmatpush.msra.mxu0 %v1706
        %1774 = vmatpush.msra.mxu0 %v1705
        %1775 = vmatpush.msra.mxu0 %v1704
        %1776 = vmatmul.f32.gmra.mxu0 %v1594
        %v1777 = vpop.f32.mrf.mxu0
        %v1778 = vadd.f32 %v1755, %v1777
        %1779 = vmatmul.f32.gmra.mxu0 %v1595
        %v1780 = vpop.f32.mrf.mxu0
        %v1781 = vadd.f32 %v1758, %v1780
        %1782 = vdwg.mxu0
        %v1783 = vadd.f32 %v1521, %v1778
        %v1784 = vadd.f32 %v1522, %v1781
        %s1785 = scalar_lea.vmem [#allocation9], 512
        %v1786 = vld [vmem:[%s1785] sm:$0xff]
        %v1787 = vld [vmem:[%s1785 + $0x8] sm:$0xff]
        %v1788 = vld [vmem:[%s1785 + $0x10] sm:$0xff]
        %v1789 = vld [vmem:[%s1785 + $0x18] sm:$0xff]
        %v1790 = vld [vmem:[%s1785 + $0x20] sm:$0xff]
        %v1791 = vld [vmem:[%s1785 + $0x28] sm:$0xff]
        %v1792 = vld [vmem:[%s1785 + $0x30] sm:$0xff]
        %v1793 = vld [vmem:[%s1785 + $0x38] sm:$0xff]
        %v1794 = vld [vmem:[%s1785 + $0x40] sm:$0xff]
        %v1795 = vld [vmem:[%s1785 + $0x48] sm:$0xff]
        %v1796 = vld [vmem:[%s1785 + $0x50] sm:$0xff]
        %v1797 = vld [vmem:[%s1785 + $0x58] sm:$0xff]
        %v1798 = vld [vmem:[%s1785 + $0x60] sm:$0xff]
        %v1799 = vld [vmem:[%s1785 + $0x68] sm:$0xff]
        %v1800 = vld [vmem:[%s1785 + $0x70] sm:$0xff]
        %v1801 = vld [vmem:[%s1785 + $0x78] sm:$0xff]
        %1802 = vmatpush.msra.mxu0 %v1801
        %1803 = vmatpush.msra.mxu0 %v1800
        %1804 = vmatpush.msra.mxu0 %v1799
        %1805 = vmatpush.msra.mxu0 %v1798
        %1806 = vmatpush.msra.mxu0 %v1797
        %1807 = vmatpush.msra.mxu0 %v1796
        %1808 = vmatpush.msra.mxu0 %v1795
        %1809 = vmatpush.msra.mxu0 %v1794
        %1810 = vmatpush.msra.mxu0 %v1793
        %1811 = vmatpush.msra.mxu0 %v1792
        %1812 = vmatpush.msra.mxu0 %v1791
        %1813 = vmatpush.msra.mxu0 %v1790
        %1814 = vmatpush.msra.mxu0 %v1789
        %1815 = vmatpush.msra.mxu0 %v1788
        %1816 = vmatpush.msra.mxu0 %v1787
        %1817 = vmatpush.msra.mxu0 %v1786
        %1818 = vmatmul.f32.gmra.mxu0 %v1594
        %v1819 = vpop.f32.mrf.mxu0
        %v1820 = vadd.f32 0.0, %v1819
        %1821 = vmatmul.f32.gmra.mxu0 %v1595
        %v1822 = vpop.f32.mrf.mxu0
        %v1823 = vadd.f32 0.0, %v1822
        %1824 = vdwg.mxu0
        %v1825 = vadd.f32 %v1563, %v1820
        %v1826 = vadd.f32 %v1564, %v1823
        %v1827 = vxor.u32 %v1701, 2147483648
        %v1828 = vxor.u32 %v1702, 2147483648
        %v1829 = vmul.f32 %v1827, 1.442695
        %v1830 = vpow.pop %v1829
        %v1831 = vmul.f32 %v1828, 1.442695
        %v1832 = vpow.pop %v1831
        %v1833 = vadd.f32 %v1830, 1.0
        %v1834 = vadd.f32 %v1832, 1.0
        %v1835 = vrcp.pop %v1833
        %v1836 = vmul.f32 %v1833, %v1835
        %v1837 = vsub.f32 1.0, %v1836
        %v1838 = vmul.f32 %v1835, %v1837
        %v1839 = vadd.f32 %v1835, %v1838
        %vm1840 = vweird.f32 %v1833
        %vm1841 = vweird.f32 %v1835
        %vm1842 = vmor %vm1840, %vm1841
        %v1843 = vsel %vm1842, %v1835, %v1839
        %v1844 = vand.u32 2147483647, %v1833
        %vm1845 = vcmp.eq.f32.partialorder %v1844, 8.507059e+37
        %v1846 = vand.u32 %v1833, 2147483648
        %v1847 = vor.u32 1.1754944e-38, %v1846
        %v1848 = vsel %vm1845, %v1847, %v1843
        %v1849 = vmul.f32 1.0, %v1848
        %v1850 = vrcp.pop %v1834
        %v1851 = vmul.f32 %v1834, %v1850
        %v1852 = vsub.f32 1.0, %v1851
        %v1853 = vmul.f32 %v1850, %v1852
        %v1854 = vadd.f32 %v1850, %v1853
        %vm1855 = vweird.f32 %v1834
        %vm1856 = vweird.f32 %v1850
        %vm1857 = vmor %vm1855, %vm1856
        %v1858 = vsel %vm1857, %v1850, %v1854
        %v1859 = vand.u32 2147483647, %v1834
        %vm1860 = vcmp.eq.f32.partialorder %v1859, 8.507059e+37
        %v1861 = vand.u32 %v1834, 2147483648
        %v1862 = vor.u32 1.1754944e-38, %v1861
        %v1863 = vsel %vm1860, %v1862, %v1858
        %v1864 = vmul.f32 1.0, %v1863
        %v1865 = vxor.u32 %v1783, 2147483648
        %v1866 = vxor.u32 %v1784, 2147483648
        %v1867 = vmul.f32 %v1865, 1.442695
        %v1868 = vpow.pop %v1867
        %v1869 = vmul.f32 %v1866, 1.442695
        %v1870 = vpow.pop %v1869
        %v1871 = vadd.f32 %v1868, 1.0
        %v1872 = vadd.f32 %v1870, 1.0
        %v1873 = vrcp.pop %v1871
        %v1874 = vmul.f32 %v1871, %v1873
        %v1875 = vsub.f32 1.0, %v1874
        %v1876 = vmul.f32 %v1873, %v1875
        %v1877 = vadd.f32 %v1873, %v1876
        %vm1878 = vweird.f32 %v1871
        %vm1879 = vweird.f32 %v1873
        %vm1880 = vmor %vm1878, %vm1879
        %v1881 = vsel %vm1880, %v1873, %v1877
        %v1882 = vand.u32 2147483647, %v1871
        %vm1883 = vcmp.eq.f32.partialorder %v1882, 8.507059e+37
        %v1884 = vand.u32 %v1871, 2147483648
        %v1885 = vor.u32 1.1754944e-38, %v1884
        %v1886 = vsel %vm1883, %v1885, %v1881
        %v1887 = vmul.f32 1.0, %v1886
        %v1888 = vrcp.pop %v1872
        %v1889 = vmul.f32 %v1872, %v1888
        %v1890 = vsub.f32 1.0, %v1889
        %v1891 = vmul.f32 %v1888, %v1890
        %v1892 = vadd.f32 %v1888, %v1891
        %vm1893 = vweird.f32 %v1872
        %vm1894 = vweird.f32 %v1888
        %vm1895 = vmor %vm1893, %vm1894
        %v1896 = vsel %vm1895, %v1888, %v1892
        %v1897 = vand.u32 2147483647, %v1872
        %vm1898 = vcmp.eq.f32.partialorder %v1897, 8.507059e+37
        %v1899 = vand.u32 %v1872, 2147483648
        %v1900 = vor.u32 1.1754944e-38, %v1899
        %v1901 = vsel %vm1898, %v1900, %v1896
        %v1902 = vmul.f32 1.0, %v1901
        %v1903 = vmul.f32 %v1849, %v563
        %v1904 = vmul.f32 %v1864, %v564
        %v1905 = vld [vmem:[#allocation10] sm:$0xff]
        %v1906 = vld [vmem:[#allocation10 + $0x8] sm:$0xff]
        %v1907 = vld [vmem:[#allocation10 + $0x10] sm:$0xff]
        %v1908 = vld [vmem:[#allocation10 + $0x18] sm:$0xff]
        %v1909 = vld [vmem:[#allocation10 + $0x20] sm:$0xff]
        %v1910 = vld [vmem:[#allocation10 + $0x28] sm:$0xff]
        %v1911 = vld [vmem:[#allocation10 + $0x30] sm:$0xff]
        %v1912 = vld [vmem:[#allocation10 + $0x38] sm:$0xff]
        %v1913 = vld [vmem:[#allocation10 + $0x40] sm:$0xff]
        %v1914 = vld [vmem:[#allocation10 + $0x48] sm:$0xff]
        %v1915 = vld [vmem:[#allocation10 + $0x50] sm:$0xff]
        %v1916 = vld [vmem:[#allocation10 + $0x58] sm:$0xff]
        %v1917 = vld [vmem:[#allocation10 + $0x60] sm:$0xff]
        %v1918 = vld [vmem:[#allocation10 + $0x68] sm:$0xff]
        %v1919 = vld [vmem:[#allocation10 + $0x70] sm:$0xff]
        %v1920 = vld [vmem:[#allocation10 + $0x78] sm:$0xff]
        %1921 = vmatpush.msra.mxu0 %v1920
        %1922 = vmatpush.msra.mxu0 %v1919
        %1923 = vmatpush.msra.mxu0 %v1918
        %1924 = vmatpush.msra.mxu0 %v1917
        %1925 = vmatpush.msra.mxu0 %v1916
        %1926 = vmatpush.msra.mxu0 %v1915
        %1927 = vmatpush.msra.mxu0 %v1914
        %1928 = vmatpush.msra.mxu0 %v1913
        %1929 = vmatpush.msra.mxu0 %v1912
        %1930 = vmatpush.msra.mxu0 %v1911
        %1931 = vmatpush.msra.mxu0 %v1910
        %1932 = vmatpush.msra.mxu0 %v1909
        %1933 = vmatpush.msra.mxu0 %v1908
        %1934 = vmatpush.msra.mxu0 %v1907
        %1935 = vmatpush.msra.mxu0 %v1906
        %1936 = vmatpush.msra.mxu0 %v1905
        %1937 = vmatmul.f32.gmra.mxu0 %v1903
        %v1938 = vpop.f32.mrf.mxu0
        %v1939 = vadd.f32 0.0, %v1938
        %1940 = vmatmul.f32.gmra.mxu0 %v1904
        %v1941 = vpop.f32.mrf.mxu0
        %v1942 = vadd.f32 0.0, %v1941
        %1943 = vdwg.mxu0
        %v1944 = vadd.f32 %v1825, %v1939
        %v1945 = vadd.f32 %v1826, %v1942
        %1946 = vmatpush.msra.mxu0 0.0
        %1947 = vmatpush.msra.mxu0 0.0
        %1948 = vmatpush.msra.mxu0 0.0
        %1949 = vmatpush.msra.mxu0 0.0
        %1950 = vmatpush.msra.mxu0 0.0
        %1951 = vmatpush.msra.mxu0 0.0
        %1952 = vmatpush.msra.mxu0 0.0
        %1953 = vmatpush.msra.mxu0 0.0
        %1954 = vmatpush.msra.mxu0 0.0
        %1955 = vmatpush.msra.mxu0 0.0
        %1956 = vmatpush.msra.mxu0 0.0
        %1957 = vmatpush.msra.mxu0 0.0
        %1958 = vmatpush.msra.mxu0 0.0
        %1959 = vmatpush.msra.mxu0 0.0
        %1960 = vmatpush.msra.mxu0 %v1904
        %1961 = vmatpush.msra.mxu0 %v1903
        %1962 = vmatmul.f32.gmra.mxu0 %v782
        %v1963 = vpop.f32.mrf.mxu0
        %v1964 = vadd.f32 0.0, %v1963
        %1965 = vmatmul.f32.gmra.mxu0 %v785
        %v1966 = vpop.f32.mrf.mxu0
        %v1967 = vadd.f32 0.0, %v1966
        %1968 = vdwg.mxu0
        %s1969 = scalar_lea.vmem [#allocation10], 128
        %v1970 = vld [vmem:[%s1969] sm:$0xff]
        %v1971 = vld [vmem:[%s1969 + $0x8] sm:$0xff]
        %v1972 = vld [vmem:[%s1969 + $0x10] sm:$0xff]
        %v1973 = vld [vmem:[%s1969 + $0x18] sm:$0xff]
        %v1974 = vld [vmem:[%s1969 + $0x20] sm:$0xff]
        %v1975 = vld [vmem:[%s1969 + $0x28] sm:$0xff]
        %v1976 = vld [vmem:[%s1969 + $0x30] sm:$0xff]
        %v1977 = vld [vmem:[%s1969 + $0x38] sm:$0xff]
        %v1978 = vld [vmem:[%s1969 + $0x40] sm:$0xff]
        %v1979 = vld [vmem:[%s1969 + $0x48] sm:$0xff]
        %v1980 = vld [vmem:[%s1969 + $0x50] sm:$0xff]
        %v1981 = vld [vmem:[%s1969 + $0x58] sm:$0xff]
        %v1982 = vld [vmem:[%s1969 + $0x60] sm:$0xff]
        %v1983 = vld [vmem:[%s1969 + $0x68] sm:$0xff]
        %v1984 = vld [vmem:[%s1969 + $0x70] sm:$0xff]
        %v1985 = vld [vmem:[%s1969 + $0x78] sm:$0xff]
        %1986 = vmatpush.msra.mxu0 %v1985
        %1987 = vmatpush.msra.mxu0 %v1984
        %1988 = vmatpush.msra.mxu0 %v1983
        %1989 = vmatpush.msra.mxu0 %v1982
        %1990 = vmatpush.msra.mxu0 %v1981
        %1991 = vmatpush.msra.mxu0 %v1980
        %1992 = vmatpush.msra.mxu0 %v1979
        %1993 = vmatpush.msra.mxu0 %v1978
        %1994 = vmatpush.msra.mxu0 %v1977
        %1995 = vmatpush.msra.mxu0 %v1976
        %1996 = vmatpush.msra.mxu0 %v1975
        %1997 = vmatpush.msra.mxu0 %v1974
        %1998 = vmatpush.msra.mxu0 %v1973
        %1999 = vmatpush.msra.mxu0 %v1972
        %2000 = vmatpush.msra.mxu0 %v1971
        %2001 = vmatpush.msra.mxu0 %v1970
        %2002 = vmatmul.f32.gmra.mxu0 %v1964
        %v2003 = vpop.f32.mrf.mxu0
        %v2004 = vadd.f32 0.0, %v2003
        %2005 = vmatmul.f32.gmra.mxu0 %v1967
        %v2006 = vpop.f32.mrf.mxu0
        %v2007 = vadd.f32 0.0, %v2006
        %2008 = vdwg.mxu0
        %v2009 = vadd.f32 %v1944, %v2004
        %v2010 = vadd.f32 %v1945, %v2007
        %2011 = vmatpush.msra.mxu0 0.0
        %2012 = vmatpush.msra.mxu0 0.0
        %2013 = vmatpush.msra.mxu0 0.0
        %2014 = vmatpush.msra.mxu0 0.0
        %2015 = vmatpush.msra.mxu0 0.0
        %2016 = vmatpush.msra.mxu0 0.0
        %2017 = vmatpush.msra.mxu0 0.0
        %2018 = vmatpush.msra.mxu0 0.0
        %2019 = vmatpush.msra.mxu0 0.0
        %2020 = vmatpush.msra.mxu0 0.0
        %2021 = vmatpush.msra.mxu0 0.0
        %2022 = vmatpush.msra.mxu0 0.0
        %2023 = vmatpush.msra.mxu0 0.0
        %2024 = vmatpush.msra.mxu0 0.0
        %2025 = vmatpush.msra.mxu0 %v1967
        %2026 = vmatpush.msra.mxu0 %v1964
        %2027 = vmatmul.f32.gmra.mxu0 %v1040
        %v2028 = vpop.f32.mrf.mxu0
        %v2029 = vadd.f32 0.0, %v2028
        %2030 = vmatmul.f32.gmra.mxu0 %v1043
        %v2031 = vpop.f32.mrf.mxu0
        %v2032 = vadd.f32 0.0, %v2031
        %2033 = vdwg.mxu0
        %v2034 = vsub.f32 %v2029, %v1903
        %v2035 = vsub.f32 %v2032, %v1904
        %s2036 = scalar_lea.vmem [#allocation10], 256
        %v2037 = vld [vmem:[%s2036] sm:$0xff]
        %v2038 = vld [vmem:[%s2036 + $0x8] sm:$0xff]
        %v2039 = vld [vmem:[%s2036 + $0x10] sm:$0xff]
        %v2040 = vld [vmem:[%s2036 + $0x18] sm:$0xff]
        %v2041 = vld [vmem:[%s2036 + $0x20] sm:$0xff]
        %v2042 = vld [vmem:[%s2036 + $0x28] sm:$0xff]
        %v2043 = vld [vmem:[%s2036 + $0x30] sm:$0xff]
        %v2044 = vld [vmem:[%s2036 + $0x38] sm:$0xff]
        %v2045 = vld [vmem:[%s2036 + $0x40] sm:$0xff]
        %v2046 = vld [vmem:[%s2036 + $0x48] sm:$0xff]
        %v2047 = vld [vmem:[%s2036 + $0x50] sm:$0xff]
        %v2048 = vld [vmem:[%s2036 + $0x58] sm:$0xff]
        %v2049 = vld [vmem:[%s2036 + $0x60] sm:$0xff]
        %v2050 = vld [vmem:[%s2036 + $0x68] sm:$0xff]
        %v2051 = vld [vmem:[%s2036 + $0x70] sm:$0xff]
        %v2052 = vld [vmem:[%s2036 + $0x78] sm:$0xff]
        %2053 = vmatpush.msra.mxu0 %v2052
        %2054 = vmatpush.msra.mxu0 %v2051
        %2055 = vmatpush.msra.mxu0 %v2050
        %2056 = vmatpush.msra.mxu0 %v2049
        %2057 = vmatpush.msra.mxu0 %v2048
        %2058 = vmatpush.msra.mxu0 %v2047
        %2059 = vmatpush.msra.mxu0 %v2046
        %2060 = vmatpush.msra.mxu0 %v2045
        %2061 = vmatpush.msra.mxu0 %v2044
        %2062 = vmatpush.msra.mxu0 %v2043
        %2063 = vmatpush.msra.mxu0 %v2042
        %2064 = vmatpush.msra.mxu0 %v2041
        %2065 = vmatpush.msra.mxu0 %v2040
        %2066 = vmatpush.msra.mxu0 %v2039
        %2067 = vmatpush.msra.mxu0 %v2038
        %2068 = vmatpush.msra.mxu0 %v2037
        %2069 = vmatmul.f32.gmra.mxu0 %v2034
        %v2070 = vpop.f32.mrf.mxu0
        %v2071 = vadd.f32 0.0, %v2070
        %2072 = vmatmul.f32.gmra.mxu0 %v2035
        %v2073 = vpop.f32.mrf.mxu0
        %v2074 = vadd.f32 0.0, %v2073
        %2075 = vdwg.mxu0
        %v2076 = vadd.f32 %v2009, %v2071
        %v2077 = vadd.f32 %v2010, %v2074
        %2078 = vmatpush.msra.mxu0 0.0
        %2079 = vmatpush.msra.mxu0 0.0
        %2080 = vmatpush.msra.mxu0 0.0
        %2081 = vmatpush.msra.mxu0 0.0
        %2082 = vmatpush.msra.mxu0 0.0
        %2083 = vmatpush.msra.mxu0 0.0
        %2084 = vmatpush.msra.mxu0 0.0
        %2085 = vmatpush.msra.mxu0 0.0
        %2086 = vmatpush.msra.mxu0 0.0
        %2087 = vmatpush.msra.mxu0 0.0
        %2088 = vmatpush.msra.mxu0 0.0
        %2089 = vmatpush.msra.mxu0 0.0
        %2090 = vmatpush.msra.mxu0 0.0
        %2091 = vmatpush.msra.mxu0 0.0
        %2092 = vmatpush.msra.mxu0 %v1904
        %2093 = vmatpush.msra.mxu0 %v1903
        %2094 = vmatmul.f32.gmra.mxu0 %v1308
        %v2095 = vpop.f32.mrf.mxu0
        %v2096 = vadd.f32 0.0, %v2095
        %2097 = vmatmul.f32.gmra.mxu0 %v1311
        %v2098 = vpop.f32.mrf.mxu0
        %v2099 = vadd.f32 0.0, %v2098
        %2100 = vdwg.mxu0
        %s2101 = scalar_lea.vmem [#allocation10], 384
        %v2102 = vld [vmem:[%s2101] sm:$0xff]
        %v2103 = vld [vmem:[%s2101 + $0x8] sm:$0xff]
        %v2104 = vld [vmem:[%s2101 + $0x10] sm:$0xff]
        %v2105 = vld [vmem:[%s2101 + $0x18] sm:$0xff]
        %v2106 = vld [vmem:[%s2101 + $0x20] sm:$0xff]
        %v2107 = vld [vmem:[%s2101 + $0x28] sm:$0xff]
        %v2108 = vld [vmem:[%s2101 + $0x30] sm:$0xff]
        %v2109 = vld [vmem:[%s2101 + $0x38] sm:$0xff]
        %v2110 = vld [vmem:[%s2101 + $0x40] sm:$0xff]
        %v2111 = vld [vmem:[%s2101 + $0x48] sm:$0xff]
        %v2112 = vld [vmem:[%s2101 + $0x50] sm:$0xff]
        %v2113 = vld [vmem:[%s2101 + $0x58] sm:$0xff]
        %v2114 = vld [vmem:[%s2101 + $0x60] sm:$0xff]
        %v2115 = vld [vmem:[%s2101 + $0x68] sm:$0xff]
        %v2116 = vld [vmem:[%s2101 + $0x70] sm:$0xff]
        %v2117 = vld [vmem:[%s2101 + $0x78] sm:$0xff]
        %2118 = vmatpush.msra.mxu0 %v2117
        %2119 = vmatpush.msra.mxu0 %v2116
        %2120 = vmatpush.msra.mxu0 %v2115
        %2121 = vmatpush.msra.mxu0 %v2114
        %2122 = vmatpush.msra.mxu0 %v2113
        %2123 = vmatpush.msra.mxu0 %v2112
        %2124 = vmatpush.msra.mxu0 %v2111
        %2125 = vmatpush.msra.mxu0 %v2110
        %2126 = vmatpush.msra.mxu0 %v2109
        %2127 = vmatpush.msra.mxu0 %v2108
        %2128 = vmatpush.msra.mxu0 %v2107
        %2129 = vmatpush.msra.mxu0 %v2106
        %2130 = vmatpush.msra.mxu0 %v2105
        %2131 = vmatpush.msra.mxu0 %v2104
        %2132 = vmatpush.msra.mxu0 %v2103
        %2133 = vmatpush.msra.mxu0 %v2102
        %2134 = vmatmul.f32.gmra.mxu0 %v2096
        %v2135 = vpop.f32.mrf.mxu0
        %v2136 = vadd.f32 0.0, %v2135
        %2137 = vmatmul.f32.gmra.mxu0 %v2099
        %v2138 = vpop.f32.mrf.mxu0
        %v2139 = vadd.f32 0.0, %v2138
        %2140 = vdwg.mxu0
        %v2141 = vadd.f32 %v2076, %v2136
        %v2142 = vadd.f32 %v2077, %v2139
        %2143 = vmatpush.msra.mxu0 0.0
        %2144 = vmatpush.msra.mxu0 0.0
        %2145 = vmatpush.msra.mxu0 0.0
        %2146 = vmatpush.msra.mxu0 0.0
        %2147 = vmatpush.msra.mxu0 0.0
        %2148 = vmatpush.msra.mxu0 0.0
        %2149 = vmatpush.msra.mxu0 0.0
        %2150 = vmatpush.msra.mxu0 0.0
        %2151 = vmatpush.msra.mxu0 0.0
        %2152 = vmatpush.msra.mxu0 0.0
        %2153 = vmatpush.msra.mxu0 0.0
        %2154 = vmatpush.msra.mxu0 0.0
        %2155 = vmatpush.msra.mxu0 0.0
        %2156 = vmatpush.msra.mxu0 0.0
        %2157 = vmatpush.msra.mxu0 %v2099
        %2158 = vmatpush.msra.mxu0 %v2096
        %2159 = vmatmul.f32.gmra.mxu0 %v1566
        %v2160 = vpop.f32.mrf.mxu0
        %v2161 = vadd.f32 0.0, %v2160
        %2162 = vmatmul.f32.gmra.mxu0 %v1569
        %v2163 = vpop.f32.mrf.mxu0
        %v2164 = vadd.f32 0.0, %v2163
        %2165 = vdwg.mxu0
        %v2166 = vsub.f32 %v2161, %v1903
        %v2167 = vsub.f32 %v2164, %v1904
        %s2168 = scalar_lea.vmem [#allocation10], 512
        %v2169 = vld [vmem:[%s2168] sm:$0xff]
        %v2170 = vld [vmem:[%s2168 + $0x8] sm:$0xff]
        %v2171 = vld [vmem:[%s2168 + $0x10] sm:$0xff]
        %v2172 = vld [vmem:[%s2168 + $0x18] sm:$0xff]
        %v2173 = vld [vmem:[%s2168 + $0x20] sm:$0xff]
        %v2174 = vld [vmem:[%s2168 + $0x28] sm:$0xff]
        %v2175 = vld [vmem:[%s2168 + $0x30] sm:$0xff]
        %v2176 = vld [vmem:[%s2168 + $0x38] sm:$0xff]
        %v2177 = vld [vmem:[%s2168 + $0x40] sm:$0xff]
        %v2178 = vld [vmem:[%s2168 + $0x48] sm:$0xff]
        %v2179 = vld [vmem:[%s2168 + $0x50] sm:$0xff]
        %v2180 = vld [vmem:[%s2168 + $0x58] sm:$0xff]
        %v2181 = vld [vmem:[%s2168 + $0x60] sm:$0xff]
        %v2182 = vld [vmem:[%s2168 + $0x68] sm:$0xff]
        %v2183 = vld [vmem:[%s2168 + $0x70] sm:$0xff]
        %v2184 = vld [vmem:[%s2168 + $0x78] sm:$0xff]
        %2185 = vmatpush.msra.mxu0 %v2184
        %2186 = vmatpush.msra.mxu0 %v2183
        %2187 = vmatpush.msra.mxu0 %v2182
        %2188 = vmatpush.msra.mxu0 %v2181
        %2189 = vmatpush.msra.mxu0 %v2180
        %2190 = vmatpush.msra.mxu0 %v2179
        %2191 = vmatpush.msra.mxu0 %v2178
        %2192 = vmatpush.msra.mxu0 %v2177
        %2193 = vmatpush.msra.mxu0 %v2176
        %2194 = vmatpush.msra.mxu0 %v2175
        %2195 = vmatpush.msra.mxu0 %v2174
        %2196 = vmatpush.msra.mxu0 %v2173
        %2197 = vmatpush.msra.mxu0 %v2172
        %2198 = vmatpush.msra.mxu0 %v2171
        %2199 = vmatpush.msra.mxu0 %v2170
        %2200 = vmatpush.msra.mxu0 %v2169
        %2201 = vmatmul.f32.gmra.mxu0 %v2166
        %v2202 = vpop.f32.mrf.mxu0
        %v2203 = vadd.f32 0.0, %v2202
        %2204 = vmatmul.f32.gmra.mxu0 %v2167
        %v2205 = vpop.f32.mrf.mxu0
        %v2206 = vadd.f32 0.0, %v2205
        %2207 = vdwg.mxu0
        %v2208 = vadd.f32 %v2141, %v2203
        %v2209 = vadd.f32 %v2142, %v2206
        %v2210 = vtanh.pop %v2208
        %v2211 = vtanh.pop %v2209
        %v2212 = vmul.f32 %v1887, %v563
        %v2213 = vmul.f32 %v1902, %v564
        %v2214 = vsub.f32 1.0, %v1887
        %v2215 = vsub.f32 1.0, %v1902
        %v2216 = vmul.f32 %v2214, %v2210
        %v2217 = vmul.f32 %v2215, %v2211
        %v2218 = vadd.f32 %v2212, %v2216
        %v2219 = vadd.f32 %v2213, %v2217
        %2220 = vst [vmem:[%s560] sm:$0xff] %v2218
        %2221 = vst [vmem:[%s560 + $0x8] sm:$0xff] %v2219
        %p2222 = scmp.lt.s32.totalorder %s28, 1
        %s2223 = scalar_select %p2222, %s28, 1
        %s2224 = smul.addr %s2223, 2
        %s2225 = smul.addr %s2224, 8
        %s2226 = scalar_lea.vmem %s13, %s2225
        // Predicated region
        $region97: #{encoder_forward.6} parent=71 // pred_check
          %p2227 = pneg %p329
        $region98: #{encoder_forward.6} parent=71 // pred_check_branch
          %2229 = sbr.rel (%p2227) target = $region100
        $region99: #{encoder_forward.6} parent=71 // pred_region
          _
        $region100: #{encoder_forward.6} parent=71 // pred_fallthru
          _
      $region72: #{encoder_forward.6} parent=5 // pred_fallthru
        _
      %p2230 = scmp.le.s32.totalorder 2, %s23
      // Predicated region
      $region101: #{encoder_forward.6} parent=5 // pred_check
        %p2231 = pneg %p2230
      $region102: #{encoder_forward.6} parent=5 // pred_check_branch
        %2233 = sbr.rel (%p2231) target = $region104
      $region103: #{encoder_forward.6} parent=5 // pred_region
        %s2234 = ssub.s32 %s23, 2
        // Predicated region
        $region105: #{encoder_forward.6} parent=103 // pred_check
          %p2235 = pneg %p335
        $region106: #{encoder_forward.6} parent=103 // pred_check_branch
          %2237 = sbr.rel (%p2235) target = $region108
        $region107: #{encoder_forward.6} parent=103 // pred_region
          %p2238 = scmp.lt.s32.totalorder %s29, 1
          %s2239 = scalar_select %p2238, %s29, 1
          %s2240 = smul.addr %s2239, 2
          %s2241 = smul.addr %s2240, 8
          %s2242 = scalar_lea.vmem %s13, %s2241
        $region108: #{encoder_forward.6} parent=103 // pred_fallthru
          _
      $region104: #{encoder_forward.6} parent=5 // pred_fallthru
        _
    $region6: #{encoder_forward.6} parent=1 // loop_footer
      %s27 = sadd.s32 1, %s23
    $region7: #{encoder_forward.6} parent=1 // loop_footer_branch
      %22 = sbr.rel target = $region3
    $region8: #{encoder_forward.6} parent=1 // loop_exit
      _
    %2243 = vsyncpa [#allocation3], 1
    %s2244 = scalar_lea.sflag [#allocation3], 1
    %2245 = vsyncpa %s2244, 1
    %2246 = vsyncpa [#allocation5], 1
    %2247 = vsyncpa [#allocation8], 1
    %2248 = vsyncpa [#allocation11], 1

</llo_original>
